<compile_context>
chip_gen: v6e
topology: v6e:2x2x1
jax: 0.10.0
libtpu: 0.0.40
codegen_flags: <defaults>
</compile_context>

<pallas_src>
import numpy as np
import jax
import jax.numpy as jnp
from jax.experimental import pallas as pl
from jax.experimental.pallas import tpu as pltpu


def _round_up(n, m):
    return ((n + m - 1) // m) * m


def reggru_kernel(x_ref, wih_ref, whh_ref, bih_ref, bhh_ref,
                  w1_ref, b1_ref, w2_ref, b2_ref,
                  y_ref, h_ref, gi_ref, hall_ref):
    # x_ref:   (tT, Bb, I)      time-major input chunk (compute dtype)
    # wih_ref: (I, 3Hp)         gate-blocked, lane-aligned [r | z | n]
    # whh_ref: (Hp, 3Hp)
    # bih/bhh: (1, 3Hp)         f32
    # w1_ref:  (Hp, Hp), b1_ref: (1, Hp)
    # w2_ref:  (Hp, Opad), b2_ref: (1, O)
    # y_ref:   (tT, Bb, O)      time-major output chunk (O = true output width)
    # h_ref:   (Bb, Hp)   f32   hidden state carried across time chunks
    # gi_ref:  (tT, Bb, 3Hp) f32  hoisted input projection
    # hall_ref:(tT, Bb, Hp)  cdt  per-chunk hidden states (deferred head input)
    tT, Bb, _ = x_ref.shape
    Hp = whh_ref.shape[0]
    O = y_ref.shape[2]
    cdt = whh_ref.dtype
    f32 = jnp.float32

    # h_0 = 0 (PyTorch default) at the start of every batch chunk's time sweep.
    @pl.when(pl.program_id(1) == 0)
    def _():
        h_ref[...] = jnp.zeros_like(h_ref)

    # (1) Hoisted input projection: one MXU-efficient matmul for the whole chunk.
    x2d = x_ref[...].reshape(tT * Bb, x_ref.shape[2])
    gi = jnp.dot(x2d, wih_ref[...], preferred_element_type=f32) + bih_ref[...]
    gi_ref[...] = gi.reshape(tT, Bb, 3 * Hp)

    whh = whh_ref[...]
    bhh = jnp.broadcast_to(bhh_ref[...], (Bb, 3 * Hp))   # hoisted (no in-loop CSE)

    # (2) Serial recurrence: only h @ Whh + gate nonlinearities remain.
    #     Moderately unrolled fori_loop: keeps LLO overlap without blowing vreg
    #     live ranges at Bb=128, tT=32.  Gate math stays f32 (v5e compatible).
    # NOTE: for tiny real batches, Whh could be pinned in the MXU across steps
    # via pltpu.matmul_push_rhs/acc_lhs/pop instead of re-issuing jnp.dot.
    def step(s, h):
        gi_t = gi_ref[s]                                  # (Bb, 3Hp) leading-dim dynamic index
        gh = jnp.dot(h.astype(cdt), whh, preferred_element_type=f32) + bhh
        r = jax.nn.sigmoid(gi_t[:, 0:Hp] + gh[:, 0:Hp])   # lane-aligned gate slices
        z = jax.nn.sigmoid(gi_t[:, Hp:2 * Hp] + gh[:, Hp:2 * Hp])
        n = jnp.tanh(gi_t[:, 2 * Hp:] + r * gh[:, 2 * Hp:])
        h = (1.0 - z) * n + z * h
        hall_ref[s] = h.astype(cdt)
        return h

    h_ref[...] = jax.lax.fori_loop(0, tT, step, h_ref[...], unroll=min(8, tT))

    # (3) Deferred regression head: two chunk-wide matmuls, then one store of
    #     only the O real output columns (no 128x padded HBM writeback).
    h2d = hall_ref[...].reshape(tT * Bb, Hp)
    hid = jnp.tanh(jnp.dot(h2d, w1_ref[...], preferred_element_type=f32) + b1_ref[...])
    out = jnp.dot(hid.astype(cdt), w2_ref[...], preferred_element_type=f32)
    out = out[:, :O] + b2_ref[...]
    y_ref[...] = out.reshape(tT, Bb, O).astype(y_ref.dtype)


def reggru_pallas(x, params, *, block_b=128, block_t=32,
                  compute_dtype=jnp.bfloat16):
    """x: (B, T, I) float32 (PyTorch batch_first). Returns (B, T, O) float32.

    block_b / block_t are upper bounds, clamped to the padded problem size.
    compute_dtype is the MXU operand dtype (bf16 by default; pass jnp.float32
    for tight validation).  On v7x prefer a block_b leaving >= 2 batch chunks.
    """
    B, T, I = x.shape
    H = params["weight_hh"].shape[1]          # weight_hh: (3H, H)
    O = params["w2"].shape[0]                 # w2: (O, H)

    f32 = jnp.float32
    cdt = np.dtype(compute_dtype)
    itemsize = cdt.itemsize
    sub = 8 * (4 // itemsize)                 # sublane packing granularity (8 f32 / 16 bf16)

    Hp = _round_up(H, 128)                    # lane-aligned hidden dim
    Opad = _round_up(O, 128)                  # head-matmul N (padding sliced off in-kernel)
    Bb = _round_up(min(block_b, _round_up(B, sub)), sub)
    Bp = _round_up(B, Bb)
    tT = _round_up(min(block_t, _round_up(T, 8)), 8)
    Tp = _round_up(T, tT)

    # --- wrapper-side layout plumbing: time-major, zero-padded, compute dtype ---
    x_t = jnp.transpose(x, (1, 0, 2)).astype(cdt)                 # (T, B, I)
    x_t = jnp.pad(x_t, ((0, Tp - T), (0, Bp - B), (0, 0)))

    # GRU weights: PyTorch layout (3H, ...) stacked [r, z, n]; pad each gate
    # block to Hp so gates land at lane offsets 0, Hp, 2*Hp.
    wih3 = jnp.transpose(params["weight_ih"].reshape(3, H, I), (0, 2, 1))
    wih3 = jnp.pad(wih3, ((0, 0), (0, 0), (0, Hp - H)))
    wih_t = jnp.transpose(wih3, (1, 0, 2)).reshape(I, 3 * Hp).astype(cdt)

    whh3 = jnp.transpose(params["weight_hh"].reshape(3, H, H), (0, 2, 1))
    whh3 = jnp.pad(whh3, ((0, 0), (0, Hp - H), (0, Hp - H)))
    whh_t = jnp.transpose(whh3, (1, 0, 2)).reshape(Hp, 3 * Hp).astype(cdt)

    bih = jnp.pad(params["bias_ih"].reshape(3, H),
                  ((0, 0), (0, Hp - H))).reshape(1, 3 * Hp).astype(f32)
    bhh = jnp.pad(params["bias_hh"].reshape(3, H),
                  ((0, 0), (0, Hp - H))).reshape(1, 3 * Hp).astype(f32)

    # Regression head.
    w1_t = jnp.pad(params["w1"].T, ((0, Hp - H), (0, Hp - H))).astype(cdt)
    b1 = jnp.pad(params["b1"], (0, Hp - H)).reshape(1, Hp).astype(f32)
    w2_t = jnp.pad(params["w2"].T, ((0, Hp - H), (0, Opad - O))).astype(cdt)
    b2 = params["b2"].reshape(1, O).astype(f32)

    grid = (Bp // Bb, Tp // tT)
    const = lambda b, t: (0, 0)

    # VMEM budget for this tile config; raise the scoped limit above the 32 MiB
    # default when needed, capped at 64 MiB (v7x physical VMEM per TensorCore).
    lane = 128
    est = (2 * tT * Bb * max(I, lane) * itemsize          # x blocks (x2 buffers, lane-padded)
           + 2 * tT * Bb * lane * 4                       # y blocks (O sits in one lane tile)
           + tT * Bb * 3 * Hp * 4                         # gi scratch (f32)
           + tT * Bb * Hp * itemsize                      # hall scratch
           + Bb * Hp * 4                                  # carried h
           + 2 * (I * 3 * Hp + Hp * 3 * Hp + Hp * Hp + Hp * Opad) * itemsize
           + 2 * (6 * Hp + Hp + lane) * 4)                # biases
    vmem_limit = int(min(max(est * 3 // 2, 32 * 1024 * 1024), 64 * 1024 * 1024))

    # NOTE: the constant-index weight specs would ideally be single-buffered
    # (pipeline_mode=pl.Buffered(1)); at Hp=128 the duplicated footprint is
    # < 1 MiB, so the portable default double-buffering is kept.
    y_pad = pl.pallas_call(
        reggru_kernel,
        out_shape=jax.ShapeDtypeStruct((Tp, Bp, O), f32),
        grid=grid,
        in_specs=[
            pl.BlockSpec((tT, Bb, I), lambda b, t: (t, b, 0)),     # x (streamed)
            pl.BlockSpec((I, 3 * Hp), const),                      # W_ih^T
            pl.BlockSpec((Hp, 3 * Hp), const),                     # W_hh^T
            pl.BlockSpec((1, 3 * Hp), const),                      # b_ih
            pl.BlockSpec((1, 3 * Hp), const),                      # b_hh
            pl.BlockSpec((Hp, Hp), const),                         # W1^T
            pl.BlockSpec((1, Hp), const),                          # b1
            pl.BlockSpec((Hp, Opad), const),                       # W2^T
            pl.BlockSpec((1, O), const),                           # b2
        ],
        out_specs=pl.BlockSpec((tT, Bb, O), lambda b, t: (t, b, 0)),
        scratch_shapes=[
            pltpu.VMEM((Bb, Hp), f32),              # carried hidden state
            pltpu.VMEM((tT, Bb, 3 * Hp), f32),      # hoisted input projection
            pltpu.VMEM((tT, Bb, Hp), cdt),          # per-chunk hidden states
        ],
        compiler_params=pltpu.CompilerParams(
            dimension_semantics=("parallel", "arbitrary"),
            vmem_limit_bytes=vmem_limit),
    )(x_t, wih_t, whh_t, bih, bhh, w1_t, b1, w2_t, b2)

    return jnp.transpose(y_pad[:T, :B, :], (1, 0, 2))


def reggru_reference(x, params):
    """Pure-JAX reference of the same forward pass (for validation)."""
    B, T, I = x.shape
    H = params["weight_hh"].shape[1]
    wih, whh = params["weight_ih"], params["weight_hh"]
    bih, bhh = params["bias_ih"], params["bias_hh"]

    def cell(h_prev, x_t):
        gi = x_t @ wih.T + bih
        gh = h_prev @ whh.T + bhh
        r = jax.nn.sigmoid(gi[:, 0:H] + gh[:, 0:H])
        z = jax.nn.sigmoid(gi[:, H:2 * H] + gh[:, H:2 * H])
        n = jnp.tanh(gi[:, 2 * H:3 * H] + r * gh[:, 2 * H:3 * H])
        h_new = (1.0 - z) * n + z * h_prev
        return h_new, h_new

    h0 = jnp.zeros((B, H), jnp.float32)
    _, ys = jax.lax.scan(cell, h0, jnp.transpose(x, (1, 0, 2)))   # (T, B, H)
    y = jnp.transpose(ys, (1, 0, 2)).reshape(-1, H)               # (B*T, H)
    y = jnp.tanh(y @ params["w1"].T + params["b1"]) @ params["w2"].T + params["b2"]
    return y.reshape(B, T, -1)


def make_params(key, input_size, hidden_size, output_size):
    """Deterministic synthetic init (PyTorch-style uniform(-1/sqrt(H), 1/sqrt(H)))."""
    H, I, O = hidden_size, input_size, output_size
    scale = 1.0 / jnp.sqrt(jnp.float32(H))
    ks = jax.random.split(key, 8)
    u = lambda k, shape: jax.random.uniform(k, shape, jnp.float32, -scale, scale)
    return {
        "weight_ih": u(ks[0], (3 * H, I)),   # GRU weight_ih_l0
        "weight_hh": u(ks[1], (3 * H, H)),   # GRU weight_hh_l0
        "bias_ih": u(ks[2], (3 * H,)),
        "bias_hh": u(ks[3], (3 * H,)),
        "w1": u(ks[4], (H, H)),              # reg[0]: Linear(H, H)
        "b1": u(ks[5], (H,)),
        "w2": u(ks[6], (O, H)),              # reg[2]: Linear(H, O)
        "b2": u(ks[7], (O,)),
    }


if __name__ == "__main__":
    # Small shapes consistent with the module (hidden_size=10, output_size=1).
    B, T, I, H, O = 20, 24, 5, 10, 1

    key = jax.random.PRNGKey(0)
    k_x, k_p = jax.random.split(key)
    x = jax.random.normal(k_x, (B, T, I), jnp.float32)
    params = make_params(k_p, I, H, O)

    y_ref = jax.block_until_ready(reggru_reference(x, params))

    # (a) f32 path with small blocks: exercises the hidden state carried across
    #     several time chunks and multiple parallel batch chunks; tight check.
    y32 = jax.block_until_ready(
        reggru_pallas(x, params, block_b=8, block_t=8, compute_dtype=jnp.float32))
    assert y32.shape == (B, T, O), y32.shape
    assert jnp.allclose(y32, y_ref, rtol=1e-3, atol=1e-4), \
        float(jnp.max(jnp.abs(y32 - y_ref)))

    # (b) default performance path: large (clamped) blocks + bf16 matmul
    #     operands with f32 accumulation; bf16 rounding compounds through the
    #     recurrence, so the tolerance is looser.
    y16 = jax.block_until_ready(reggru_pallas(x, params))
    assert y16.shape == (B, T, O), y16.shape
    err = float(jnp.max(jnp.abs(y16 - y_ref)))
    assert err < 0.15, err

    print("KERNEL_OK")
</pallas_src>

<mosaic_0001>
module attributes {stable_mosaic.version = 11 : i64} {
  func.func @reggru_kernel(%arg0: i32, %arg1: i32, %arg2: memref<8x8x5xf32, #tpu.memory_space<vmem>>, %arg3: memref<5x384xf32, #tpu.memory_space<vmem>>, %arg4: memref<128x384xf32, #tpu.memory_space<vmem>>, %arg5: memref<1x384xf32, #tpu.memory_space<vmem>>, %arg6: memref<1x384xf32, #tpu.memory_space<vmem>>, %arg7: memref<128x128xf32, #tpu.memory_space<vmem>>, %arg8: memref<1x128xf32, #tpu.memory_space<vmem>>, %arg9: memref<128x128xf32, #tpu.memory_space<vmem>>, %arg10: memref<1x1xf32, #tpu.memory_space<vmem>>, %arg11: memref<8x8x1xf32, #tpu.memory_space<vmem>>, %arg12: memref<8x128xf32, #tpu.memory_space<vmem>>, %arg13: memref<8x8x384xf32, #tpu.memory_space<vmem>>, %arg14: memref<8x8x128xf32, #tpu.memory_space<vmem>>) attributes {dimension_semantics = [#tpu.dimension_semantics<parallel>, #tpu.dimension_semantics<arbitrary>], iteration_bounds = array<i64: 3, 3>, scalar_prefetch = 0 : i64, scratch_operands = 3 : i64, tpu.core_type = #tpu.core_type<tc>, window_params = [{transform_indices = @transform_0, window_bounds = array<i64: 8, 8, 5>}, {pipeline_mode = #tpu.pipeline_mode<synchronous>, transform_indices = @transform_1, window_bounds = array<i64: 5, 384>}, {pipeline_mode = #tpu.pipeline_mode<synchronous>, transform_indices = @transform_2, window_bounds = array<i64: 128, 384>}, {pipeline_mode = #tpu.pipeline_mode<synchronous>, transform_indices = @transform_3, window_bounds = array<i64: 1, 384>}, {pipeline_mode = #tpu.pipeline_mode<synchronous>, transform_indices = @transform_4, window_bounds = array<i64: 1, 384>}, {pipeline_mode = #tpu.pipeline_mode<synchronous>, transform_indices = @transform_5, window_bounds = array<i64: 128, 128>}, {pipeline_mode = #tpu.pipeline_mode<synchronous>, transform_indices = @transform_6, window_bounds = array<i64: 1, 128>}, {pipeline_mode = #tpu.pipeline_mode<synchronous>, transform_indices = @transform_7, window_bounds = array<i64: 128, 128>}, {pipeline_mode = #tpu.pipeline_mode<synchronous>, transform_indices = @transform_8, window_bounds = array<i64: 1, 1>}, {transform_indices = @transform_9, window_bounds = array<i64: 8, 8, 1>}]} {
    %c0_i32 = arith.constant 0 : i32
    %0 = arith.cmpi eq, %arg1, %c0_i32 : i32
    %1 = arith.extui %0 : i1 to i32
    %c0_i32_0 = arith.constant 0 : i32
    %2 = arith.cmpi ne, %1, %c0_i32_0 : i32
    scf.if %2 {
      %cst_99 = arith.constant 0.000000e+00 : f32
      %314 = vector.broadcast %cst_99 : f32 to vector<8x128xf32>
      %c0_100 = arith.constant 0 : index
      %c0_101 = arith.constant 0 : index
      %315 = vector.load %arg12[%c0_100, %c0_101] : memref<8x128xf32, #tpu.memory_space<vmem>>, vector<8x128xf32>
      tpu.vector_store %arg12[%c0_100, %c0_101], %314 {strides = array<i32>} : memref<8x128xf32, #tpu.memory_space<vmem>>, vector<8x128xf32>,
    } else {
    }
    %c0 = arith.constant 0 : index
    %c0_1 = arith.constant 0 : index
    %c0_2 = arith.constant 0 : index
    %3 = vector.load %arg2[%c0, %c0_1, %c0_2] : memref<8x8x5xf32, #tpu.memory_space<vmem>>, vector<8x8x5xf32>
    %4 = vector.shape_cast %3 : vector<8x8x5xf32> to vector<64x5xf32>
    %c0_3 = arith.constant 0 : index
    %c0_4 = arith.constant 0 : index
    %5 = vector.load %arg3[%c0_3, %c0_4] : memref<5x384xf32, #tpu.memory_space<vmem>>, vector<5x384xf32>
    %cst = arith.constant dense<0.000000e+00> : vector<64x384xf32>
    %6 = tpu.matmul %4, %5, %cst {dimension_numbers = #tpu.dot_dimension_numbers<[1], [0], [0], [1], [0, 0, 1, 1], [], []>} : vector<64x5xf32>, vector<5x384xf32>, vector<64x384xf32> -> vector<64x384xf32>
    %c0_5 = arith.constant 0 : index
    %c0_6 = arith.constant 0 : index
    %7 = vector.load %arg5[%c0_5, %c0_6] : memref<1x384xf32, #tpu.memory_space<vmem>>, vector<1x384xf32>
    %8 = vector.broadcast %7 : vector<1x384xf32> to vector<64x384xf32>
    %9 = arith.addf %6, %8 : vector<64x384xf32>
    %10 = vector.shape_cast %9 : vector<64x384xf32> to vector<8x8x384xf32>
    %c0_7 = arith.constant 0 : index
    %c0_8 = arith.constant 0 : index
    %c0_9 = arith.constant 0 : index
    %11 = vector.load %arg13[%c0_7, %c0_8, %c0_9] : memref<8x8x384xf32, #tpu.memory_space<vmem>>, vector<8x8x384xf32>
    tpu.vector_store %arg13[%c0_7, %c0_8, %c0_9], %10 {strides = array<i32>} : memref<8x8x384xf32, #tpu.memory_space<vmem>>, vector<8x8x384xf32>,
    %c0_10 = arith.constant 0 : index
    %c0_11 = arith.constant 0 : index
    %12 = vector.load %arg4[%c0_10, %c0_11] : memref<128x384xf32, #tpu.memory_space<vmem>>, vector<128x384xf32>
    %c0_12 = arith.constant 0 : index
    %c0_13 = arith.constant 0 : index
    %13 = vector.load %arg6[%c0_12, %c0_13] : memref<1x384xf32, #tpu.memory_space<vmem>>, vector<1x384xf32>
    %14 = vector.shape_cast %13 : vector<1x384xf32> to vector<1x384xf32>
    %15 = vector.broadcast %14 : vector<1x384xf32> to vector<8x384xf32>
    %c0_14 = arith.constant 0 : index
    %c0_15 = arith.constant 0 : index
    %16 = vector.load %arg12[%c0_14, %c0_15] : memref<8x128xf32, #tpu.memory_space<vmem>>, vector<8x128xf32>
    %c0_i32_16 = arith.constant 0 : i32
    %17 = arith.index_cast %c0_i32_16 : i32 to index
    %c0_17 = arith.constant 0 : index
    %c0_18 = arith.constant 0 : index
    %18 = vector.load %arg13[%17, %c0_17, %c0_18] : memref<8x8x384xf32, #tpu.memory_space<vmem>>, vector<1x8x384xf32>
    %19 = vector.shape_cast %18 : vector<1x8x384xf32> to vector<8x384xf32>
    %cst_19 = arith.constant dense<0.000000e+00> : vector<8x384xf32>
    %20 = tpu.matmul %16, %12, %cst_19 {dimension_numbers = #tpu.dot_dimension_numbers<[1], [0], [0], [1], [0, 0, 1, 1], [], []>} : vector<8x128xf32>, vector<128x384xf32>, vector<8x384xf32> -> vector<8x384xf32>
    %21 = arith.addf %20, %15 : vector<8x384xf32>
    %22 = vector.extract_strided_slice %19 {offsets = [0, 0], sizes = [8, 128], strides = [1, 1]} : vector<8x384xf32> to vector<8x128xf32>
    %23 = vector.extract_strided_slice %21 {offsets = [0, 0], sizes = [8, 128], strides = [1, 1]} : vector<8x384xf32> to vector<8x128xf32>
    %24 = arith.addf %22, %23 : vector<8x128xf32>
    %25 = arith.negf %24 : vector<8x128xf32>
    %26 = math.exp %25 : vector<8x128xf32>
    %cst_20 = arith.constant 1.000000e+00 : f32
    %27 = vector.broadcast %cst_20 : f32 to vector<8x128xf32>
    %28 = arith.addf %27, %26 : vector<8x128xf32>
    %29 = arith.divf %27, %28 : vector<8x128xf32>
    %30 = vector.extract_strided_slice %19 {offsets = [0, 128], sizes = [8, 128], strides = [1, 1]} : vector<8x384xf32> to vector<8x128xf32>
    %31 = vector.extract_strided_slice %21 {offsets = [0, 128], sizes = [8, 128], strides = [1, 1]} : vector<8x384xf32> to vector<8x128xf32>
    %32 = arith.addf %30, %31 : vector<8x128xf32>
    %33 = arith.negf %32 : vector<8x128xf32>
    %34 = math.exp %33 : vector<8x128xf32>
    %cst_21 = arith.constant 1.000000e+00 : f32
    %35 = vector.broadcast %cst_21 : f32 to vector<8x128xf32>
    %36 = arith.addf %35, %34 : vector<8x128xf32>
    %37 = arith.divf %35, %36 : vector<8x128xf32>
    %38 = vector.extract_strided_slice %19 {offsets = [0, 256], sizes = [8, 128], strides = [1, 1]} : vector<8x384xf32> to vector<8x128xf32>
    %39 = vector.extract_strided_slice %21 {offsets = [0, 256], sizes = [8, 128], strides = [1, 1]} : vector<8x384xf32> to vector<8x128xf32>
    %40 = arith.mulf %29, %39 : vector<8x128xf32>
    %41 = arith.addf %38, %40 : vector<8x128xf32>
    %42 = math.tanh %41 : vector<8x128xf32>
    %cst_22 = arith.constant 1.000000e+00 : f32
    %43 = vector.broadcast %cst_22 : f32 to vector<8x128xf32>
    %44 = arith.subf %43, %37 : vector<8x128xf32>
    %45 = arith.mulf %44, %42 : vector<8x128xf32>
    %46 = arith.mulf %37, %16 : vector<8x128xf32>
    %47 = arith.addf %45, %46 : vector<8x128xf32>
    %48 = arith.index_cast %c0_i32_16 : i32 to index
    %c0_23 = arith.constant 0 : index
    %c0_24 = arith.constant 0 : index
    %49 = vector.load %arg14[%48, %c0_23, %c0_24] : memref<8x8x128xf32, #tpu.memory_space<vmem>>, vector<1x8x128xf32>
    %50 = vector.shape_cast %49 : vector<1x8x128xf32> to vector<8x128xf32>
    %51 = vector.shape_cast %47 : vector<8x128xf32> to vector<1x8x128xf32>
    tpu.vector_store %arg14[%48, %c0_23, %c0_24], %51 {strides = array<i32>} : memref<8x8x128xf32, #tpu.memory_space<vmem>>, vector<1x8x128xf32>,
    %c1_i32 = arith.constant 1 : i32
    %52 = arith.index_cast %c1_i32 : i32 to index
    %c0_25 = arith.constant 0 : index
    %c0_26 = arith.constant 0 : index
    %53 = vector.load %arg13[%52, %c0_25, %c0_26] : memref<8x8x384xf32, #tpu.memory_space<vmem>>, vector<1x8x384xf32>
    %54 = vector.shape_cast %53 : vector<1x8x384xf32> to vector<8x384xf32>
    %cst_27 = arith.constant dense<0.000000e+00> : vector<8x384xf32>
    %55 = tpu.matmul %47, %12, %cst_27 {dimension_numbers = #tpu.dot_dimension_numbers<[1], [0], [0], [1], [0, 0, 1, 1], [], []>} : vector<8x128xf32>, vector<128x384xf32>, vector<8x384xf32> -> vector<8x384xf32>
    %56 = arith.addf %55, %15 : vector<8x384xf32>
    %57 = vector.extract_strided_slice %54 {offsets = [0, 0], sizes = [8, 128], strides = [1, 1]} : vector<8x384xf32> to vector<8x128xf32>
    %58 = vector.extract_strided_slice %56 {offsets = [0, 0], sizes = [8, 128], strides = [1, 1]} : vector<8x384xf32> to vector<8x128xf32>
    %59 = arith.addf %57, %58 : vector<8x128xf32>
    %60 = arith.negf %59 : vector<8x128xf32>
    %61 = math.exp %60 : vector<8x128xf32>
    %cst_28 = arith.constant 1.000000e+00 : f32
    %62 = vector.broadcast %cst_28 : f32 to vector<8x128xf32>
    %63 = arith.addf %62, %61 : vector<8x128xf32>
    %64 = arith.divf %62, %63 : vector<8x128xf32>
    %65 = vector.extract_strided_slice %54 {offsets = [0, 128], sizes = [8, 128], strides = [1, 1]} : vector<8x384xf32> to vector<8x128xf32>
    %66 = vector.extract_strided_slice %56 {offsets = [0, 128], sizes = [8, 128], strides = [1, 1]} : vector<8x384xf32> to vector<8x128xf32>
    %67 = arith.addf %65, %66 : vector<8x128xf32>
    %68 = arith.negf %67 : vector<8x128xf32>
    %69 = math.exp %68 : vector<8x128xf32>
    %cst_29 = arith.constant 1.000000e+00 : f32
    %70 = vector.broadcast %cst_29 : f32 to vector<8x128xf32>
    %71 = arith.addf %70, %69 : vector<8x128xf32>
    %72 = arith.divf %70, %71 : vector<8x128xf32>
    %73 = vector.extract_strided_slice %54 {offsets = [0, 256], sizes = [8, 128], strides = [1, 1]} : vector<8x384xf32> to vector<8x128xf32>
    %74 = vector.extract_strided_slice %56 {offsets = [0, 256], sizes = [8, 128], strides = [1, 1]} : vector<8x384xf32> to vector<8x128xf32>
    %75 = arith.mulf %64, %74 : vector<8x128xf32>
    %76 = arith.addf %73, %75 : vector<8x128xf32>
    %77 = math.tanh %76 : vector<8x128xf32>
    %cst_30 = arith.constant 1.000000e+00 : f32
    %78 = vector.broadcast %cst_30 : f32 to vector<8x128xf32>
    %79 = arith.subf %78, %72 : vector<8x128xf32>
    %80 = arith.mulf %79, %77 : vector<8x128xf32>
    %81 = arith.mulf %72, %47 : vector<8x128xf32>
    %82 = arith.addf %80, %81 : vector<8x128xf32>
    %83 = arith.index_cast %c1_i32 : i32 to index
    %c0_31 = arith.constant 0 : index
    %c0_32 = arith.constant 0 : index
    %84 = vector.load %arg14[%83, %c0_31, %c0_32] : memref<8x8x128xf32, #tpu.memory_space<vmem>>, vector<1x8x128xf32>
    %85 = vector.shape_cast %84 : vector<1x8x128xf32> to vector<8x128xf32>
    %86 = vector.shape_cast %82 : vector<8x128xf32> to vector<1x8x128xf32>
    tpu.vector_store %arg14[%83, %c0_31, %c0_32], %86 {strides = array<i32>} : memref<8x8x128xf32, #tpu.memory_space<vmem>>, vector<1x8x128xf32>,
    %c2_i32 = arith.constant 2 : i32
    %87 = arith.index_cast %c2_i32 : i32 to index
    %c0_33 = arith.constant 0 : index
    %c0_34 = arith.constant 0 : index
    %88 = vector.load %arg13[%87, %c0_33, %c0_34] : memref<8x8x384xf32, #tpu.memory_space<vmem>>, vector<1x8x384xf32>
    %89 = vector.shape_cast %88 : vector<1x8x384xf32> to vector<8x384xf32>
    %cst_35 = arith.constant dense<0.000000e+00> : vector<8x384xf32>
    %90 = tpu.matmul %82, %12, %cst_35 {dimension_numbers = #tpu.dot_dimension_numbers<[1], [0], [0], [1], [0, 0, 1, 1], [], []>} : vector<8x128xf32>, vector<128x384xf32>, vector<8x384xf32> -> vector<8x384xf32>
    %91 = arith.addf %90, %15 : vector<8x384xf32>
    %92 = vector.extract_strided_slice %89 {offsets = [0, 0], sizes = [8, 128], strides = [1, 1]} : vector<8x384xf32> to vector<8x128xf32>
    %93 = vector.extract_strided_slice %91 {offsets = [0, 0], sizes = [8, 128], strides = [1, 1]} : vector<8x384xf32> to vector<8x128xf32>
    %94 = arith.addf %92, %93 : vector<8x128xf32>
    %95 = arith.negf %94 : vector<8x128xf32>
    %96 = math.exp %95 : vector<8x128xf32>
    %cst_36 = arith.constant 1.000000e+00 : f32
    %97 = vector.broadcast %cst_36 : f32 to vector<8x128xf32>
    %98 = arith.addf %97, %96 : vector<8x128xf32>
    %99 = arith.divf %97, %98 : vector<8x128xf32>
    %100 = vector.extract_strided_slice %89 {offsets = [0, 128], sizes = [8, 128], strides = [1, 1]} : vector<8x384xf32> to vector<8x128xf32>
    %101 = vector.extract_strided_slice %91 {offsets = [0, 128], sizes = [8, 128], strides = [1, 1]} : vector<8x384xf32> to vector<8x128xf32>
    %102 = arith.addf %100, %101 : vector<8x128xf32>
    %103 = arith.negf %102 : vector<8x128xf32>
    %104 = math.exp %103 : vector<8x128xf32>
    %cst_37 = arith.constant 1.000000e+00 : f32
    %105 = vector.broadcast %cst_37 : f32 to vector<8x128xf32>
    %106 = arith.addf %105, %104 : vector<8x128xf32>
    %107 = arith.divf %105, %106 : vector<8x128xf32>
    %108 = vector.extract_strided_slice %89 {offsets = [0, 256], sizes = [8, 128], strides = [1, 1]} : vector<8x384xf32> to vector<8x128xf32>
    %109 = vector.extract_strided_slice %91 {offsets = [0, 256], sizes = [8, 128], strides = [1, 1]} : vector<8x384xf32> to vector<8x128xf32>
    %110 = arith.mulf %99, %109 : vector<8x128xf32>
    %111 = arith.addf %108, %110 : vector<8x128xf32>
    %112 = math.tanh %111 : vector<8x128xf32>
    %cst_38 = arith.constant 1.000000e+00 : f32
    %113 = vector.broadcast %cst_38 : f32 to vector<8x128xf32>
    %114 = arith.subf %113, %107 : vector<8x128xf32>
    %115 = arith.mulf %114, %112 : vector<8x128xf32>
    %116 = arith.mulf %107, %82 : vector<8x128xf32>
    %117 = arith.addf %115, %116 : vector<8x128xf32>
    %118 = arith.index_cast %c2_i32 : i32 to index
    %c0_39 = arith.constant 0 : index
    %c0_40 = arith.constant 0 : index
    %119 = vector.load %arg14[%118, %c0_39, %c0_40] : memref<8x8x128xf32, #tpu.memory_space<vmem>>, vector<1x8x128xf32>
    %120 = vector.shape_cast %119 : vector<1x8x128xf32> to vector<8x128xf32>
    %121 = vector.shape_cast %117 : vector<8x128xf32> to vector<1x8x128xf32>
    tpu.vector_store %arg14[%118, %c0_39, %c0_40], %121 {strides = array<i32>} : memref<8x8x128xf32, #tpu.memory_space<vmem>>, vector<1x8x128xf32>,
    %c3_i32 = arith.constant 3 : i32
    %122 = arith.index_cast %c3_i32 : i32 to index
    %c0_41 = arith.constant 0 : index
    %c0_42 = arith.constant 0 : index
    %123 = vector.load %arg13[%122, %c0_41, %c0_42] : memref<8x8x384xf32, #tpu.memory_space<vmem>>, vector<1x8x384xf32>
    %124 = vector.shape_cast %123 : vector<1x8x384xf32> to vector<8x384xf32>
    %cst_43 = arith.constant dense<0.000000e+00> : vector<8x384xf32>
    %125 = tpu.matmul %117, %12, %cst_43 {dimension_numbers = #tpu.dot_dimension_numbers<[1], [0], [0], [1], [0, 0, 1, 1], [], []>} : vector<8x128xf32>, vector<128x384xf32>, vector<8x384xf32> -> vector<8x384xf32>
    %126 = arith.addf %125, %15 : vector<8x384xf32>
    %127 = vector.extract_strided_slice %124 {offsets = [0, 0], sizes = [8, 128], strides = [1, 1]} : vector<8x384xf32> to vector<8x128xf32>
    %128 = vector.extract_strided_slice %126 {offsets = [0, 0], sizes = [8, 128], strides = [1, 1]} : vector<8x384xf32> to vector<8x128xf32>
    %129 = arith.addf %127, %128 : vector<8x128xf32>
    %130 = arith.negf %129 : vector<8x128xf32>
    %131 = math.exp %130 : vector<8x128xf32>
    %cst_44 = arith.constant 1.000000e+00 : f32
    %132 = vector.broadcast %cst_44 : f32 to vector<8x128xf32>
    %133 = arith.addf %132, %131 : vector<8x128xf32>
    %134 = arith.divf %132, %133 : vector<8x128xf32>
    %135 = vector.extract_strided_slice %124 {offsets = [0, 128], sizes = [8, 128], strides = [1, 1]} : vector<8x384xf32> to vector<8x128xf32>
    %136 = vector.extract_strided_slice %126 {offsets = [0, 128], sizes = [8, 128], strides = [1, 1]} : vector<8x384xf32> to vector<8x128xf32>
    %137 = arith.addf %135, %136 : vector<8x128xf32>
    %138 = arith.negf %137 : vector<8x128xf32>
    %139 = math.exp %138 : vector<8x128xf32>
    %cst_45 = arith.constant 1.000000e+00 : f32
    %140 = vector.broadcast %cst_45 : f32 to vector<8x128xf32>
    %141 = arith.addf %140, %139 : vector<8x128xf32>
    %142 = arith.divf %140, %141 : vector<8x128xf32>
    %143 = vector.extract_strided_slice %124 {offsets = [0, 256], sizes = [8, 128], strides = [1, 1]} : vector<8x384xf32> to vector<8x128xf32>
    %144 = vector.extract_strided_slice %126 {offsets = [0, 256], sizes = [8, 128], strides = [1, 1]} : vector<8x384xf32> to vector<8x128xf32>
    %145 = arith.mulf %134, %144 : vector<8x128xf32>
    %146 = arith.addf %143, %145 : vector<8x128xf32>
    %147 = math.tanh %146 : vector<8x128xf32>
    %cst_46 = arith.constant 1.000000e+00 : f32
    %148 = vector.broadcast %cst_46 : f32 to vector<8x128xf32>
    %149 = arith.subf %148, %142 : vector<8x128xf32>
    %150 = arith.mulf %149, %147 : vector<8x128xf32>
    %151 = arith.mulf %142, %117 : vector<8x128xf32>
    %152 = arith.addf %150, %151 : vector<8x128xf32>
    %153 = arith.index_cast %c3_i32 : i32 to index
    %c0_47 = arith.constant 0 : index
    %c0_48 = arith.constant 0 : index
    %154 = vector.load %arg14[%153, %c0_47, %c0_48] : memref<8x8x128xf32, #tpu.memory_space<vmem>>, vector<1x8x128xf32>
    %155 = vector.shape_cast %154 : vector<1x8x128xf32> to vector<8x128xf32>
    %156 = vector.shape_cast %152 : vector<8x128xf32> to vector<1x8x128xf32>
    tpu.vector_store %arg14[%153, %c0_47, %c0_48], %156 {strides = array<i32>} : memref<8x8x128xf32, #tpu.memory_space<vmem>>, vector<1x8x128xf32>,
    %c4_i32 = arith.constant 4 : i32
    %157 = arith.index_cast %c4_i32 : i32 to index
    %c0_49 = arith.constant 0 : index
    %c0_50 = arith.constant 0 : index
    %158 = vector.load %arg13[%157, %c0_49, %c0_50] : memref<8x8x384xf32, #tpu.memory_space<vmem>>, vector<1x8x384xf32>
    %159 = vector.shape_cast %158 : vector<1x8x384xf32> to vector<8x384xf32>
    %cst_51 = arith.constant dense<0.000000e+00> : vector<8x384xf32>
    %160 = tpu.matmul %152, %12, %cst_51 {dimension_numbers = #tpu.dot_dimension_numbers<[1], [0], [0], [1], [0, 0, 1, 1], [], []>} : vector<8x128xf32>, vector<128x384xf32>, vector<8x384xf32> -> vector<8x384xf32>
    %161 = arith.addf %160, %15 : vector<8x384xf32>
    %162 = vector.extract_strided_slice %159 {offsets = [0, 0], sizes = [8, 128], strides = [1, 1]} : vector<8x384xf32> to vector<8x128xf32>
    %163 = vector.extract_strided_slice %161 {offsets = [0, 0], sizes = [8, 128], strides = [1, 1]} : vector<8x384xf32> to vector<8x128xf32>
    %164 = arith.addf %162, %163 : vector<8x128xf32>
    %165 = arith.negf %164 : vector<8x128xf32>
    %166 = math.exp %165 : vector<8x128xf32>
    %cst_52 = arith.constant 1.000000e+00 : f32
    %167 = vector.broadcast %cst_52 : f32 to vector<8x128xf32>
    %168 = arith.addf %167, %166 : vector<8x128xf32>
    %169 = arith.divf %167, %168 : vector<8x128xf32>
    %170 = vector.extract_strided_slice %159 {offsets = [0, 128], sizes = [8, 128], strides = [1, 1]} : vector<8x384xf32> to vector<8x128xf32>
    %171 = vector.extract_strided_slice %161 {offsets = [0, 128], sizes = [8, 128], strides = [1, 1]} : vector<8x384xf32> to vector<8x128xf32>
    %172 = arith.addf %170, %171 : vector<8x128xf32>
    %173 = arith.negf %172 : vector<8x128xf32>
    %174 = math.exp %173 : vector<8x128xf32>
    %cst_53 = arith.constant 1.000000e+00 : f32
    %175 = vector.broadcast %cst_53 : f32 to vector<8x128xf32>
    %176 = arith.addf %175, %174 : vector<8x128xf32>
    %177 = arith.divf %175, %176 : vector<8x128xf32>
    %178 = vector.extract_strided_slice %159 {offsets = [0, 256], sizes = [8, 128], strides = [1, 1]} : vector<8x384xf32> to vector<8x128xf32>
    %179 = vector.extract_strided_slice %161 {offsets = [0, 256], sizes = [8, 128], strides = [1, 1]} : vector<8x384xf32> to vector<8x128xf32>
    %180 = arith.mulf %169, %179 : vector<8x128xf32>
    %181 = arith.addf %178, %180 : vector<8x128xf32>
    %182 = math.tanh %181 : vector<8x128xf32>
    %cst_54 = arith.constant 1.000000e+00 : f32
    %183 = vector.broadcast %cst_54 : f32 to vector<8x128xf32>
    %184 = arith.subf %183, %177 : vector<8x128xf32>
    %185 = arith.mulf %184, %182 : vector<8x128xf32>
    %186 = arith.mulf %177, %152 : vector<8x128xf32>
    %187 = arith.addf %185, %186 : vector<8x128xf32>
    %188 = arith.index_cast %c4_i32 : i32 to index
    %c0_55 = arith.constant 0 : index
    %c0_56 = arith.constant 0 : index
    %189 = vector.load %arg14[%188, %c0_55, %c0_56] : memref<8x8x128xf32, #tpu.memory_space<vmem>>, vector<1x8x128xf32>
    %190 = vector.shape_cast %189 : vector<1x8x128xf32> to vector<8x128xf32>
    %191 = vector.shape_cast %187 : vector<8x128xf32> to vector<1x8x128xf32>
    tpu.vector_store %arg14[%188, %c0_55, %c0_56], %191 {strides = array<i32>} : memref<8x8x128xf32, #tpu.memory_space<vmem>>, vector<1x8x128xf32>,
    %c5_i32 = arith.constant 5 : i32
    %192 = arith.index_cast %c5_i32 : i32 to index
    %c0_57 = arith.constant 0 : index
    %c0_58 = arith.constant 0 : index
    %193 = vector.load %arg13[%192, %c0_57, %c0_58] : memref<8x8x384xf32, #tpu.memory_space<vmem>>, vector<1x8x384xf32>
    %194 = vector.shape_cast %193 : vector<1x8x384xf32> to vector<8x384xf32>
    %cst_59 = arith.constant dense<0.000000e+00> : vector<8x384xf32>
    %195 = tpu.matmul %187, %12, %cst_59 {dimension_numbers = #tpu.dot_dimension_numbers<[1], [0], [0], [1], [0, 0, 1, 1], [], []>} : vector<8x128xf32>, vector<128x384xf32>, vector<8x384xf32> -> vector<8x384xf32>
    %196 = arith.addf %195, %15 : vector<8x384xf32>
    %197 = vector.extract_strided_slice %194 {offsets = [0, 0], sizes = [8, 128], strides = [1, 1]} : vector<8x384xf32> to vector<8x128xf32>
    %198 = vector.extract_strided_slice %196 {offsets = [0, 0], sizes = [8, 128], strides = [1, 1]} : vector<8x384xf32> to vector<8x128xf32>
    %199 = arith.addf %197, %198 : vector<8x128xf32>
    %200 = arith.negf %199 : vector<8x128xf32>
    %201 = math.exp %200 : vector<8x128xf32>
    %cst_60 = arith.constant 1.000000e+00 : f32
    %202 = vector.broadcast %cst_60 : f32 to vector<8x128xf32>
    %203 = arith.addf %202, %201 : vector<8x128xf32>
    %204 = arith.divf %202, %203 : vector<8x128xf32>
    %205 = vector.extract_strided_slice %194 {offsets = [0, 128], sizes = [8, 128], strides = [1, 1]} : vector<8x384xf32> to vector<8x128xf32>
    %206 = vector.extract_strided_slice %196 {offsets = [0, 128], sizes = [8, 128], strides = [1, 1]} : vector<8x384xf32> to vector<8x128xf32>
    %207 = arith.addf %205, %206 : vector<8x128xf32>
    %208 = arith.negf %207 : vector<8x128xf32>
    %209 = math.exp %208 : vector<8x128xf32>
    %cst_61 = arith.constant 1.000000e+00 : f32
    %210 = vector.broadcast %cst_61 : f32 to vector<8x128xf32>
    %211 = arith.addf %210, %209 : vector<8x128xf32>
    %212 = arith.divf %210, %211 : vector<8x128xf32>
    %213 = vector.extract_strided_slice %194 {offsets = [0, 256], sizes = [8, 128], strides = [1, 1]} : vector<8x384xf32> to vector<8x128xf32>
    %214 = vector.extract_strided_slice %196 {offsets = [0, 256], sizes = [8, 128], strides = [1, 1]} : vector<8x384xf32> to vector<8x128xf32>
    %215 = arith.mulf %204, %214 : vector<8x128xf32>
    %216 = arith.addf %213, %215 : vector<8x128xf32>
    %217 = math.tanh %216 : vector<8x128xf32>
    %cst_62 = arith.constant 1.000000e+00 : f32
    %218 = vector.broadcast %cst_62 : f32 to vector<8x128xf32>
    %219 = arith.subf %218, %212 : vector<8x128xf32>
    %220 = arith.mulf %219, %217 : vector<8x128xf32>
    %221 = arith.mulf %212, %187 : vector<8x128xf32>
    %222 = arith.addf %220, %221 : vector<8x128xf32>
    %223 = arith.index_cast %c5_i32 : i32 to index
    %c0_63 = arith.constant 0 : index
    %c0_64 = arith.constant 0 : index
    %224 = vector.load %arg14[%223, %c0_63, %c0_64] : memref<8x8x128xf32, #tpu.memory_space<vmem>>, vector<1x8x128xf32>
    %225 = vector.shape_cast %224 : vector<1x8x128xf32> to vector<8x128xf32>
    %226 = vector.shape_cast %222 : vector<8x128xf32> to vector<1x8x128xf32>
    tpu.vector_store %arg14[%223, %c0_63, %c0_64], %226 {strides = array<i32>} : memref<8x8x128xf32, #tpu.memory_space<vmem>>, vector<1x8x128xf32>,
    %c6_i32 = arith.constant 6 : i32
    %227 = arith.index_cast %c6_i32 : i32 to index
    %c0_65 = arith.constant 0 : index
    %c0_66 = arith.constant 0 : index
    %228 = vector.load %arg13[%227, %c0_65, %c0_66] : memref<8x8x384xf32, #tpu.memory_space<vmem>>, vector<1x8x384xf32>
    %229 = vector.shape_cast %228 : vector<1x8x384xf32> to vector<8x384xf32>
    %cst_67 = arith.constant dense<0.000000e+00> : vector<8x384xf32>
    %230 = tpu.matmul %222, %12, %cst_67 {dimension_numbers = #tpu.dot_dimension_numbers<[1], [0], [0], [1], [0, 0, 1, 1], [], []>} : vector<8x128xf32>, vector<128x384xf32>, vector<8x384xf32> -> vector<8x384xf32>
    %231 = arith.addf %230, %15 : vector<8x384xf32>
    %232 = vector.extract_strided_slice %229 {offsets = [0, 0], sizes = [8, 128], strides = [1, 1]} : vector<8x384xf32> to vector<8x128xf32>
    %233 = vector.extract_strided_slice %231 {offsets = [0, 0], sizes = [8, 128], strides = [1, 1]} : vector<8x384xf32> to vector<8x128xf32>
    %234 = arith.addf %232, %233 : vector<8x128xf32>
    %235 = arith.negf %234 : vector<8x128xf32>
    %236 = math.exp %235 : vector<8x128xf32>
    %cst_68 = arith.constant 1.000000e+00 : f32
    %237 = vector.broadcast %cst_68 : f32 to vector<8x128xf32>
    %238 = arith.addf %237, %236 : vector<8x128xf32>
    %239 = arith.divf %237, %238 : vector<8x128xf32>
    %240 = vector.extract_strided_slice %229 {offsets = [0, 128], sizes = [8, 128], strides = [1, 1]} : vector<8x384xf32> to vector<8x128xf32>
    %241 = vector.extract_strided_slice %231 {offsets = [0, 128], sizes = [8, 128], strides = [1, 1]} : vector<8x384xf32> to vector<8x128xf32>
    %242 = arith.addf %240, %241 : vector<8x128xf32>
    %243 = arith.negf %242 : vector<8x128xf32>
    %244 = math.exp %243 : vector<8x128xf32>
    %cst_69 = arith.constant 1.000000e+00 : f32
    %245 = vector.broadcast %cst_69 : f32 to vector<8x128xf32>
    %246 = arith.addf %245, %244 : vector<8x128xf32>
    %247 = arith.divf %245, %246 : vector<8x128xf32>
    %248 = vector.extract_strided_slice %229 {offsets = [0, 256], sizes = [8, 128], strides = [1, 1]} : vector<8x384xf32> to vector<8x128xf32>
    %249 = vector.extract_strided_slice %231 {offsets = [0, 256], sizes = [8, 128], strides = [1, 1]} : vector<8x384xf32> to vector<8x128xf32>
    %250 = arith.mulf %239, %249 : vector<8x128xf32>
    %251 = arith.addf %248, %250 : vector<8x128xf32>
    %252 = math.tanh %251 : vector<8x128xf32>
    %cst_70 = arith.constant 1.000000e+00 : f32
    %253 = vector.broadcast %cst_70 : f32 to vector<8x128xf32>
    %254 = arith.subf %253, %247 : vector<8x128xf32>
    %255 = arith.mulf %254, %252 : vector<8x128xf32>
    %256 = arith.mulf %247, %222 : vector<8x128xf32>
    %257 = arith.addf %255, %256 : vector<8x128xf32>
    %258 = arith.index_cast %c6_i32 : i32 to index
    %c0_71 = arith.constant 0 : index
    %c0_72 = arith.constant 0 : index
    %259 = vector.load %arg14[%258, %c0_71, %c0_72] : memref<8x8x128xf32, #tpu.memory_space<vmem>>, vector<1x8x128xf32>
    %260 = vector.shape_cast %259 : vector<1x8x128xf32> to vector<8x128xf32>
    %261 = vector.shape_cast %257 : vector<8x128xf32> to vector<1x8x128xf32>
    tpu.vector_store %arg14[%258, %c0_71, %c0_72], %261 {strides = array<i32>} : memref<8x8x128xf32, #tpu.memory_space<vmem>>, vector<1x8x128xf32>,
    %c7_i32 = arith.constant 7 : i32
    %262 = arith.index_cast %c7_i32 : i32 to index
    %c0_73 = arith.constant 0 : index
    %c0_74 = arith.constant 0 : index
    %263 = vector.load %arg13[%262, %c0_73, %c0_74] : memref<8x8x384xf32, #tpu.memory_space<vmem>>, vector<1x8x384xf32>
    %264 = vector.shape_cast %263 : vector<1x8x384xf32> to vector<8x384xf32>
    %cst_75 = arith.constant dense<0.000000e+00> : vector<8x384xf32>
    %265 = tpu.matmul %257, %12, %cst_75 {dimension_numbers = #tpu.dot_dimension_numbers<[1], [0], [0], [1], [0, 0, 1, 1], [], []>} : vector<8x128xf32>, vector<128x384xf32>, vector<8x384xf32> -> vector<8x384xf32>
    %266 = arith.addf %265, %15 : vector<8x384xf32>
    %267 = vector.extract_strided_slice %264 {offsets = [0, 0], sizes = [8, 128], strides = [1, 1]} : vector<8x384xf32> to vector<8x128xf32>
    %268 = vector.extract_strided_slice %266 {offsets = [0, 0], sizes = [8, 128], strides = [1, 1]} : vector<8x384xf32> to vector<8x128xf32>
    %269 = arith.addf %267, %268 : vector<8x128xf32>
    %270 = arith.negf %269 : vector<8x128xf32>
    %271 = math.exp %270 : vector<8x128xf32>
    %cst_76 = arith.constant 1.000000e+00 : f32
    %272 = vector.broadcast %cst_76 : f32 to vector<8x128xf32>
    %273 = arith.addf %272, %271 : vector<8x128xf32>
    %274 = arith.divf %272, %273 : vector<8x128xf32>
    %275 = vector.extract_strided_slice %264 {offsets = [0, 128], sizes = [8, 128], strides = [1, 1]} : vector<8x384xf32> to vector<8x128xf32>
    %276 = vector.extract_strided_slice %266 {offsets = [0, 128], sizes = [8, 128], strides = [1, 1]} : vector<8x384xf32> to vector<8x128xf32>
    %277 = arith.addf %275, %276 : vector<8x128xf32>
    %278 = arith.negf %277 : vector<8x128xf32>
    %279 = math.exp %278 : vector<8x128xf32>
    %cst_77 = arith.constant 1.000000e+00 : f32
    %280 = vector.broadcast %cst_77 : f32 to vector<8x128xf32>
    %281 = arith.addf %280, %279 : vector<8x128xf32>
    %282 = arith.divf %280, %281 : vector<8x128xf32>
    %283 = vector.extract_strided_slice %264 {offsets = [0, 256], sizes = [8, 128], strides = [1, 1]} : vector<8x384xf32> to vector<8x128xf32>
    %284 = vector.extract_strided_slice %266 {offsets = [0, 256], sizes = [8, 128], strides = [1, 1]} : vector<8x384xf32> to vector<8x128xf32>
    %285 = arith.mulf %274, %284 : vector<8x128xf32>
    %286 = arith.addf %283, %285 : vector<8x128xf32>
    %287 = math.tanh %286 : vector<8x128xf32>
    %cst_78 = arith.constant 1.000000e+00 : f32
    %288 = vector.broadcast %cst_78 : f32 to vector<8x128xf32>
    %289 = arith.subf %288, %282 : vector<8x128xf32>
    %290 = arith.mulf %289, %287 : vector<8x128xf32>
    %291 = arith.mulf %282, %257 : vector<8x128xf32>
    %292 = arith.addf %290, %291 : vector<8x128xf32>
    %293 = arith.index_cast %c7_i32 : i32 to index
    %c0_79 = arith.constant 0 : index
    %c0_80 = arith.constant 0 : index
    %294 = vector.load %arg14[%293, %c0_79, %c0_80] : memref<8x8x128xf32, #tpu.memory_space<vmem>>, vector<1x8x128xf32>
    %295 = vector.shape_cast %294 : vector<1x8x128xf32> to vector<8x128xf32>
    %296 = vector.shape_cast %292 : vector<8x128xf32> to vector<1x8x128xf32>
    tpu.vector_store %arg14[%293, %c0_79, %c0_80], %296 {strides = array<i32>} : memref<8x8x128xf32, #tpu.memory_space<vmem>>, vector<1x8x128xf32>,
    %c8_i32 = arith.constant 8 : i32
    %c0_81 = arith.constant 0 : index
    %c0_82 = arith.constant 0 : index
    %297 = vector.load %arg12[%c0_81, %c0_82] : memref<8x128xf32, #tpu.memory_space<vmem>>, vector<8x128xf32>
    tpu.vector_store %arg12[%c0_81, %c0_82], %292 {strides = array<i32>} : memref<8x128xf32, #tpu.memory_space<vmem>>, vector<8x128xf32>,
    %c0_83 = arith.constant 0 : index
    %c0_84 = arith.constant 0 : index
    %c0_85 = arith.constant 0 : index
    %298 = vector.load %arg14[%c0_83, %c0_84, %c0_85] : memref<8x8x128xf32, #tpu.memory_space<vmem>>, vector<8x8x128xf32>
    %299 = vector.shape_cast %298 : vector<8x8x128xf32> to vector<64x128xf32>
    %c0_86 = arith.constant 0 : index
    %c0_87 = arith.constant 0 : index
    %300 = vector.load %arg7[%c0_86, %c0_87] : memref<128x128xf32, #tpu.memory_space<vmem>>, vector<128x128xf32>
    %cst_88 = arith.constant dense<0.000000e+00> : vector<64x128xf32>
    %301 = tpu.matmul %299, %300, %cst_88 {dimension_numbers = #tpu.dot_dimension_numbers<[1], [0], [0], [1], [0, 0, 1, 1], [], []>} : vector<64x128xf32>, vector<128x128xf32>, vector<64x128xf32> -> vector<64x128xf32>
    %c0_89 = arith.constant 0 : index
    %c0_90 = arith.constant 0 : index
    %302 = vector.load %arg8[%c0_89, %c0_90] : memref<1x128xf32, #tpu.memory_space<vmem>>, vector<1x128xf32>
    %303 = vector.broadcast %302 : vector<1x128xf32> to vector<64x128xf32>
    %304 = arith.addf %301, %303 : vector<64x128xf32>
    %305 = math.tanh %304 : vector<64x128xf32>
    %c0_91 = arith.constant 0 : index
    %c0_92 = arith.constant 0 : index
    %306 = vector.load %arg9[%c0_91, %c0_92] : memref<128x128xf32, #tpu.memory_space<vmem>>, vector<128x128xf32>
    %cst_93 = arith.constant dense<0.000000e+00> : vector<64x128xf32>
    %307 = tpu.matmul %305, %306, %cst_93 {dimension_numbers = #tpu.dot_dimension_numbers<[1], [0], [0], [1], [0, 0, 1, 1], [], []>} : vector<64x128xf32>, vector<128x128xf32>, vector<64x128xf32> -> vector<64x128xf32>
    %308 = vector.extract_strided_slice %307 {offsets = [0, 0], sizes = [64, 1], strides = [1, 1]} : vector<64x128xf32> to vector<64x1xf32>
    %c0_94 = arith.constant 0 : index
    %c0_95 = arith.constant 0 : index
    %309 = vector.load %arg10[%c0_94, %c0_95] : memref<1x1xf32, #tpu.memory_space<vmem>>, vector<1x1xf32>
    %310 = vector.broadcast %309 : vector<1x1xf32> to vector<64x1xf32>
    %311 = arith.addf %308, %310 : vector<64x1xf32>
    %312 = vector.shape_cast %311 : vector<64x1xf32> to vector<8x8x1xf32>
    %c0_96 = arith.constant 0 : index
    %c0_97 = arith.constant 0 : index
    %c0_98 = arith.constant 0 : index
    %313 = vector.load %arg11[%c0_96, %c0_97, %c0_98] : memref<8x8x1xf32, #tpu.memory_space<vmem>>, vector<8x8x1xf32>
    tpu.vector_store %arg11[%c0_96, %c0_97, %c0_98], %312 {strides = array<i32>} : memref<8x8x1xf32, #tpu.memory_space<vmem>>, vector<8x8x1xf32>,
    return
  }
  func.func @transform_0(%arg0: i32, %arg1: i32) -> (i32, i32, i32) {
    %c0_i32 = arith.constant 0 : i32
    %c0_i32_0 = arith.constant 0 : i32
    return %arg1, %arg0, %c0_i32 : i32, i32, i32
  }
  func.func @transform_1(%arg0: i32, %arg1: i32) -> (i32, i32) {
    %c0_i32 = arith.constant 0 : i32
    %c0_i32_0 = arith.constant 0 : i32
    %c0_i32_1 = arith.constant 0 : i32
    return %c0_i32, %c0_i32_0 : i32, i32
  }
  func.func @transform_2(%arg0: i32, %arg1: i32) -> (i32, i32) {
    %c0_i32 = arith.constant 0 : i32
    %c0_i32_0 = arith.constant 0 : i32
    %c0_i32_1 = arith.constant 0 : i32
    return %c0_i32, %c0_i32_0 : i32, i32
  }
  func.func @transform_3(%arg0: i32, %arg1: i32) -> (i32, i32) {
    %c0_i32 = arith.constant 0 : i32
    %c0_i32_0 = arith.constant 0 : i32
    %c0_i32_1 = arith.constant 0 : i32
    return %c0_i32, %c0_i32_0 : i32, i32
  }
  func.func @transform_4(%arg0: i32, %arg1: i32) -> (i32, i32) {
    %c0_i32 = arith.constant 0 : i32
    %c0_i32_0 = arith.constant 0 : i32
    %c0_i32_1 = arith.constant 0 : i32
    return %c0_i32, %c0_i32_0 : i32, i32
  }
  func.func @transform_5(%arg0: i32, %arg1: i32) -> (i32, i32) {
    %c0_i32 = arith.constant 0 : i32
    %c0_i32_0 = arith.constant 0 : i32
    %c0_i32_1 = arith.constant 0 : i32
    return %c0_i32, %c0_i32_0 : i32, i32
  }
  func.func @transform_6(%arg0: i32, %arg1: i32) -> (i32, i32) {
    %c0_i32 = arith.constant 0 : i32
    %c0_i32_0 = arith.constant 0 : i32
    %c0_i32_1 = arith.constant 0 : i32
    return %c0_i32, %c0_i32_0 : i32, i32
  }
  func.func @transform_7(%arg0: i32, %arg1: i32) -> (i32, i32) {
    %c0_i32 = arith.constant 0 : i32
    %c0_i32_0 = arith.constant 0 : i32
    %c0_i32_1 = arith.constant 0 : i32
    return %c0_i32, %c0_i32_0 : i32, i32
  }
  func.func @transform_8(%arg0: i32, %arg1: i32) -> (i32, i32) {
    %c0_i32 = arith.constant 0 : i32
    %c0_i32_0 = arith.constant 0 : i32
    %c0_i32_1 = arith.constant 0 : i32
    return %c0_i32, %c0_i32_0 : i32, i32
  }
  func.func @transform_9(%arg0: i32, %arg1: i32) -> (i32, i32, i32) {
    %c0_i32 = arith.constant 0 : i32
    %c0_i32_0 = arith.constant 0 : i32
    return %arg1, %arg0, %c0_i32 : i32, i32, i32
  }
}

</mosaic_0001>

<llo_original>
// kernel: tpu_custom_call.1
$region0: #{tpu_custom_call.1}
  #allocation0 [shape = 'u32[]', space=smem, size = 0x4, offset = 0x4, fixed_abs, tag = 'smem constant byte address 0x4 - core index']
  #allocation1 [shape = 'u32[144,128]{1,0:T(1,128)}', space=vmem, size = 0x12000, scoped, tag = 'internal scratch']
  #allocation2 [shape = 'f32[8,128]{1,0:T(8,128)}', space=vmem, size = 0x1000, scoped, tag = 'scratch operand']
  #allocation3 [shape = 'f32[8,8,384]{2,1,0:T(8,128)}', space=vmem, size = 0x18000, scoped, tag = 'scratch operand']
  #allocation4 [shape = 'f32[8,8,128]{2,1,0:T(8,128)}', space=vmem, size = 0x8000, scoped, tag = 'scratch operand']
  #allocation5 [shape = 'f32[1,1]{1,0:T(1,128)S(1)}', space=vmem, size = 0x200, scoped, tag = 'scoped memory for tpu_custom_call.1']
  %s0 = inlined_call_operand.vmem [shape: f32[24,24,5], index: 0, kind: input, shape index: {}]
  %s1 = inlined_call_operand.vmem [shape: f32[5,384], index: 1, kind: input, shape index: {}]
  %s2 = inlined_call_operand.vmem [shape: f32[128,384], index: 2, kind: input, shape index: {}]
  %s3 = inlined_call_operand.vmem [shape: f32[1,384], index: 3, kind: input, shape index: {}]
  %s4 = inlined_call_operand.vmem [shape: f32[1,384], index: 4, kind: input, shape index: {}]
  %s5 = inlined_call_operand.vmem [shape: f32[128,128], index: 5, kind: input, shape index: {}]
  %s6 = inlined_call_operand.vmem [shape: f32[1,128], index: 6, kind: input, shape index: {}]
  %s7 = inlined_call_operand.vmem [shape: f32[128,128], index: 7, kind: input, shape index: {}]
  %s8 = inlined_call_operand.<no memory space> [shape: f32[1,1], index: 8, kind: input, shape index: {}]
  %s9 = inlined_call_operand.vmem [shape: f32[24,24,1], index: 9, kind: output, shape index: {}]
  %s10 = sld [smem:[#allocation0]]
  $region145: #{tpu_custom_call.1} parent=0
    _
  %s12 = ssub.s32 1, %s10
  %s13 = scalar_select 0, %s12, %s10
  %v14 = vstv %s8
  %15 = vst [vmem:[#allocation5] sm:$0x1] %v14
  $region1: #{tpu_custom_call.1} parent=0
    #allocation6 [shape = 'u8[65536]{0}', space=vmem, size = 0x10000, scoped, tag = 'input window, operand 0']
    #allocation7 [shape = 'u8[65536]{0}', space=vmem, size = 0x10000, scoped, tag = 'output window, operand 0']
    loop: start=0, step=1, limit=11
    $region2: #{tpu_custom_call.1} parent=1 // loop_pre_header
      _
    $region3: #{tpu_custom_call.1} parent=1 // loop_header
      %s17 = sphi 0, %s21
      %p18 = scmp.ge.s32.totalorder %s17, 11
      %s24 = sphi 0, %s36
      %s25 = sphi 0, %s32
      %s26 = sphi 0, %s24
      %s27 = sphi 0, %s25
      %s28 = sphi 0, %s26
      %s29 = sphi 0, %s27
      %s41 = sphi 0, %s43
      %s44 = sphi 0, %s41
      %s45 = sphi 0, %s44
      %s61 = sphi 0, %s45
      %s65 = sphi 0, %s65
      %s67 = sphi 0, %s65
      %s68 = sphi 0, %s67
      %s82 = sphi 0, %s68
      %s86 = sphi 0, %s86
      %s88 = sphi 0, %s86
      %s89 = sphi 0, %s88
      %s103 = sphi 0, %s89
      %s107 = sphi 0, %s107
      %s109 = sphi 0, %s107
      %s110 = sphi 0, %s109
      %s124 = sphi 0, %s110
      %s128 = sphi 0, %s128
      %s130 = sphi 0, %s128
      %s131 = sphi 0, %s130
      %s145 = sphi 0, %s131
      %s149 = sphi 0, %s149
      %s151 = sphi 0, %s149
      %s152 = sphi 0, %s151
      %s166 = sphi 0, %s152
      %s170 = sphi 0, %s170
      %s172 = sphi 0, %s170
      %s173 = sphi 0, %s172
      %s187 = sphi 0, %s173
      %s191 = sphi 0, %s191
      %s193 = sphi 0, %s191
      %s194 = sphi 0, %s193
      %s208 = sphi 0, %s194
      %s212 = sphi 0, %s212
      %s214 = sphi 0, %s212
      %s215 = sphi 0, %s214
      %s229 = sphi 0, %s215
      %s237 = sphi 0, %s239
      %s240 = sphi 0, %s237
      %s241 = sphi 0, %s240
      %s257 = sphi 0, %s241
    $region4: #{tpu_custom_call.1} parent=1 // loop_header_branch
      %20 = sbr.rel (%p18) target = $region8
    $region5: #{tpu_custom_call.1} parent=1 // loop_body
      %s22 = ssub.s32 %s17, 1
      %s23 = ssub.s32 %s17, 2
      %s30 = sadd.s32 1, %s25
      %p31 = scmp.ge.s32.totalorder %s30, 3
      %s32 = scalar_select %p31, 0, %s30
      %s33 = sadd.s32 1, %s24
      %s34 = scalar_select %p31, %s33, %s24
      %p35 = scmp.ge.s32.totalorder %s34, 3
      %s36 = scalar_select %p35, 0, %s34
      %s37 = ssub.s32 %s25, %s32
      %s38 = ssub.s32 %s24, %s36
      %s39 = sor.u32 %s37, %s38
      %p40 = scmp.eq.s32.totalorder %s39, 0
      %s42 = sadd.s32 %s41, 1
      %s43 = scalar_select %p40, %s41, %s42
      %p46 = pneg %p40
      %p47 = scmp.eq.s32.totalorder %s17, 8
      %p48 = por %p46, %p47
      %p49 = scmp.ne.s32.totalorder %s41, %s44
      %p50 = scmp.eq.s32.totalorder %s17, 0
      %p51 = por %p49, %p50
      %p52 = scmp.ne.s32.totalorder %s41, %s44
      %p53 = scmp.eq.s32.totalorder %s22, 8
      %p54 = por %p52, %p53
      %p55 = scmp.ne.s32.totalorder %s44, %s45
      %p56 = scmp.eq.s32.totalorder %s22, 0
      %p57 = por %p55, %p56
      %p58 = scmp.ne.s32.totalorder %s44, %s45
      %p59 = scmp.eq.s32.totalorder %s23, 8
      %p60 = por %p58, %p59
      %p62 = scmp.ne.s32.totalorder %s45, %s61
      %p63 = scmp.eq.s32.totalorder %s23, 0
      %p64 = por %p62, %p63
      %s66 = sadd.s32 %s65, 1
      %p69 = scmp.eq.s32.totalorder %s17, 8
      %p70 = scmp.ne.s32.totalorder %s65, %s67
      %p71 = scmp.eq.s32.totalorder %s17, 0
      %p72 = por %p70, %p71
      %p73 = scmp.ne.s32.totalorder %s65, %s67
      %p74 = scmp.eq.s32.totalorder %s22, 8
      %p75 = por %p73, %p74
      %p76 = scmp.ne.s32.totalorder %s67, %s68
      %p77 = scmp.eq.s32.totalorder %s22, 0
      %p78 = por %p76, %p77
      %p79 = scmp.ne.s32.totalorder %s67, %s68
      %p80 = scmp.eq.s32.totalorder %s23, 8
      %p81 = por %p79, %p80
      %p83 = scmp.ne.s32.totalorder %s68, %s82
      %p84 = scmp.eq.s32.totalorder %s23, 0
      %p85 = por %p83, %p84
      %s87 = sadd.s32 %s86, 1
      %p90 = scmp.eq.s32.totalorder %s17, 8
      %p91 = scmp.ne.s32.totalorder %s86, %s88
      %p92 = scmp.eq.s32.totalorder %s17, 0
      %p93 = por %p91, %p92
      %p94 = scmp.ne.s32.totalorder %s86, %s88
      %p95 = scmp.eq.s32.totalorder %s22, 8
      %p96 = por %p94, %p95
      %p97 = scmp.ne.s32.totalorder %s88, %s89
      %p98 = scmp.eq.s32.totalorder %s22, 0
      %p99 = por %p97, %p98
      %p100 = scmp.ne.s32.totalorder %s88, %s89
      %p101 = scmp.eq.s32.totalorder %s23, 8
      %p102 = por %p100, %p101
      %p104 = scmp.ne.s32.totalorder %s89, %s103
      %p105 = scmp.eq.s32.totalorder %s23, 0
      %p106 = por %p104, %p105
      %s108 = sadd.s32 %s107, 1
      %p111 = scmp.eq.s32.totalorder %s17, 8
      %p112 = scmp.ne.s32.totalorder %s107, %s109
      %p113 = scmp.eq.s32.totalorder %s17, 0
      %p114 = por %p112, %p113
      %p115 = scmp.ne.s32.totalorder %s107, %s109
      %p116 = scmp.eq.s32.totalorder %s22, 8
      %p117 = por %p115, %p116
      %p118 = scmp.ne.s32.totalorder %s109, %s110
      %p119 = scmp.eq.s32.totalorder %s22, 0
      %p120 = por %p118, %p119
      %p121 = scmp.ne.s32.totalorder %s109, %s110
      %p122 = scmp.eq.s32.totalorder %s23, 8
      %p123 = por %p121, %p122
      %p125 = scmp.ne.s32.totalorder %s110, %s124
      %p126 = scmp.eq.s32.totalorder %s23, 0
      %p127 = por %p125, %p126
      %s129 = sadd.s32 %s128, 1
      %p132 = scmp.eq.s32.totalorder %s17, 8
      %p133 = scmp.ne.s32.totalorder %s128, %s130
      %p134 = scmp.eq.s32.totalorder %s17, 0
      %p135 = por %p133, %p134
      %p136 = scmp.ne.s32.totalorder %s128, %s130
      %p137 = scmp.eq.s32.totalorder %s22, 8
      %p138 = por %p136, %p137
      %p139 = scmp.ne.s32.totalorder %s130, %s131
      %p140 = scmp.eq.s32.totalorder %s22, 0
      %p141 = por %p139, %p140
      %p142 = scmp.ne.s32.totalorder %s130, %s131
      %p143 = scmp.eq.s32.totalorder %s23, 8
      %p144 = por %p142, %p143
      %p146 = scmp.ne.s32.totalorder %s131, %s145
      %p147 = scmp.eq.s32.totalorder %s23, 0
      %p148 = por %p146, %p147
      %s150 = sadd.s32 %s149, 1
      %p153 = scmp.eq.s32.totalorder %s17, 8
      %p154 = scmp.ne.s32.totalorder %s149, %s151
      %p155 = scmp.eq.s32.totalorder %s17, 0
      %p156 = por %p154, %p155
      %p157 = scmp.ne.s32.totalorder %s149, %s151
      %p158 = scmp.eq.s32.totalorder %s22, 8
      %p159 = por %p157, %p158
      %p160 = scmp.ne.s32.totalorder %s151, %s152
      %p161 = scmp.eq.s32.totalorder %s22, 0
      %p162 = por %p160, %p161
      %p163 = scmp.ne.s32.totalorder %s151, %s152
      %p164 = scmp.eq.s32.totalorder %s23, 8
      %p165 = por %p163, %p164
      %p167 = scmp.ne.s32.totalorder %s152, %s166
      %p168 = scmp.eq.s32.totalorder %s23, 0
      %p169 = por %p167, %p168
      %s171 = sadd.s32 %s170, 1
      %p174 = scmp.eq.s32.totalorder %s17, 8
      %p175 = scmp.ne.s32.totalorder %s170, %s172
      %p176 = scmp.eq.s32.totalorder %s17, 0
      %p177 = por %p175, %p176
      %p178 = scmp.ne.s32.totalorder %s170, %s172
      %p179 = scmp.eq.s32.totalorder %s22, 8
      %p180 = por %p178, %p179
      %p181 = scmp.ne.s32.totalorder %s172, %s173
      %p182 = scmp.eq.s32.totalorder %s22, 0
      %p183 = por %p181, %p182
      %p184 = scmp.ne.s32.totalorder %s172, %s173
      %p185 = scmp.eq.s32.totalorder %s23, 8
      %p186 = por %p184, %p185
      %p188 = scmp.ne.s32.totalorder %s173, %s187
      %p189 = scmp.eq.s32.totalorder %s23, 0
      %p190 = por %p188, %p189
      %s192 = sadd.s32 %s191, 1
      %p195 = scmp.eq.s32.totalorder %s17, 8
      %p196 = scmp.ne.s32.totalorder %s191, %s193
      %p197 = scmp.eq.s32.totalorder %s17, 0
      %p198 = por %p196, %p197
      %p199 = scmp.ne.s32.totalorder %s191, %s193
      %p200 = scmp.eq.s32.totalorder %s22, 8
      %p201 = por %p199, %p200
      %p202 = scmp.ne.s32.totalorder %s193, %s194
      %p203 = scmp.eq.s32.totalorder %s22, 0
      %p204 = por %p202, %p203
      %p205 = scmp.ne.s32.totalorder %s193, %s194
      %p206 = scmp.eq.s32.totalorder %s23, 8
      %p207 = por %p205, %p206
      %p209 = scmp.ne.s32.totalorder %s194, %s208
      %p210 = scmp.eq.s32.totalorder %s23, 0
      %p211 = por %p209, %p210
      %s213 = sadd.s32 %s212, 1
      %p216 = scmp.eq.s32.totalorder %s17, 8
      %p217 = scmp.ne.s32.totalorder %s212, %s214
      %p218 = scmp.eq.s32.totalorder %s17, 0
      %p219 = por %p217, %p218
      %p220 = scmp.ne.s32.totalorder %s212, %s214
      %p221 = scmp.eq.s32.totalorder %s22, 8
      %p222 = por %p220, %p221
      %p223 = scmp.ne.s32.totalorder %s214, %s215
      %p224 = scmp.eq.s32.totalorder %s22, 0
      %p225 = por %p223, %p224
      %p226 = scmp.ne.s32.totalorder %s214, %s215
      %p227 = scmp.eq.s32.totalorder %s23, 8
      %p228 = por %p226, %p227
      %p230 = scmp.ne.s32.totalorder %s215, %s229
      %p231 = scmp.eq.s32.totalorder %s23, 0
      %p232 = por %p230, %p231
      %s233 = ssub.s32 %s25, %s32
      %s234 = ssub.s32 %s24, %s36
      %s235 = sor.u32 %s233, %s234
      %p236 = scmp.eq.s32.totalorder %s235, 0
      %s238 = sadd.s32 %s237, 1
      %s239 = scalar_select %p236, %s237, %s238
      %p242 = pneg %p236
      %p243 = scmp.eq.s32.totalorder %s17, 8
      %p244 = por %p242, %p243
      %p245 = scmp.ne.s32.totalorder %s237, %s240
      %p246 = scmp.eq.s32.totalorder %s17, 0
      %p247 = por %p245, %p246
      %p248 = scmp.ne.s32.totalorder %s237, %s240
      %p249 = scmp.eq.s32.totalorder %s22, 8
      %p250 = por %p248, %p249
      %p251 = scmp.ne.s32.totalorder %s240, %s241
      %p252 = scmp.eq.s32.totalorder %s22, 0
      %p253 = por %p251, %p252
      %p254 = scmp.ne.s32.totalorder %s240, %s241
      %p255 = scmp.eq.s32.totalorder %s23, 8
      %p256 = por %p254, %p255
      %p258 = scmp.ne.s32.totalorder %s241, %s257
      %p259 = scmp.eq.s32.totalorder %s23, 0
      %p260 = por %p258, %p259
      %p261 = scmp.le.s32.totalorder 1, %s17
      %p262 = scmp.lt.s32.totalorder %s17, 10
      %p263 = pnand %p261, %p262
      %p264 = pneg %p263
      // Predicated region
      $region9: #{tpu_custom_call.1} parent=5 // pred_check
        _
      $region10: #{tpu_custom_call.1} parent=5 // pred_check_branch
        %266 = sbr.rel (%p263) target = $region12
      $region11: #{tpu_custom_call.1} parent=5 // pred_region
        %s267 = ssub.s32 %s17, 1
        // Predicated region
        $region13: #{tpu_custom_call.1} parent=11 // pred_check
          %p268 = pneg %p78
        $region14: #{tpu_custom_call.1} parent=11 // pred_check_branch
          %270 = sbr.rel (%p268) target = $region16
        $region15: #{tpu_custom_call.1} parent=11 // pred_region
          _
        $region16: #{tpu_custom_call.1} parent=11 // pred_fallthru
          _
        // Predicated region
        $region17: #{tpu_custom_call.1} parent=11 // pred_check
          %p271 = pneg %p99
        $region18: #{tpu_custom_call.1} parent=11 // pred_check_branch
          %273 = sbr.rel (%p271) target = $region20
        $region19: #{tpu_custom_call.1} parent=11 // pred_region
          _
        $region20: #{tpu_custom_call.1} parent=11 // pred_fallthru
          _
        // Predicated region
        $region21: #{tpu_custom_call.1} parent=11 // pred_check
          %p274 = pneg %p120
        $region22: #{tpu_custom_call.1} parent=11 // pred_check_branch
          %276 = sbr.rel (%p274) target = $region24
        $region23: #{tpu_custom_call.1} parent=11 // pred_region
          _
        $region24: #{tpu_custom_call.1} parent=11 // pred_fallthru
          _
        // Predicated region
        $region25: #{tpu_custom_call.1} parent=11 // pred_check
          %p277 = pneg %p141
        $region26: #{tpu_custom_call.1} parent=11 // pred_check_branch
          %279 = sbr.rel (%p277) target = $region28
        $region27: #{tpu_custom_call.1} parent=11 // pred_region
          _
        $region28: #{tpu_custom_call.1} parent=11 // pred_fallthru
          _
        // Predicated region
        $region29: #{tpu_custom_call.1} parent=11 // pred_check
          %p280 = pneg %p162
        $region30: #{tpu_custom_call.1} parent=11 // pred_check_branch
          %282 = sbr.rel (%p280) target = $region32
        $region31: #{tpu_custom_call.1} parent=11 // pred_region
          _
        $region32: #{tpu_custom_call.1} parent=11 // pred_fallthru
          _
        // Predicated region
        $region33: #{tpu_custom_call.1} parent=11 // pred_check
          %p283 = pneg %p183
        $region34: #{tpu_custom_call.1} parent=11 // pred_check_branch
          %285 = sbr.rel (%p283) target = $region36
        $region35: #{tpu_custom_call.1} parent=11 // pred_region
          _
        $region36: #{tpu_custom_call.1} parent=11 // pred_fallthru
          _
        // Predicated region
        $region37: #{tpu_custom_call.1} parent=11 // pred_check
          %p286 = pneg %p204
        $region38: #{tpu_custom_call.1} parent=11 // pred_check_branch
          %288 = sbr.rel (%p286) target = $region40
        $region39: #{tpu_custom_call.1} parent=11 // pred_region
          _
        $region40: #{tpu_custom_call.1} parent=11 // pred_fallthru
          _
        // Predicated region
        $region41: #{tpu_custom_call.1} parent=11 // pred_check
          %p289 = pneg %p225
        $region42: #{tpu_custom_call.1} parent=11 // pred_check_branch
          %291 = sbr.rel (%p289) target = $region44
        $region43: #{tpu_custom_call.1} parent=11 // pred_region
          _
        $region44: #{tpu_custom_call.1} parent=11 // pred_fallthru
          _
      $region12: #{tpu_custom_call.1} parent=5 // pred_fallthru
        _
      %p292 = scmp.lt.s32.totalorder %s17, 9
      // Predicated region
      $region45: #{tpu_custom_call.1} parent=5 // pred_check
        %p293 = pneg %p292
      $region46: #{tpu_custom_call.1} parent=5 // pred_check_branch
        %295 = sbr.rel (%p293) target = $region48
      $region47: #{tpu_custom_call.1} parent=5 // pred_region
        // Predicated region
        $region49: #{tpu_custom_call.1} parent=47 // pred_check
          %p296 = pneg %p51
        $region50: #{tpu_custom_call.1} parent=47 // pred_check_branch
          %298 = sbr.rel (%p296) target = $region52
        $region51: #{tpu_custom_call.1} parent=47 // pred_region
          %s299 = sand.u32 %s41, 1
          %s300 = sand.u32 %s41, 1
          %s301 = smul.addr %s300, 64
          %s302 = scalar_lea.vmem [#allocation6], %s301
          %s303 = smul.u32 8, %s25
          %s304 = smul.addr %s303, 3
          %s305 = sadd.s32 %s24, %s304
          %s306 = smul.addr %s305, 8
          %s307 = scalar_lea.vmem %s0, %s306
          // Predicated region
          $region53: #{tpu_custom_call.1} parent=51 // pred_check
            _
          $region54: #{tpu_custom_call.1} parent=51 // pred_check_branch
            %309 = sbr.rel (0) target = $region56
          $region55: #{tpu_custom_call.1} parent=51 // pred_region
            // Predicated region
            $region57: #{tpu_custom_call.1} parent=55 // pred_check
              _
            $region58: #{tpu_custom_call.1} parent=55 // pred_check_branch
              %311 = sbr.rel (0) target = $region60
            $region59: #{tpu_custom_call.1} parent=55 // pred_region
              // Predicated region
              $region72: #{tpu_custom_call.1} parent=59 // pred_check
                _
              $region73: #{tpu_custom_call.1} parent=59 // pred_check_branch
                %341 = sbr.rel (0) target = $region75
              $region74: #{tpu_custom_call.1} parent=59 // pred_region
                loop: start=0, step=1, limit=1
                $region76: #{tpu_custom_call.1} parent=74 // loop_pre_header
                  _
                $region77: #{tpu_custom_call.1} parent=74 // loop_header
                  %s343 = sphi 0, %s347
                  %p344 = scmp.ge.s32.totalorder %s343, 1
                  %s348 = sphi %s307, %s307
                  %s349 = sphi %s302, %s302
                $region78: #{tpu_custom_call.1} parent=74 // loop_header_branch
                  %346 = sbr.rel (%p344) target = $region82
                $region79: #{tpu_custom_call.1} parent=74 // loop_body
                  %v350 = vld [vmem:[%s348] sm:$0xff]
                  %351 = vst [vmem:[%s349] sm:$0xff] %v350
                  %v352 = vld [vmem:[%s348 + $0x18] sm:$0xff]
                  %353 = vst [vmem:[%s349 + $0x8] sm:$0xff] %v352
                  %v354 = vld [vmem:[%s348 + $0x30] sm:$0xff]
                  %355 = vst [vmem:[%s349 + $0x10] sm:$0xff] %v354
                  %v356 = vld [vmem:[%s348 + $0x48] sm:$0xff]
                  %357 = vst [vmem:[%s349 + $0x18] sm:$0xff] %v356
                  %v358 = vld [vmem:[%s348 + $0x60] sm:$0xff]
                  %359 = vst [vmem:[%s349 + $0x20] sm:$0xff] %v358
                  %v360 = vld [vmem:[%s348 + $0x78] sm:$0xff]
                  %361 = vst [vmem:[%s349 + $0x28] sm:$0xff] %v360
                  %v362 = vld [vmem:[%s348 + $0x90] sm:$0xff]
                  %363 = vst [vmem:[%s349 + $0x30] sm:$0xff] %v362
                  %v364 = vld [vmem:[%s348 + $0xa8] sm:$0xff]
                  %365 = vst [vmem:[%s349 + $0x38] sm:$0xff] %v364
                $region80: #{tpu_custom_call.1} parent=74 // loop_footer
                  %s347 = sadd.s32 1, %s343
                $region81: #{tpu_custom_call.1} parent=74 // loop_footer_branch
                  %342 = sbr.rel target = $region77
                $region82: #{tpu_custom_call.1} parent=74 // loop_exit
                  _
              $region75: #{tpu_custom_call.1} parent=59 // pred_fallthru
                _
              // Predicated region
              $region83: #{tpu_custom_call.1} parent=59 // pred_check
                _
              $region84: #{tpu_custom_call.1} parent=59 // pred_check_branch
                %367 = sbr.rel target = $region86
              $region85: #{tpu_custom_call.1} parent=59 // pred_region
                _
              $region86: #{tpu_custom_call.1} parent=59 // pred_fallthru
                _
            $region60: #{tpu_custom_call.1} parent=55 // pred_fallthru
              _
            // Predicated region
            $region61: #{tpu_custom_call.1} parent=55 // pred_check
              _
            $region62: #{tpu_custom_call.1} parent=55 // pred_check_branch
              %313 = sbr.rel target = $region64
            $region63: #{tpu_custom_call.1} parent=55 // pred_region
              %s315 = ssub.s32 256, 1
              loop: start=0, step=1, limit=1
              $region65: #{tpu_custom_call.1} parent=63 // loop_pre_header
                _
              $region66: #{tpu_custom_call.1} parent=63 // loop_header
                %s317 = sphi 0, %s321
                %p318 = scmp.ge.s32.totalorder %s317, 1
                %s322 = sphi %s307, %s307
                %s323 = sphi %s302, %s302
              $region67: #{tpu_custom_call.1} parent=63 // loop_header_branch
                %320 = sbr.rel (%p318) target = $region71
              $region68: #{tpu_custom_call.1} parent=63 // loop_body
                %v324 = vld [vmem:[%s322] sm:%s315]
                %325 = vst [vmem:[%s323] sm:%s315] %v324
                %v326 = vld [vmem:[%s322 + $0x18] sm:%s315]
                %327 = vst [vmem:[%s323 + $0x8] sm:%s315] %v326
                %v328 = vld [vmem:[%s322 + $0x30] sm:%s315]
                %329 = vst [vmem:[%s323 + $0x10] sm:%s315] %v328
                %v330 = vld [vmem:[%s322 + $0x48] sm:%s315]
                %331 = vst [vmem:[%s323 + $0x18] sm:%s315] %v330
                %v332 = vld [vmem:[%s322 + $0x60] sm:%s315]
                %333 = vst [vmem:[%s323 + $0x20] sm:%s315] %v332
                %v334 = vld [vmem:[%s322 + $0x78] sm:%s315]
                %335 = vst [vmem:[%s323 + $0x28] sm:%s315] %v334
                %v336 = vld [vmem:[%s322 + $0x90] sm:%s315]
                %337 = vst [vmem:[%s323 + $0x30] sm:%s315] %v336
                %v338 = vld [vmem:[%s322 + $0xa8] sm:%s315]
                %339 = vst [vmem:[%s323 + $0x38] sm:%s315] %v338
              $region69: #{tpu_custom_call.1} parent=63 // loop_footer
                %s321 = sadd.s32 1, %s317
              $region70: #{tpu_custom_call.1} parent=63 // loop_footer_branch
                %316 = sbr.rel target = $region66
              $region71: #{tpu_custom_call.1} parent=63 // loop_exit
                _
            $region64: #{tpu_custom_call.1} parent=55 // pred_fallthru
              _
          $region56: #{tpu_custom_call.1} parent=51 // pred_fallthru
            _
          %368 = vnop
        $region52: #{tpu_custom_call.1} parent=47 // pred_fallthru
          _
      $region48: #{tpu_custom_call.1} parent=5 // pred_fallthru
        _
      %p369 = scmp.le.s32.totalorder 1, %s17
      %p370 = scmp.lt.s32.totalorder %s17, 10
      %p371 = pnand %p369, %p370
      %p372 = pneg %p371
      // Predicated region
      $region87: #{tpu_custom_call.1} parent=5 // pred_check
        _
      $region88: #{tpu_custom_call.1} parent=5 // pred_check_branch
        %374 = sbr.rel (%p371) target = $region90
      $region89: #{tpu_custom_call.1} parent=5 // pred_region
        %s375 = ssub.s32 %s17, 1
        %s376 = sand.u32 %s44, 1
        %s377 = sand.u32 %s44, 1
        %s378 = smul.addr %s377, 64
        %s379 = scalar_lea.vmem [#allocation6], %s378
        // Predicated region
        $region91: #{tpu_custom_call.1} parent=89 // pred_check
          %p380 = pneg %p57
        $region92: #{tpu_custom_call.1} parent=89 // pred_check_branch
          %382 = sbr.rel (%p380) target = $region94
        $region93: #{tpu_custom_call.1} parent=89 // pred_region
          _
        $region94: #{tpu_custom_call.1} parent=89 // pred_fallthru
          _
        %s383 = sand.u32 %s44, 1
        %s384 = sand.u32 %s44, 1
        %s385 = smul.addr %s384, 64
        %s386 = scalar_lea.vmem [#allocation6], %s385
        %p387 = pneg %p57
        %p388 = pneg %p54
        %p389 = pneg %p78
        %p390 = pneg %p75
        %p391 = pneg %p99
        %p392 = pneg %p96
        %p393 = pneg %p120
        %p394 = pneg %p117
        %p395 = pneg %p141
        %p396 = pneg %p138
        %p397 = pneg %p162
        %p398 = pneg %p159
        %p399 = pneg %p183
        %p400 = pneg %p180
        %p401 = pneg %p204
        %p402 = pneg %p201
        %p403 = pneg %p225
        %p404 = pneg %p222
        %p405 = pneg %p253
        %p406 = pneg %p250
        %s407 = sand.u32 %s240, 1
        %s408 = sand.u32 %s240, 1
        %s409 = smul.addr %s408, 64
        %s410 = scalar_lea.vmem [#allocation7], %s409
        %s411 = smul.u32 8, %s27
        %s412 = smul.u32 8, %s27
        %p413 = scmp.eq.s32.totalorder %s27, 0
        // Predicated region
        $region95: #{tpu_custom_call.1} parent=89 // pred_check
          %p414 = pneg %p413
        $region96: #{tpu_custom_call.1} parent=89 // pred_check_branch
          %416 = sbr.rel (%p414) target = $region98
        $region97: #{tpu_custom_call.1} parent=89 // pred_region
          %417 = vst [vmem:[#allocation2] sm:$0xff] 0.0
        $region98: #{tpu_custom_call.1} parent=89 // pred_fallthru
          _
        %v418 = vld [vmem:[%s379] sm:$0xff]
        %v419 = vld [vmem:[%s379 + $0x8] sm:$0xff]
        %v420 = vld [vmem:[%s379 + $0x10] sm:$0xff]
        %v421 = vld [vmem:[%s379 + $0x18] sm:$0xff]
        %v422 = vld [vmem:[%s379 + $0x20] sm:$0xff]
        %v423 = vld [vmem:[%s379 + $0x28] sm:$0xff]
        %v424 = vld [vmem:[%s379 + $0x30] sm:$0xff]
        %v425 = vld [vmem:[%s379 + $0x38] sm:$0xff]
        %v426 = vld [vmem:[%s1] sm:$0x1f]
        %v427 = vld [vmem:[%s1 + $0x8] sm:$0x1f]
        %v428 = vld [vmem:[%s1 + $0x10] sm:$0x1f]
        %v429 = vld [vmem:[%s3] sm:$0x7]
        %v431 = vlaneseq
        %v432 = vshrl.u32 %v431, 7
        %v433 = vsub.s32 0, %v432
        %v434 = vrot.slane %v429, %v433
        %v435 = vlaneseq
        %v436 = vshrl.u32 %v435, 7
        %v437 = vsub.s32 1, %v436
        %v438 = vrot.slane %v429, %v437
        %v439 = vlaneseq
        %v440 = vshrl.u32 %v439, 7
        %v441 = vsub.s32 2, %v440
        %v442 = vrot.slane %v429, %v441
        %vm446 = vcmask 39936
        %v448 = vsel %vm446, %v418, 0
        %v451 = vsel %vm446, %v419, 0
        %v454 = vsel %vm446, %v420, 0
        %v457 = vsel %vm446, %v421, 0
        %v460 = vsel %vm446, %v422, 0
        %v463 = vsel %vm446, %v423, 0
        %v466 = vsel %vm446, %v424, 0
        %v469 = vsel %vm446, %v425, 0
        %vm471 = vcmask 1044480
        %v473 = vsel %vm471, %v426, 0
        %v476 = vsel %vm471, %v427, 0
        %v479 = vsel %vm471, %v428, 0
        %481 = vmatprep.subr.mxu0 0.0
        %482 = vmatpush1.msra.mxu0 0.0
        %483 = vmatprep.subr.mxu0 0.0
        %484 = vmatpush1.msra.mxu0 0.0
        %485 = vmatprep.subr.mxu0 0.0
        %486 = vmatpush1.msra.mxu0 0.0
        %487 = vmatprep.subr.mxu0 0.0
        %488 = vmatpush1.msra.mxu0 0.0
        %489 = vmatprep.subr.mxu0 0.0
        %490 = vmatpush1.msra.mxu0 0.0
        %491 = vmatprep.subr.mxu0 0.0
        %492 = vmatpush1.msra.mxu0 0.0
        %493 = vmatprep.subr.mxu0 0.0
        %494 = vmatpush1.msra.mxu0 0.0
        %495 = vmatprep.subr.mxu0 0.0
        %496 = vmatpush1.msra.mxu0 0.0
        %497 = vmatprep.subr.mxu0 0.0
        %498 = vmatpush1.msra.mxu0 0.0
        %499 = vmatprep.subr.mxu0 0.0
        %500 = vmatpush1.msra.mxu0 0.0
        %501 = vmatprep.subr.mxu0 0.0
        %502 = vmatpush1.msra.mxu0 0.0
        %503 = vmatprep.subr.mxu0 0.0
        %504 = vmatpush1.msra.mxu0 0.0
        %505 = vmatprep.subr.mxu0 0.0
        %506 = vmatpush1.msra.mxu0 0.0
        %507 = vmatprep.subr.mxu0 0.0
        %508 = vmatpush1.msra.mxu0 0.0
        %509 = vmatprep.subr.mxu0 0.0
        %510 = vmatpush1.msra.mxu0 0.0
        %511 = vmatprep.subr.mxu0 %v476
        %512 = vmatpush1.msra.mxu0 %v473
        %513 = vmatprep.subr.mxu0 0.0
        %514 = vmatpush2.msra.mxu0 0.0
        %515 = vmatprep.subr.mxu0 0.0
        %516 = vmatpush2.msra.mxu0 0.0
        %517 = vmatprep.subr.mxu0 0.0
        %518 = vmatpush2.msra.mxu0 0.0
        %519 = vmatprep.subr.mxu0 0.0
        %520 = vmatpush2.msra.mxu0 0.0
        %521 = vmatprep.subr.mxu0 0.0
        %522 = vmatpush2.msra.mxu0 0.0
        %523 = vmatprep.subr.mxu0 0.0
        %524 = vmatpush2.msra.mxu0 0.0
        %525 = vmatprep.subr.mxu0 0.0
        %526 = vmatpush2.msra.mxu0 0.0
        %527 = vmatprep.subr.mxu0 0.0
        %528 = vmatpush2.msra.mxu0 0.0
        %529 = vmatprep.subr.mxu0 0.0
        %530 = vmatpush2.msra.mxu0 0.0
        %531 = vmatprep.subr.mxu0 0.0
        %532 = vmatpush2.msra.mxu0 0.0
        %533 = vmatprep.subr.mxu0 0.0
        %534 = vmatpush2.msra.mxu0 0.0
        %535 = vmatprep.subr.mxu0 0.0
        %536 = vmatpush2.msra.mxu0 0.0
        %537 = vmatprep.subr.mxu0 0.0
        %538 = vmatpush2.msra.mxu0 0.0
        %539 = vmatprep.subr.mxu0 0.0
        %540 = vmatpush2.msra.mxu0 0.0
        %541 = vmatprep.subr.mxu0 0.0
        %542 = vmatpush2.msra.mxu0 0.0
        %543 = vmatprep.subr.mxu0 0.0
        %544 = vmatpush2.msra.mxu0 0.0
        %545 = vmatprep.mubr.f32.mxu0 0.0
        %546 = vmatmul.mubr.f32.gmra.mxu0 %v448
        %v547 = vpop.f32.mrf.mxu0
        %v548 = vadd.f32 %v434, %v547
        %v549 = vpop.f32.mrf.mxu0
        %v550 = vadd.f32 %v438, %v549
        %551 = vmatprep.mubr.f32.mxu0 0.0
        %552 = vmatmul.mubr.f32.gmra.mxu0 %v451
        %v553 = vpop.f32.mrf.mxu0
        %v554 = vadd.f32 %v434, %v553
        %v555 = vpop.f32.mrf.mxu0
        %v556 = vadd.f32 %v438, %v555
        %557 = vmatprep.mubr.f32.mxu0 0.0
        %558 = vmatmul.mubr.f32.gmra.mxu0 %v454
        %v559 = vpop.f32.mrf.mxu0
        %v560 = vadd.f32 %v434, %v559
        %v561 = vpop.f32.mrf.mxu0
        %v562 = vadd.f32 %v438, %v561
        %563 = vmatprep.mubr.f32.mxu0 0.0
        %564 = vmatmul.mubr.f32.gmra.mxu0 %v457
        %v565 = vpop.f32.mrf.mxu0
        %v566 = vadd.f32 %v434, %v565
        %v567 = vpop.f32.mrf.mxu0
        %v568 = vadd.f32 %v438, %v567
        %569 = vmatprep.mubr.f32.mxu0 0.0
        %570 = vmatmul.mubr.f32.gmra.mxu0 %v460
        %v571 = vpop.f32.mrf.mxu0
        %v572 = vadd.f32 %v434, %v571
        %v573 = vpop.f32.mrf.mxu0
        %v574 = vadd.f32 %v438, %v573
        %575 = vmatprep.mubr.f32.mxu0 0.0
        %576 = vmatmul.mubr.f32.gmra.mxu0 %v463
        %v577 = vpop.f32.mrf.mxu0
        %v578 = vadd.f32 %v434, %v577
        %v579 = vpop.f32.mrf.mxu0
        %v580 = vadd.f32 %v438, %v579
        %581 = vmatprep.mubr.f32.mxu0 0.0
        %582 = vmatmul.mubr.f32.gmra.mxu0 %v466
        %v583 = vpop.f32.mrf.mxu0
        %v584 = vadd.f32 %v434, %v583
        %v585 = vpop.f32.mrf.mxu0
        %v586 = vadd.f32 %v438, %v585
        %587 = vmatprep.mubr.f32.mxu0 0.0
        %588 = vmatmul.mubr.f32.gmra.mxu0 %v469
        %v589 = vpop.f32.mrf.mxu0
        %v590 = vadd.f32 %v434, %v589
        %v591 = vpop.f32.mrf.mxu0
        %v592 = vadd.f32 %v438, %v591
        %593 = vdwg.mxu0
        %594 = vmatprep.subr.mxu0 0.0
        %595 = vmatpush1.msra.mxu0 0.0
        %596 = vmatprep.subr.mxu0 0.0
        %597 = vmatpush1.msra.mxu0 0.0
        %598 = vmatprep.subr.mxu0 0.0
        %599 = vmatpush1.msra.mxu0 0.0
        %600 = vmatprep.subr.mxu0 0.0
        %601 = vmatpush1.msra.mxu0 0.0
        %602 = vmatprep.subr.mxu0 0.0
        %603 = vmatpush1.msra.mxu0 0.0
        %604 = vmatprep.subr.mxu0 0.0
        %605 = vmatpush1.msra.mxu0 0.0
        %606 = vmatprep.subr.mxu0 0.0
        %607 = vmatpush1.msra.mxu0 0.0
        %608 = vmatprep.subr.mxu0 0.0
        %609 = vmatpush1.msra.mxu0 0.0
        %610 = vmatprep.subr.mxu0 0.0
        %611 = vmatpush1.msra.mxu0 0.0
        %612 = vmatprep.subr.mxu0 0.0
        %613 = vmatpush1.msra.mxu0 0.0
        %614 = vmatprep.subr.mxu0 0.0
        %615 = vmatpush1.msra.mxu0 0.0
        %616 = vmatprep.subr.mxu0 0.0
        %617 = vmatpush1.msra.mxu0 0.0
        %618 = vmatprep.subr.mxu0 0.0
        %619 = vmatpush1.msra.mxu0 0.0
        %620 = vmatprep.subr.mxu0 0.0
        %621 = vmatpush1.msra.mxu0 0.0
        %622 = vmatprep.subr.mxu0 0.0
        %623 = vmatpush1.msra.mxu0 0.0
        %624 = vmatprep.subr.mxu0 0.0
        %625 = vmatpush1.msra.mxu0 %v479
        %626 = vmatprep.subr.mxu0 0.0
        %627 = vmatpush2.msra.mxu0 0.0
        %628 = vmatprep.subr.mxu0 0.0
        %629 = vmatpush2.msra.mxu0 0.0
        %630 = vmatprep.subr.mxu0 0.0
        %631 = vmatpush2.msra.mxu0 0.0
        %632 = vmatprep.subr.mxu0 0.0
        %633 = vmatpush2.msra.mxu0 0.0
        %634 = vmatprep.subr.mxu0 0.0
        %635 = vmatpush2.msra.mxu0 0.0
        %636 = vmatprep.subr.mxu0 0.0
        %637 = vmatpush2.msra.mxu0 0.0
        %638 = vmatprep.subr.mxu0 0.0
        %639 = vmatpush2.msra.mxu0 0.0
        %640 = vmatprep.subr.mxu0 0.0
        %641 = vmatpush2.msra.mxu0 0.0
        %642 = vmatprep.subr.mxu0 0.0
        %643 = vmatpush2.msra.mxu0 0.0
        %644 = vmatprep.subr.mxu0 0.0
        %645 = vmatpush2.msra.mxu0 0.0
        %646 = vmatprep.subr.mxu0 0.0
        %647 = vmatpush2.msra.mxu0 0.0
        %648 = vmatprep.subr.mxu0 0.0
        %649 = vmatpush2.msra.mxu0 0.0
        %650 = vmatprep.subr.mxu0 0.0
        %651 = vmatpush2.msra.mxu0 0.0
        %652 = vmatprep.subr.mxu0 0.0
        %653 = vmatpush2.msra.mxu0 0.0
        %654 = vmatprep.subr.mxu0 0.0
        %655 = vmatpush2.msra.mxu0 0.0
        %656 = vmatprep.subr.mxu0 0.0
        %657 = vmatpush2.msra.mxu0 0.0
        %658 = vmatprep.mubr.f32.mxu0 0.0
        %659 = vmatmul.mubr.f32.gmra.mxu0 %v448
        %v660 = vpop.f32.mrf.mxu0
        %v661 = vadd.f32 %v442, %v660
        %v662 = vpop.f32.mrf.mxu0
        %663 = vmatprep.mubr.f32.mxu0 0.0
        %664 = vmatmul.mubr.f32.gmra.mxu0 %v451
        %v665 = vpop.f32.mrf.mxu0
        %v666 = vadd.f32 %v442, %v665
        %v667 = vpop.f32.mrf.mxu0
        %668 = vmatprep.mubr.f32.mxu0 0.0
        %669 = vmatmul.mubr.f32.gmra.mxu0 %v454
        %v670 = vpop.f32.mrf.mxu0
        %v671 = vadd.f32 %v442, %v670
        %v672 = vpop.f32.mrf.mxu0
        %673 = vmatprep.mubr.f32.mxu0 0.0
        %674 = vmatmul.mubr.f32.gmra.mxu0 %v457
        %v675 = vpop.f32.mrf.mxu0
        %v676 = vadd.f32 %v442, %v675
        %v677 = vpop.f32.mrf.mxu0
        %678 = vmatprep.mubr.f32.mxu0 0.0
        %679 = vmatmul.mubr.f32.gmra.mxu0 %v460
        %v680 = vpop.f32.mrf.mxu0
        %v681 = vadd.f32 %v442, %v680
        %v682 = vpop.f32.mrf.mxu0
        %683 = vmatprep.mubr.f32.mxu0 0.0
        %684 = vmatmul.mubr.f32.gmra.mxu0 %v463
        %v685 = vpop.f32.mrf.mxu0
        %v686 = vadd.f32 %v442, %v685
        %v687 = vpop.f32.mrf.mxu0
        %688 = vmatprep.mubr.f32.mxu0 0.0
        %689 = vmatmul.mubr.f32.gmra.mxu0 %v466
        %v690 = vpop.f32.mrf.mxu0
        %v691 = vadd.f32 %v442, %v690
        %v692 = vpop.f32.mrf.mxu0
        %693 = vmatprep.mubr.f32.mxu0 0.0
        %694 = vmatmul.mubr.f32.gmra.mxu0 %v469
        %v695 = vpop.f32.mrf.mxu0
        %v696 = vadd.f32 %v442, %v695
        %v697 = vpop.f32.mrf.mxu0
        %698 = vdwg.mxu0
        %699 = vst [vmem:[#allocation3] sm:$0xff] %v548
        %700 = vst [vmem:[#allocation3 + $0x8] sm:$0xff] %v550
        %701 = vst [vmem:[#allocation3 + $0x10] sm:$0xff] %v661
        %702 = vst [vmem:[#allocation3 + $0x18] sm:$0xff] %v554
        %703 = vst [vmem:[#allocation3 + $0x20] sm:$0xff] %v556
        %704 = vst [vmem:[#allocation3 + $0x28] sm:$0xff] %v666
        %705 = vst [vmem:[#allocation3 + $0x30] sm:$0xff] %v560
        %706 = vst [vmem:[#allocation3 + $0x38] sm:$0xff] %v562
        %707 = vst [vmem:[#allocation3 + $0x40] sm:$0xff] %v671
        %708 = vst [vmem:[#allocation3 + $0x48] sm:$0xff] %v566
        %709 = vst [vmem:[#allocation3 + $0x50] sm:$0xff] %v568
        %710 = vst [vmem:[#allocation3 + $0x58] sm:$0xff] %v676
        %711 = vst [vmem:[#allocation3 + $0x60] sm:$0xff] %v572
        %712 = vst [vmem:[#allocation3 + $0x68] sm:$0xff] %v574
        %713 = vst [vmem:[#allocation3 + $0x70] sm:$0xff] %v681
        %714 = vst [vmem:[#allocation3 + $0x78] sm:$0xff] %v578
        %715 = vst [vmem:[#allocation3 + $0x80] sm:$0xff] %v580
        %716 = vst [vmem:[#allocation3 + $0x88] sm:$0xff] %v686
        %717 = vst [vmem:[#allocation3 + $0x90] sm:$0xff] %v584
        %718 = vst [vmem:[#allocation3 + $0x98] sm:$0xff] %v586
        %719 = vst [vmem:[#allocation3 + $0xa0] sm:$0xff] %v691
        %720 = vst [vmem:[#allocation3 + $0xa8] sm:$0xff] %v590
        %721 = vst [vmem:[#allocation3 + $0xb0] sm:$0xff] %v592
        %722 = vst [vmem:[#allocation3 + $0xb8] sm:$0xff] %v696
        %v723 = vld [vmem:[%s2] sm:$0xff]
        %v724 = vld [vmem:[%s2 + $0x8] sm:$0xff]
        %v725 = vld [vmem:[%s2 + $0x10] sm:$0xff]
        %v726 = vld [vmem:[%s2 + $0x18] sm:$0xff]
        %v727 = vld [vmem:[%s2 + $0x20] sm:$0xff]
        %v728 = vld [vmem:[%s2 + $0x28] sm:$0xff]
        %v729 = vld [vmem:[%s2 + $0x30] sm:$0xff]
        %v730 = vld [vmem:[%s2 + $0x38] sm:$0xff]
        %v731 = vld [vmem:[%s2 + $0x40] sm:$0xff]
        %v732 = vld [vmem:[%s2 + $0x48] sm:$0xff]
        %v733 = vld [vmem:[%s2 + $0x50] sm:$0xff]
        %v734 = vld [vmem:[%s2 + $0x58] sm:$0xff]
        %v735 = vld [vmem:[%s2 + $0x60] sm:$0xff]
        %v736 = vld [vmem:[%s2 + $0x68] sm:$0xff]
        %v737 = vld [vmem:[%s2 + $0x70] sm:$0xff]
        %v738 = vld [vmem:[%s2 + $0x78] sm:$0xff]
        %v739 = vld [vmem:[%s2 + $0x80] sm:$0xff]
        %v740 = vld [vmem:[%s2 + $0x88] sm:$0xff]
        %v741 = vld [vmem:[%s2 + $0x90] sm:$0xff]
        %v742 = vld [vmem:[%s2 + $0x98] sm:$0xff]
        %v743 = vld [vmem:[%s2 + $0xa0] sm:$0xff]
        %v744 = vld [vmem:[%s2 + $0xa8] sm:$0xff]
        %v745 = vld [vmem:[%s2 + $0xb0] sm:$0xff]
        %v746 = vld [vmem:[%s2 + $0xb8] sm:$0xff]
        %v747 = vld [vmem:[%s2 + $0xc0] sm:$0xff]
        %v748 = vld [vmem:[%s2 + $0xc8] sm:$0xff]
        %v749 = vld [vmem:[%s2 + $0xd0] sm:$0xff]
        %v750 = vld [vmem:[%s2 + $0xd8] sm:$0xff]
        %v751 = vld [vmem:[%s2 + $0xe0] sm:$0xff]
        %v752 = vld [vmem:[%s2 + $0xe8] sm:$0xff]
        %v753 = vld [vmem:[%s2 + $0xf0] sm:$0xff]
        %v754 = vld [vmem:[%s2 + $0xf8] sm:$0xff]
        %v755 = vld [vmem:[%s2 + $0x100] sm:$0xff]
        %v756 = vld [vmem:[%s2 + $0x108] sm:$0xff]
        %v757 = vld [vmem:[%s2 + $0x110] sm:$0xff]
        %v758 = vld [vmem:[%s2 + $0x118] sm:$0xff]
        %v759 = vld [vmem:[%s2 + $0x120] sm:$0xff]
        %v760 = vld [vmem:[%s2 + $0x128] sm:$0xff]
        %v761 = vld [vmem:[%s2 + $0x130] sm:$0xff]
        %v762 = vld [vmem:[%s2 + $0x138] sm:$0xff]
        %v763 = vld [vmem:[%s2 + $0x140] sm:$0xff]
        %v764 = vld [vmem:[%s2 + $0x148] sm:$0xff]
        %v765 = vld [vmem:[%s2 + $0x150] sm:$0xff]
        %v766 = vld [vmem:[%s2 + $0x158] sm:$0xff]
        %v767 = vld [vmem:[%s2 + $0x160] sm:$0xff]
        %v768 = vld [vmem:[%s2 + $0x168] sm:$0xff]
        %v769 = vld [vmem:[%s2 + $0x170] sm:$0xff]
        %v770 = vld [vmem:[%s2 + $0x178] sm:$0xff]
        %v771 = vld [vmem:[%s4] sm:$0x7]
        %v773 = vlaneseq
        %v774 = vshrl.u32 %v773, 7
        %v775 = vsub.s32 0, %v774
        %v776 = vrot.slane %v771, %v775
        %v777 = vlaneseq
        %v778 = vshrl.u32 %v777, 7
        %v779 = vsub.s32 1, %v778
        %v780 = vrot.slane %v771, %v779
        %v781 = vlaneseq
        %v782 = vshrl.u32 %v781, 7
        %v783 = vsub.s32 2, %v782
        %v784 = vrot.slane %v771, %v783
        %v788 = vld [vmem:[#allocation2] sm:$0xff]
        %v789 = vld [vmem:[#allocation3] sm:$0xff]
        %v790 = vld [vmem:[#allocation3 + $0x8] sm:$0xff]
        %v791 = vld [vmem:[#allocation3 + $0x10] sm:$0xff]
        %792 = vmatprep.subr.mxu0 %v769
        %793 = vmatpush1.msra.mxu0 %v768
        %794 = vmatprep.subr.mxu0 %v766
        %795 = vmatpush1.msra.mxu0 %v765
        %796 = vmatprep.subr.mxu0 %v763
        %797 = vmatpush1.msra.mxu0 %v762
        %798 = vmatprep.subr.mxu0 %v760
        %799 = vmatpush1.msra.mxu0 %v759
        %800 = vmatprep.subr.mxu0 %v757
        %801 = vmatpush1.msra.mxu0 %v756
        %802 = vmatprep.subr.mxu0 %v754
        %803 = vmatpush1.msra.mxu0 %v753
        %804 = vmatprep.subr.mxu0 %v751
        %805 = vmatpush1.msra.mxu0 %v750
        %806 = vmatprep.subr.mxu0 %v748
        %807 = vmatpush1.msra.mxu0 %v747
        %808 = vmatprep.subr.mxu0 %v745
        %809 = vmatpush1.msra.mxu0 %v744
        %810 = vmatprep.subr.mxu0 %v742
        %811 = vmatpush1.msra.mxu0 %v741
        %812 = vmatprep.subr.mxu0 %v739
        %813 = vmatpush1.msra.mxu0 %v738
        %814 = vmatprep.subr.mxu0 %v736
        %815 = vmatpush1.msra.mxu0 %v735
        %816 = vmatprep.subr.mxu0 %v733
        %817 = vmatpush1.msra.mxu0 %v732
        %818 = vmatprep.subr.mxu0 %v730
        %819 = vmatpush1.msra.mxu0 %v729
        %820 = vmatprep.subr.mxu0 %v727
        %821 = vmatpush1.msra.mxu0 %v726
        %822 = vmatprep.subr.mxu0 %v724
        %823 = vmatpush1.msra.mxu0 %v723
        %824 = vmatprep.subr.mxu0 0.0
        %825 = vmatpush2.msra.mxu0 0.0
        %826 = vmatprep.subr.mxu0 0.0
        %827 = vmatpush2.msra.mxu0 0.0
        %828 = vmatprep.subr.mxu0 0.0
        %829 = vmatpush2.msra.mxu0 0.0
        %830 = vmatprep.subr.mxu0 0.0
        %831 = vmatpush2.msra.mxu0 0.0
        %832 = vmatprep.subr.mxu0 0.0
        %833 = vmatpush2.msra.mxu0 0.0
        %834 = vmatprep.subr.mxu0 0.0
        %835 = vmatpush2.msra.mxu0 0.0
        %836 = vmatprep.subr.mxu0 0.0
        %837 = vmatpush2.msra.mxu0 0.0
        %838 = vmatprep.subr.mxu0 0.0
        %839 = vmatpush2.msra.mxu0 0.0
        %840 = vmatprep.subr.mxu0 0.0
        %841 = vmatpush2.msra.mxu0 0.0
        %842 = vmatprep.subr.mxu0 0.0
        %843 = vmatpush2.msra.mxu0 0.0
        %844 = vmatprep.subr.mxu0 0.0
        %845 = vmatpush2.msra.mxu0 0.0
        %846 = vmatprep.subr.mxu0 0.0
        %847 = vmatpush2.msra.mxu0 0.0
        %848 = vmatprep.subr.mxu0 0.0
        %849 = vmatpush2.msra.mxu0 0.0
        %850 = vmatprep.subr.mxu0 0.0
        %851 = vmatpush2.msra.mxu0 0.0
        %852 = vmatprep.subr.mxu0 0.0
        %853 = vmatpush2.msra.mxu0 0.0
        %854 = vmatprep.subr.mxu0 0.0
        %855 = vmatpush2.msra.mxu0 0.0
        %856 = vmatprep.mubr.f32.mxu0 0.0
        %857 = vmatmul.mubr.f32.gmra.mxu0 %v788
        %v858 = vpop.f32.mrf.mxu0
        %v859 = vadd.f32 %v776, %v858
        %v860 = vpop.f32.mrf.mxu0
        %v861 = vadd.f32 %v780, %v860
        %862 = vdwg.mxu0
        %863 = vmatprep.subr.mxu0 0.0
        %864 = vmatpush1.msra.mxu0 %v770
        %865 = vmatprep.subr.mxu0 0.0
        %866 = vmatpush1.msra.mxu0 %v767
        %867 = vmatprep.subr.mxu0 0.0
        %868 = vmatpush1.msra.mxu0 %v764
        %869 = vmatprep.subr.mxu0 0.0
        %870 = vmatpush1.msra.mxu0 %v761
        %871 = vmatprep.subr.mxu0 0.0
        %872 = vmatpush1.msra.mxu0 %v758
        %873 = vmatprep.subr.mxu0 0.0
        %874 = vmatpush1.msra.mxu0 %v755
        %875 = vmatprep.subr.mxu0 0.0
        %876 = vmatpush1.msra.mxu0 %v752
        %877 = vmatprep.subr.mxu0 0.0
        %878 = vmatpush1.msra.mxu0 %v749
        %879 = vmatprep.subr.mxu0 0.0
        %880 = vmatpush1.msra.mxu0 %v746
        %881 = vmatprep.subr.mxu0 0.0
        %882 = vmatpush1.msra.mxu0 %v743
        %883 = vmatprep.subr.mxu0 0.0
        %884 = vmatpush1.msra.mxu0 %v740
        %885 = vmatprep.subr.mxu0 0.0
        %886 = vmatpush1.msra.mxu0 %v737
        %887 = vmatprep.subr.mxu0 0.0
        %888 = vmatpush1.msra.mxu0 %v734
        %889 = vmatprep.subr.mxu0 0.0
        %890 = vmatpush1.msra.mxu0 %v731
        %891 = vmatprep.subr.mxu0 0.0
        %892 = vmatpush1.msra.mxu0 %v728
        %893 = vmatprep.subr.mxu0 0.0
        %894 = vmatpush1.msra.mxu0 %v725
        %895 = vmatprep.subr.mxu0 0.0
        %896 = vmatpush2.msra.mxu0 0.0
        %897 = vmatprep.subr.mxu0 0.0
        %898 = vmatpush2.msra.mxu0 0.0
        %899 = vmatprep.subr.mxu0 0.0
        %900 = vmatpush2.msra.mxu0 0.0
        %901 = vmatprep.subr.mxu0 0.0
        %902 = vmatpush2.msra.mxu0 0.0
        %903 = vmatprep.subr.mxu0 0.0
        %904 = vmatpush2.msra.mxu0 0.0
        %905 = vmatprep.subr.mxu0 0.0
        %906 = vmatpush2.msra.mxu0 0.0
        %907 = vmatprep.subr.mxu0 0.0
        %908 = vmatpush2.msra.mxu0 0.0
        %909 = vmatprep.subr.mxu0 0.0
        %910 = vmatpush2.msra.mxu0 0.0
        %911 = vmatprep.subr.mxu0 0.0
        %912 = vmatpush2.msra.mxu0 0.0
        %913 = vmatprep.subr.mxu0 0.0
        %914 = vmatpush2.msra.mxu0 0.0
        %915 = vmatprep.subr.mxu0 0.0
        %916 = vmatpush2.msra.mxu0 0.0
        %917 = vmatprep.subr.mxu0 0.0
        %918 = vmatpush2.msra.mxu0 0.0
        %919 = vmatprep.subr.mxu0 0.0
        %920 = vmatpush2.msra.mxu0 0.0
        %921 = vmatprep.subr.mxu0 0.0
        %922 = vmatpush2.msra.mxu0 0.0
        %923 = vmatprep.subr.mxu0 0.0
        %924 = vmatpush2.msra.mxu0 0.0
        %925 = vmatprep.subr.mxu0 0.0
        %926 = vmatpush2.msra.mxu0 0.0
        %927 = vmatprep.mubr.f32.mxu0 0.0
        %928 = vmatmul.mubr.f32.gmra.mxu0 %v788
        %v929 = vpop.f32.mrf.mxu0
        %v930 = vadd.f32 %v784, %v929
        %v931 = vpop.f32.mrf.mxu0
        %932 = vdwg.mxu0
        %v933 = vadd.f32 %v789, %v859
        %v934 = vxor.u32 %v933, 2147483648
        %v935 = vmul.f32 %v934, 1.442695
        %v936 = vpow.pop %v935
        %v937 = vadd.f32 %v936, 1.0
        %v938 = vrcp.pop %v937
        %v939 = vmul.f32 1.0, %v938
        %v940 = vadd.f32 %v790, %v861
        %v941 = vxor.u32 %v940, 2147483648
        %v942 = vmul.f32 %v941, 1.442695
        %v943 = vpow.pop %v942
        %v944 = vadd.f32 %v943, 1.0
        %v945 = vrcp.pop %v944
        %v946 = vmul.f32 1.0, %v945
        %v947 = vmul.f32 %v939, %v930
        %v948 = vadd.f32 %v791, %v947
        %v949 = vtanh.pop %v948
        %v950 = vsub.f32 1.0, %v946
        %v951 = vmul.f32 %v950, %v949
        %v952 = vmul.f32 %v946, %v788
        %v953 = vadd.f32 %v951, %v952
        %954 = vst [vmem:[#allocation4] sm:$0xff] %v953
        %s955 = scalar_lea.vmem [#allocation3], 24
        %v956 = vld [vmem:[%s955] sm:$0xff]
        %v957 = vld [vmem:[%s955 + $0x8] sm:$0xff]
        %v958 = vld [vmem:[%s955 + $0x10] sm:$0xff]
        %959 = vmatprep.subr.mxu0 %v769
        %960 = vmatpush1.msra.mxu0 %v768
        %961 = vmatprep.subr.mxu0 %v766
        %962 = vmatpush1.msra.mxu0 %v765
        %963 = vmatprep.subr.mxu0 %v763
        %964 = vmatpush1.msra.mxu0 %v762
        %965 = vmatprep.subr.mxu0 %v760
        %966 = vmatpush1.msra.mxu0 %v759
        %967 = vmatprep.subr.mxu0 %v757
        %968 = vmatpush1.msra.mxu0 %v756
        %969 = vmatprep.subr.mxu0 %v754
        %970 = vmatpush1.msra.mxu0 %v753
        %971 = vmatprep.subr.mxu0 %v751
        %972 = vmatpush1.msra.mxu0 %v750
        %973 = vmatprep.subr.mxu0 %v748
        %974 = vmatpush1.msra.mxu0 %v747
        %975 = vmatprep.subr.mxu0 %v745
        %976 = vmatpush1.msra.mxu0 %v744
        %977 = vmatprep.subr.mxu0 %v742
        %978 = vmatpush1.msra.mxu0 %v741
        %979 = vmatprep.subr.mxu0 %v739
        %980 = vmatpush1.msra.mxu0 %v738
        %981 = vmatprep.subr.mxu0 %v736
        %982 = vmatpush1.msra.mxu0 %v735
        %983 = vmatprep.subr.mxu0 %v733
        %984 = vmatpush1.msra.mxu0 %v732
        %985 = vmatprep.subr.mxu0 %v730
        %986 = vmatpush1.msra.mxu0 %v729
        %987 = vmatprep.subr.mxu0 %v727
        %988 = vmatpush1.msra.mxu0 %v726
        %989 = vmatprep.subr.mxu0 %v724
        %990 = vmatpush1.msra.mxu0 %v723
        %991 = vmatprep.subr.mxu0 0.0
        %992 = vmatpush2.msra.mxu0 0.0
        %993 = vmatprep.subr.mxu0 0.0
        %994 = vmatpush2.msra.mxu0 0.0
        %995 = vmatprep.subr.mxu0 0.0
        %996 = vmatpush2.msra.mxu0 0.0
        %997 = vmatprep.subr.mxu0 0.0
        %998 = vmatpush2.msra.mxu0 0.0
        %999 = vmatprep.subr.mxu0 0.0
        %1000 = vmatpush2.msra.mxu0 0.0
        %1001 = vmatprep.subr.mxu0 0.0
        %1002 = vmatpush2.msra.mxu0 0.0
        %1003 = vmatprep.subr.mxu0 0.0
        %1004 = vmatpush2.msra.mxu0 0.0
        %1005 = vmatprep.subr.mxu0 0.0
        %1006 = vmatpush2.msra.mxu0 0.0
        %1007 = vmatprep.subr.mxu0 0.0
        %1008 = vmatpush2.msra.mxu0 0.0
        %1009 = vmatprep.subr.mxu0 0.0
        %1010 = vmatpush2.msra.mxu0 0.0
        %1011 = vmatprep.subr.mxu0 0.0
        %1012 = vmatpush2.msra.mxu0 0.0
        %1013 = vmatprep.subr.mxu0 0.0
        %1014 = vmatpush2.msra.mxu0 0.0
        %1015 = vmatprep.subr.mxu0 0.0
        %1016 = vmatpush2.msra.mxu0 0.0
        %1017 = vmatprep.subr.mxu0 0.0
        %1018 = vmatpush2.msra.mxu0 0.0
        %1019 = vmatprep.subr.mxu0 0.0
        %1020 = vmatpush2.msra.mxu0 0.0
        %1021 = vmatprep.subr.mxu0 0.0
        %1022 = vmatpush2.msra.mxu0 0.0
        %1023 = vmatprep.mubr.f32.mxu0 0.0
        %1024 = vmatmul.mubr.f32.gmra.mxu0 %v953
        %v1025 = vpop.f32.mrf.mxu0
        %v1026 = vadd.f32 %v776, %v1025
        %v1027 = vpop.f32.mrf.mxu0
        %v1028 = vadd.f32 %v780, %v1027
        %1029 = vdwg.mxu0
        %1030 = vmatprep.subr.mxu0 0.0
        %1031 = vmatpush1.msra.mxu0 %v770
        %1032 = vmatprep.subr.mxu0 0.0
        %1033 = vmatpush1.msra.mxu0 %v767
        %1034 = vmatprep.subr.mxu0 0.0
        %1035 = vmatpush1.msra.mxu0 %v764
        %1036 = vmatprep.subr.mxu0 0.0
        %1037 = vmatpush1.msra.mxu0 %v761
        %1038 = vmatprep.subr.mxu0 0.0
        %1039 = vmatpush1.msra.mxu0 %v758
        %1040 = vmatprep.subr.mxu0 0.0
        %1041 = vmatpush1.msra.mxu0 %v755
        %1042 = vmatprep.subr.mxu0 0.0
        %1043 = vmatpush1.msra.mxu0 %v752
        %1044 = vmatprep.subr.mxu0 0.0
        %1045 = vmatpush1.msra.mxu0 %v749
        %1046 = vmatprep.subr.mxu0 0.0
        %1047 = vmatpush1.msra.mxu0 %v746
        %1048 = vmatprep.subr.mxu0 0.0
        %1049 = vmatpush1.msra.mxu0 %v743
        %1050 = vmatprep.subr.mxu0 0.0
        %1051 = vmatpush1.msra.mxu0 %v740
        %1052 = vmatprep.subr.mxu0 0.0
        %1053 = vmatpush1.msra.mxu0 %v737
        %1054 = vmatprep.subr.mxu0 0.0
        %1055 = vmatpush1.msra.mxu0 %v734
        %1056 = vmatprep.subr.mxu0 0.0
        %1057 = vmatpush1.msra.mxu0 %v731
        %1058 = vmatprep.subr.mxu0 0.0
        %1059 = vmatpush1.msra.mxu0 %v728
        %1060 = vmatprep.subr.mxu0 0.0
        %1061 = vmatpush1.msra.mxu0 %v725
        %1062 = vmatprep.subr.mxu0 0.0
        %1063 = vmatpush2.msra.mxu0 0.0
        %1064 = vmatprep.subr.mxu0 0.0
        %1065 = vmatpush2.msra.mxu0 0.0
        %1066 = vmatprep.subr.mxu0 0.0
        %1067 = vmatpush2.msra.mxu0 0.0
        %1068 = vmatprep.subr.mxu0 0.0
        %1069 = vmatpush2.msra.mxu0 0.0
        %1070 = vmatprep.subr.mxu0 0.0
        %1071 = vmatpush2.msra.mxu0 0.0
        %1072 = vmatprep.subr.mxu0 0.0
        %1073 = vmatpush2.msra.mxu0 0.0
        %1074 = vmatprep.subr.mxu0 0.0
        %1075 = vmatpush2.msra.mxu0 0.0
        %1076 = vmatprep.subr.mxu0 0.0
        %1077 = vmatpush2.msra.mxu0 0.0
        %1078 = vmatprep.subr.mxu0 0.0
        %1079 = vmatpush2.msra.mxu0 0.0
        %1080 = vmatprep.subr.mxu0 0.0
        %1081 = vmatpush2.msra.mxu0 0.0
        %1082 = vmatprep.subr.mxu0 0.0
        %1083 = vmatpush2.msra.mxu0 0.0
        %1084 = vmatprep.subr.mxu0 0.0
        %1085 = vmatpush2.msra.mxu0 0.0
        %1086 = vmatprep.subr.mxu0 0.0
        %1087 = vmatpush2.msra.mxu0 0.0
        %1088 = vmatprep.subr.mxu0 0.0
        %1089 = vmatpush2.msra.mxu0 0.0
        %1090 = vmatprep.subr.mxu0 0.0
        %1091 = vmatpush2.msra.mxu0 0.0
        %1092 = vmatprep.subr.mxu0 0.0
        %1093 = vmatpush2.msra.mxu0 0.0
        %1094 = vmatprep.mubr.f32.mxu0 0.0
        %1095 = vmatmul.mubr.f32.gmra.mxu0 %v953
        %v1096 = vpop.f32.mrf.mxu0
        %v1097 = vadd.f32 %v784, %v1096
        %v1098 = vpop.f32.mrf.mxu0
        %1099 = vdwg.mxu0
        %v1100 = vadd.f32 %v956, %v1026
        %v1101 = vxor.u32 %v1100, 2147483648
        %v1102 = vmul.f32 %v1101, 1.442695
        %v1103 = vpow.pop %v1102
        %v1104 = vadd.f32 %v1103, 1.0
        %v1105 = vrcp.pop %v1104
        %v1106 = vmul.f32 1.0, %v1105
        %v1107 = vadd.f32 %v957, %v1028
        %v1108 = vxor.u32 %v1107, 2147483648
        %v1109 = vmul.f32 %v1108, 1.442695
        %v1110 = vpow.pop %v1109
        %v1111 = vadd.f32 %v1110, 1.0
        %v1112 = vrcp.pop %v1111
        %v1113 = vmul.f32 1.0, %v1112
        %v1114 = vmul.f32 %v1106, %v1097
        %v1115 = vadd.f32 %v958, %v1114
        %v1116 = vtanh.pop %v1115
        %v1117 = vsub.f32 1.0, %v1113
        %v1118 = vmul.f32 %v1117, %v1116
        %v1119 = vmul.f32 %v1113, %v953
        %v1120 = vadd.f32 %v1118, %v1119
        %s1121 = scalar_lea.vmem [#allocation4], 8
        %1122 = vst [vmem:[%s1121] sm:$0xff] %v1120
        %s1123 = scalar_lea.vmem [#allocation3], 48
        %v1124 = vld [vmem:[%s1123] sm:$0xff]
        %v1125 = vld [vmem:[%s1123 + $0x8] sm:$0xff]
        %v1126 = vld [vmem:[%s1123 + $0x10] sm:$0xff]
        %1127 = vmatprep.subr.mxu0 %v769
        %1128 = vmatpush1.msra.mxu0 %v768
        %1129 = vmatprep.subr.mxu0 %v766
        %1130 = vmatpush1.msra.mxu0 %v765
        %1131 = vmatprep.subr.mxu0 %v763
        %1132 = vmatpush1.msra.mxu0 %v762
        %1133 = vmatprep.subr.mxu0 %v760
        %1134 = vmatpush1.msra.mxu0 %v759
        %1135 = vmatprep.subr.mxu0 %v757
        %1136 = vmatpush1.msra.mxu0 %v756
        %1137 = vmatprep.subr.mxu0 %v754
        %1138 = vmatpush1.msra.mxu0 %v753
        %1139 = vmatprep.subr.mxu0 %v751
        %1140 = vmatpush1.msra.mxu0 %v750
        %1141 = vmatprep.subr.mxu0 %v748
        %1142 = vmatpush1.msra.mxu0 %v747
        %1143 = vmatprep.subr.mxu0 %v745
        %1144 = vmatpush1.msra.mxu0 %v744
        %1145 = vmatprep.subr.mxu0 %v742
        %1146 = vmatpush1.msra.mxu0 %v741
        %1147 = vmatprep.subr.mxu0 %v739
        %1148 = vmatpush1.msra.mxu0 %v738
        %1149 = vmatprep.subr.mxu0 %v736
        %1150 = vmatpush1.msra.mxu0 %v735
        %1151 = vmatprep.subr.mxu0 %v733
        %1152 = vmatpush1.msra.mxu0 %v732
        %1153 = vmatprep.subr.mxu0 %v730
        %1154 = vmatpush1.msra.mxu0 %v729
        %1155 = vmatprep.subr.mxu0 %v727
        %1156 = vmatpush1.msra.mxu0 %v726
        %1157 = vmatprep.subr.mxu0 %v724
        %1158 = vmatpush1.msra.mxu0 %v723
        %1159 = vmatprep.subr.mxu0 0.0
        %1160 = vmatpush2.msra.mxu0 0.0
        %1161 = vmatprep.subr.mxu0 0.0
        %1162 = vmatpush2.msra.mxu0 0.0
        %1163 = vmatprep.subr.mxu0 0.0
        %1164 = vmatpush2.msra.mxu0 0.0
        %1165 = vmatprep.subr.mxu0 0.0
        %1166 = vmatpush2.msra.mxu0 0.0
        %1167 = vmatprep.subr.mxu0 0.0
        %1168 = vmatpush2.msra.mxu0 0.0
        %1169 = vmatprep.subr.mxu0 0.0
        %1170 = vmatpush2.msra.mxu0 0.0
        %1171 = vmatprep.subr.mxu0 0.0
        %1172 = vmatpush2.msra.mxu0 0.0
        %1173 = vmatprep.subr.mxu0 0.0
        %1174 = vmatpush2.msra.mxu0 0.0
        %1175 = vmatprep.subr.mxu0 0.0
        %1176 = vmatpush2.msra.mxu0 0.0
        %1177 = vmatprep.subr.mxu0 0.0
        %1178 = vmatpush2.msra.mxu0 0.0
        %1179 = vmatprep.subr.mxu0 0.0
        %1180 = vmatpush2.msra.mxu0 0.0
        %1181 = vmatprep.subr.mxu0 0.0
        %1182 = vmatpush2.msra.mxu0 0.0
        %1183 = vmatprep.subr.mxu0 0.0
        %1184 = vmatpush2.msra.mxu0 0.0
        %1185 = vmatprep.subr.mxu0 0.0
        %1186 = vmatpush2.msra.mxu0 0.0
        %1187 = vmatprep.subr.mxu0 0.0
        %1188 = vmatpush2.msra.mxu0 0.0
        %1189 = vmatprep.subr.mxu0 0.0
        %1190 = vmatpush2.msra.mxu0 0.0
        %1191 = vmatprep.mubr.f32.mxu0 0.0
        %1192 = vmatmul.mubr.f32.gmra.mxu0 %v1120
        %v1193 = vpop.f32.mrf.mxu0
        %v1194 = vadd.f32 %v776, %v1193
        %v1195 = vpop.f32.mrf.mxu0
        %v1196 = vadd.f32 %v780, %v1195
        %1197 = vdwg.mxu0
        %1198 = vmatprep.subr.mxu0 0.0
        %1199 = vmatpush1.msra.mxu0 %v770
        %1200 = vmatprep.subr.mxu0 0.0
        %1201 = vmatpush1.msra.mxu0 %v767
        %1202 = vmatprep.subr.mxu0 0.0
        %1203 = vmatpush1.msra.mxu0 %v764
        %1204 = vmatprep.subr.mxu0 0.0
        %1205 = vmatpush1.msra.mxu0 %v761
        %1206 = vmatprep.subr.mxu0 0.0
        %1207 = vmatpush1.msra.mxu0 %v758
        %1208 = vmatprep.subr.mxu0 0.0
        %1209 = vmatpush1.msra.mxu0 %v755
        %1210 = vmatprep.subr.mxu0 0.0
        %1211 = vmatpush1.msra.mxu0 %v752
        %1212 = vmatprep.subr.mxu0 0.0
        %1213 = vmatpush1.msra.mxu0 %v749
        %1214 = vmatprep.subr.mxu0 0.0
        %1215 = vmatpush1.msra.mxu0 %v746
        %1216 = vmatprep.subr.mxu0 0.0
        %1217 = vmatpush1.msra.mxu0 %v743
        %1218 = vmatprep.subr.mxu0 0.0
        %1219 = vmatpush1.msra.mxu0 %v740
        %1220 = vmatprep.subr.mxu0 0.0
        %1221 = vmatpush1.msra.mxu0 %v737
        %1222 = vmatprep.subr.mxu0 0.0
        %1223 = vmatpush1.msra.mxu0 %v734
        %1224 = vmatprep.subr.mxu0 0.0
        %1225 = vmatpush1.msra.mxu0 %v731
        %1226 = vmatprep.subr.mxu0 0.0
        %1227 = vmatpush1.msra.mxu0 %v728
        %1228 = vmatprep.subr.mxu0 0.0
        %1229 = vmatpush1.msra.mxu0 %v725
        %1230 = vmatprep.subr.mxu0 0.0
        %1231 = vmatpush2.msra.mxu0 0.0
        %1232 = vmatprep.subr.mxu0 0.0
        %1233 = vmatpush2.msra.mxu0 0.0
        %1234 = vmatprep.subr.mxu0 0.0
        %1235 = vmatpush2.msra.mxu0 0.0
        %1236 = vmatprep.subr.mxu0 0.0
        %1237 = vmatpush2.msra.mxu0 0.0
        %1238 = vmatprep.subr.mxu0 0.0
        %1239 = vmatpush2.msra.mxu0 0.0
        %1240 = vmatprep.subr.mxu0 0.0
        %1241 = vmatpush2.msra.mxu0 0.0
        %1242 = vmatprep.subr.mxu0 0.0
        %1243 = vmatpush2.msra.mxu0 0.0
        %1244 = vmatprep.subr.mxu0 0.0
        %1245 = vmatpush2.msra.mxu0 0.0
        %1246 = vmatprep.subr.mxu0 0.0
        %1247 = vmatpush2.msra.mxu0 0.0
        %1248 = vmatprep.subr.mxu0 0.0
        %1249 = vmatpush2.msra.mxu0 0.0
        %1250 = vmatprep.subr.mxu0 0.0
        %1251 = vmatpush2.msra.mxu0 0.0
        %1252 = vmatprep.subr.mxu0 0.0
        %1253 = vmatpush2.msra.mxu0 0.0
        %1254 = vmatprep.subr.mxu0 0.0
        %1255 = vmatpush2.msra.mxu0 0.0
        %1256 = vmatprep.subr.mxu0 0.0
        %1257 = vmatpush2.msra.mxu0 0.0
        %1258 = vmatprep.subr.mxu0 0.0
        %1259 = vmatpush2.msra.mxu0 0.0
        %1260 = vmatprep.subr.mxu0 0.0
        %1261 = vmatpush2.msra.mxu0 0.0
        %1262 = vmatprep.mubr.f32.mxu0 0.0
        %1263 = vmatmul.mubr.f32.gmra.mxu0 %v1120
        %v1264 = vpop.f32.mrf.mxu0
        %v1265 = vadd.f32 %v784, %v1264
        %v1266 = vpop.f32.mrf.mxu0
        %1267 = vdwg.mxu0
        %v1268 = vadd.f32 %v1124, %v1194
        %v1269 = vxor.u32 %v1268, 2147483648
        %v1270 = vmul.f32 %v1269, 1.442695
        %v1271 = vpow.pop %v1270
        %v1272 = vadd.f32 %v1271, 1.0
        %v1273 = vrcp.pop %v1272
        %v1274 = vmul.f32 1.0, %v1273
        %v1275 = vadd.f32 %v1125, %v1196
        %v1276 = vxor.u32 %v1275, 2147483648
        %v1277 = vmul.f32 %v1276, 1.442695
        %v1278 = vpow.pop %v1277
        %v1279 = vadd.f32 %v1278, 1.0
        %v1280 = vrcp.pop %v1279
        %v1281 = vmul.f32 1.0, %v1280
        %v1282 = vmul.f32 %v1274, %v1265
        %v1283 = vadd.f32 %v1126, %v1282
        %v1284 = vtanh.pop %v1283
        %v1285 = vsub.f32 1.0, %v1281
        %v1286 = vmul.f32 %v1285, %v1284
        %v1287 = vmul.f32 %v1281, %v1120
        %v1288 = vadd.f32 %v1286, %v1287
        %s1289 = scalar_lea.vmem [#allocation4], 16
        %1290 = vst [vmem:[%s1289] sm:$0xff] %v1288
        %s1291 = scalar_lea.vmem [#allocation3], 72
        %v1292 = vld [vmem:[%s1291] sm:$0xff]
        %v1293 = vld [vmem:[%s1291 + $0x8] sm:$0xff]
        %v1294 = vld [vmem:[%s1291 + $0x10] sm:$0xff]
        %1295 = vmatprep.subr.mxu0 %v769
        %1296 = vmatpush1.msra.mxu0 %v768
        %1297 = vmatprep.subr.mxu0 %v766
        %1298 = vmatpush1.msra.mxu0 %v765
        %1299 = vmatprep.subr.mxu0 %v763
        %1300 = vmatpush1.msra.mxu0 %v762
        %1301 = vmatprep.subr.mxu0 %v760
        %1302 = vmatpush1.msra.mxu0 %v759
        %1303 = vmatprep.subr.mxu0 %v757
        %1304 = vmatpush1.msra.mxu0 %v756
        %1305 = vmatprep.subr.mxu0 %v754
        %1306 = vmatpush1.msra.mxu0 %v753
        %1307 = vmatprep.subr.mxu0 %v751
        %1308 = vmatpush1.msra.mxu0 %v750
        %1309 = vmatprep.subr.mxu0 %v748
        %1310 = vmatpush1.msra.mxu0 %v747
        %1311 = vmatprep.subr.mxu0 %v745
        %1312 = vmatpush1.msra.mxu0 %v744
        %1313 = vmatprep.subr.mxu0 %v742
        %1314 = vmatpush1.msra.mxu0 %v741
        %1315 = vmatprep.subr.mxu0 %v739
        %1316 = vmatpush1.msra.mxu0 %v738
        %1317 = vmatprep.subr.mxu0 %v736
        %1318 = vmatpush1.msra.mxu0 %v735
        %1319 = vmatprep.subr.mxu0 %v733
        %1320 = vmatpush1.msra.mxu0 %v732
        %1321 = vmatprep.subr.mxu0 %v730
        %1322 = vmatpush1.msra.mxu0 %v729
        %1323 = vmatprep.subr.mxu0 %v727
        %1324 = vmatpush1.msra.mxu0 %v726
        %1325 = vmatprep.subr.mxu0 %v724
        %1326 = vmatpush1.msra.mxu0 %v723
        %1327 = vmatprep.subr.mxu0 0.0
        %1328 = vmatpush2.msra.mxu0 0.0
        %1329 = vmatprep.subr.mxu0 0.0
        %1330 = vmatpush2.msra.mxu0 0.0
        %1331 = vmatprep.subr.mxu0 0.0
        %1332 = vmatpush2.msra.mxu0 0.0
        %1333 = vmatprep.subr.mxu0 0.0
        %1334 = vmatpush2.msra.mxu0 0.0
        %1335 = vmatprep.subr.mxu0 0.0
        %1336 = vmatpush2.msra.mxu0 0.0
        %1337 = vmatprep.subr.mxu0 0.0
        %1338 = vmatpush2.msra.mxu0 0.0
        %1339 = vmatprep.subr.mxu0 0.0
        %1340 = vmatpush2.msra.mxu0 0.0
        %1341 = vmatprep.subr.mxu0 0.0
        %1342 = vmatpush2.msra.mxu0 0.0
        %1343 = vmatprep.subr.mxu0 0.0
        %1344 = vmatpush2.msra.mxu0 0.0
        %1345 = vmatprep.subr.mxu0 0.0
        %1346 = vmatpush2.msra.mxu0 0.0
        %1347 = vmatprep.subr.mxu0 0.0
        %1348 = vmatpush2.msra.mxu0 0.0
        %1349 = vmatprep.subr.mxu0 0.0
        %1350 = vmatpush2.msra.mxu0 0.0
        %1351 = vmatprep.subr.mxu0 0.0
        %1352 = vmatpush2.msra.mxu0 0.0
        %1353 = vmatprep.subr.mxu0 0.0
        %1354 = vmatpush2.msra.mxu0 0.0
        %1355 = vmatprep.subr.mxu0 0.0
        %1356 = vmatpush2.msra.mxu0 0.0
        %1357 = vmatprep.subr.mxu0 0.0
        %1358 = vmatpush2.msra.mxu0 0.0
        %1359 = vmatprep.mubr.f32.mxu0 0.0
        %1360 = vmatmul.mubr.f32.gmra.mxu0 %v1288
        %v1361 = vpop.f32.mrf.mxu0
        %v1362 = vadd.f32 %v776, %v1361
        %v1363 = vpop.f32.mrf.mxu0
        %v1364 = vadd.f32 %v780, %v1363
        %1365 = vdwg.mxu0
        %1366 = vmatprep.subr.mxu0 0.0
        %1367 = vmatpush1.msra.mxu0 %v770
        %1368 = vmatprep.subr.mxu0 0.0
        %1369 = vmatpush1.msra.mxu0 %v767
        %1370 = vmatprep.subr.mxu0 0.0
        %1371 = vmatpush1.msra.mxu0 %v764
        %1372 = vmatprep.subr.mxu0 0.0
        %1373 = vmatpush1.msra.mxu0 %v761
        %1374 = vmatprep.subr.mxu0 0.0
        %1375 = vmatpush1.msra.mxu0 %v758
        %1376 = vmatprep.subr.mxu0 0.0
        %1377 = vmatpush1.msra.mxu0 %v755
        %1378 = vmatprep.subr.mxu0 0.0
        %1379 = vmatpush1.msra.mxu0 %v752
        %1380 = vmatprep.subr.mxu0 0.0
        %1381 = vmatpush1.msra.mxu0 %v749
        %1382 = vmatprep.subr.mxu0 0.0
        %1383 = vmatpush1.msra.mxu0 %v746
        %1384 = vmatprep.subr.mxu0 0.0
        %1385 = vmatpush1.msra.mxu0 %v743
        %1386 = vmatprep.subr.mxu0 0.0
        %1387 = vmatpush1.msra.mxu0 %v740
        %1388 = vmatprep.subr.mxu0 0.0
        %1389 = vmatpush1.msra.mxu0 %v737
        %1390 = vmatprep.subr.mxu0 0.0
        %1391 = vmatpush1.msra.mxu0 %v734
        %1392 = vmatprep.subr.mxu0 0.0
        %1393 = vmatpush1.msra.mxu0 %v731
        %1394 = vmatprep.subr.mxu0 0.0
        %1395 = vmatpush1.msra.mxu0 %v728
        %1396 = vmatprep.subr.mxu0 0.0
        %1397 = vmatpush1.msra.mxu0 %v725
        %1398 = vmatprep.subr.mxu0 0.0
        %1399 = vmatpush2.msra.mxu0 0.0
        %1400 = vmatprep.subr.mxu0 0.0
        %1401 = vmatpush2.msra.mxu0 0.0
        %1402 = vmatprep.subr.mxu0 0.0
        %1403 = vmatpush2.msra.mxu0 0.0
        %1404 = vmatprep.subr.mxu0 0.0
        %1405 = vmatpush2.msra.mxu0 0.0
        %1406 = vmatprep.subr.mxu0 0.0
        %1407 = vmatpush2.msra.mxu0 0.0
        %1408 = vmatprep.subr.mxu0 0.0
        %1409 = vmatpush2.msra.mxu0 0.0
        %1410 = vmatprep.subr.mxu0 0.0
        %1411 = vmatpush2.msra.mxu0 0.0
        %1412 = vmatprep.subr.mxu0 0.0
        %1413 = vmatpush2.msra.mxu0 0.0
        %1414 = vmatprep.subr.mxu0 0.0
        %1415 = vmatpush2.msra.mxu0 0.0
        %1416 = vmatprep.subr.mxu0 0.0
        %1417 = vmatpush2.msra.mxu0 0.0
        %1418 = vmatprep.subr.mxu0 0.0
        %1419 = vmatpush2.msra.mxu0 0.0
        %1420 = vmatprep.subr.mxu0 0.0
        %1421 = vmatpush2.msra.mxu0 0.0
        %1422 = vmatprep.subr.mxu0 0.0
        %1423 = vmatpush2.msra.mxu0 0.0
        %1424 = vmatprep.subr.mxu0 0.0
        %1425 = vmatpush2.msra.mxu0 0.0
        %1426 = vmatprep.subr.mxu0 0.0
        %1427 = vmatpush2.msra.mxu0 0.0
        %1428 = vmatprep.subr.mxu0 0.0
        %1429 = vmatpush2.msra.mxu0 0.0
        %1430 = vmatprep.mubr.f32.mxu0 0.0
        %1431 = vmatmul.mubr.f32.gmra.mxu0 %v1288
        %v1432 = vpop.f32.mrf.mxu0
        %v1433 = vadd.f32 %v784, %v1432
        %v1434 = vpop.f32.mrf.mxu0
        %1435 = vdwg.mxu0
        %v1436 = vadd.f32 %v1292, %v1362
        %v1437 = vxor.u32 %v1436, 2147483648
        %v1438 = vmul.f32 %v1437, 1.442695
        %v1439 = vpow.pop %v1438
        %v1440 = vadd.f32 %v1439, 1.0
        %v1441 = vrcp.pop %v1440
        %v1442 = vmul.f32 1.0, %v1441
        %v1443 = vadd.f32 %v1293, %v1364
        %v1444 = vxor.u32 %v1443, 2147483648
        %v1445 = vmul.f32 %v1444, 1.442695
        %v1446 = vpow.pop %v1445
        %v1447 = vadd.f32 %v1446, 1.0
        %v1448 = vrcp.pop %v1447
        %v1449 = vmul.f32 1.0, %v1448
        %v1450 = vmul.f32 %v1442, %v1433
        %v1451 = vadd.f32 %v1294, %v1450
        %v1452 = vtanh.pop %v1451
        %v1453 = vsub.f32 1.0, %v1449
        %v1454 = vmul.f32 %v1453, %v1452
        %v1455 = vmul.f32 %v1449, %v1288
        %v1456 = vadd.f32 %v1454, %v1455
        %s1457 = scalar_lea.vmem [#allocation4], 24
        %1458 = vst [vmem:[%s1457] sm:$0xff] %v1456
        %s1459 = scalar_lea.vmem [#allocation3], 96
        %v1460 = vld [vmem:[%s1459] sm:$0xff]
        %v1461 = vld [vmem:[%s1459 + $0x8] sm:$0xff]
        %v1462 = vld [vmem:[%s1459 + $0x10] sm:$0xff]
        %1463 = vmatprep.subr.mxu0 %v769
        %1464 = vmatpush1.msra.mxu0 %v768
        %1465 = vmatprep.subr.mxu0 %v766
        %1466 = vmatpush1.msra.mxu0 %v765
        %1467 = vmatprep.subr.mxu0 %v763
        %1468 = vmatpush1.msra.mxu0 %v762
        %1469 = vmatprep.subr.mxu0 %v760
        %1470 = vmatpush1.msra.mxu0 %v759
        %1471 = vmatprep.subr.mxu0 %v757
        %1472 = vmatpush1.msra.mxu0 %v756
        %1473 = vmatprep.subr.mxu0 %v754
        %1474 = vmatpush1.msra.mxu0 %v753
        %1475 = vmatprep.subr.mxu0 %v751
        %1476 = vmatpush1.msra.mxu0 %v750
        %1477 = vmatprep.subr.mxu0 %v748
        %1478 = vmatpush1.msra.mxu0 %v747
        %1479 = vmatprep.subr.mxu0 %v745
        %1480 = vmatpush1.msra.mxu0 %v744
        %1481 = vmatprep.subr.mxu0 %v742
        %1482 = vmatpush1.msra.mxu0 %v741
        %1483 = vmatprep.subr.mxu0 %v739
        %1484 = vmatpush1.msra.mxu0 %v738
        %1485 = vmatprep.subr.mxu0 %v736
        %1486 = vmatpush1.msra.mxu0 %v735
        %1487 = vmatprep.subr.mxu0 %v733
        %1488 = vmatpush1.msra.mxu0 %v732
        %1489 = vmatprep.subr.mxu0 %v730
        %1490 = vmatpush1.msra.mxu0 %v729
        %1491 = vmatprep.subr.mxu0 %v727
        %1492 = vmatpush1.msra.mxu0 %v726
        %1493 = vmatprep.subr.mxu0 %v724
        %1494 = vmatpush1.msra.mxu0 %v723
        %1495 = vmatprep.subr.mxu0 0.0
        %1496 = vmatpush2.msra.mxu0 0.0
        %1497 = vmatprep.subr.mxu0 0.0
        %1498 = vmatpush2.msra.mxu0 0.0
        %1499 = vmatprep.subr.mxu0 0.0
        %1500 = vmatpush2.msra.mxu0 0.0
        %1501 = vmatprep.subr.mxu0 0.0
        %1502 = vmatpush2.msra.mxu0 0.0
        %1503 = vmatprep.subr.mxu0 0.0
        %1504 = vmatpush2.msra.mxu0 0.0
        %1505 = vmatprep.subr.mxu0 0.0
        %1506 = vmatpush2.msra.mxu0 0.0
        %1507 = vmatprep.subr.mxu0 0.0
        %1508 = vmatpush2.msra.mxu0 0.0
        %1509 = vmatprep.subr.mxu0 0.0
        %1510 = vmatpush2.msra.mxu0 0.0
        %1511 = vmatprep.subr.mxu0 0.0
        %1512 = vmatpush2.msra.mxu0 0.0
        %1513 = vmatprep.subr.mxu0 0.0
        %1514 = vmatpush2.msra.mxu0 0.0
        %1515 = vmatprep.subr.mxu0 0.0
        %1516 = vmatpush2.msra.mxu0 0.0
        %1517 = vmatprep.subr.mxu0 0.0
        %1518 = vmatpush2.msra.mxu0 0.0
        %1519 = vmatprep.subr.mxu0 0.0
        %1520 = vmatpush2.msra.mxu0 0.0
        %1521 = vmatprep.subr.mxu0 0.0
        %1522 = vmatpush2.msra.mxu0 0.0
        %1523 = vmatprep.subr.mxu0 0.0
        %1524 = vmatpush2.msra.mxu0 0.0
        %1525 = vmatprep.subr.mxu0 0.0
        %1526 = vmatpush2.msra.mxu0 0.0
        %1527 = vmatprep.mubr.f32.mxu0 0.0
        %1528 = vmatmul.mubr.f32.gmra.mxu0 %v1456
        %v1529 = vpop.f32.mrf.mxu0
        %v1530 = vadd.f32 %v776, %v1529
        %v1531 = vpop.f32.mrf.mxu0
        %v1532 = vadd.f32 %v780, %v1531
        %1533 = vdwg.mxu0
        %1534 = vmatprep.subr.mxu0 0.0
        %1535 = vmatpush1.msra.mxu0 %v770
        %1536 = vmatprep.subr.mxu0 0.0
        %1537 = vmatpush1.msra.mxu0 %v767
        %1538 = vmatprep.subr.mxu0 0.0
        %1539 = vmatpush1.msra.mxu0 %v764
        %1540 = vmatprep.subr.mxu0 0.0
        %1541 = vmatpush1.msra.mxu0 %v761
        %1542 = vmatprep.subr.mxu0 0.0
        %1543 = vmatpush1.msra.mxu0 %v758
        %1544 = vmatprep.subr.mxu0 0.0
        %1545 = vmatpush1.msra.mxu0 %v755
        %1546 = vmatprep.subr.mxu0 0.0
        %1547 = vmatpush1.msra.mxu0 %v752
        %1548 = vmatprep.subr.mxu0 0.0
        %1549 = vmatpush1.msra.mxu0 %v749
        %1550 = vmatprep.subr.mxu0 0.0
        %1551 = vmatpush1.msra.mxu0 %v746
        %1552 = vmatprep.subr.mxu0 0.0
        %1553 = vmatpush1.msra.mxu0 %v743
        %1554 = vmatprep.subr.mxu0 0.0
        %1555 = vmatpush1.msra.mxu0 %v740
        %1556 = vmatprep.subr.mxu0 0.0
        %1557 = vmatpush1.msra.mxu0 %v737
        %1558 = vmatprep.subr.mxu0 0.0
        %1559 = vmatpush1.msra.mxu0 %v734
        %1560 = vmatprep.subr.mxu0 0.0
        %1561 = vmatpush1.msra.mxu0 %v731
        %1562 = vmatprep.subr.mxu0 0.0
        %1563 = vmatpush1.msra.mxu0 %v728
        %1564 = vmatprep.subr.mxu0 0.0
        %1565 = vmatpush1.msra.mxu0 %v725
        %1566 = vmatprep.subr.mxu0 0.0
        %1567 = vmatpush2.msra.mxu0 0.0
        %1568 = vmatprep.subr.mxu0 0.0
        %1569 = vmatpush2.msra.mxu0 0.0
        %1570 = vmatprep.subr.mxu0 0.0
        %1571 = vmatpush2.msra.mxu0 0.0
        %1572 = vmatprep.subr.mxu0 0.0
        %1573 = vmatpush2.msra.mxu0 0.0
        %1574 = vmatprep.subr.mxu0 0.0
        %1575 = vmatpush2.msra.mxu0 0.0
        %1576 = vmatprep.subr.mxu0 0.0
        %1577 = vmatpush2.msra.mxu0 0.0
        %1578 = vmatprep.subr.mxu0 0.0
        %1579 = vmatpush2.msra.mxu0 0.0
        %1580 = vmatprep.subr.mxu0 0.0
        %1581 = vmatpush2.msra.mxu0 0.0
        %1582 = vmatprep.subr.mxu0 0.0
        %1583 = vmatpush2.msra.mxu0 0.0
        %1584 = vmatprep.subr.mxu0 0.0
        %1585 = vmatpush2.msra.mxu0 0.0
        %1586 = vmatprep.subr.mxu0 0.0
        %1587 = vmatpush2.msra.mxu0 0.0
        %1588 = vmatprep.subr.mxu0 0.0
        %1589 = vmatpush2.msra.mxu0 0.0
        %1590 = vmatprep.subr.mxu0 0.0
        %1591 = vmatpush2.msra.mxu0 0.0
        %1592 = vmatprep.subr.mxu0 0.0
        %1593 = vmatpush2.msra.mxu0 0.0
        %1594 = vmatprep.subr.mxu0 0.0
        %1595 = vmatpush2.msra.mxu0 0.0
        %1596 = vmatprep.subr.mxu0 0.0
        %1597 = vmatpush2.msra.mxu0 0.0
        %1598 = vmatprep.mubr.f32.mxu0 0.0
        %1599 = vmatmul.mubr.f32.gmra.mxu0 %v1456
        %v1600 = vpop.f32.mrf.mxu0
        %v1601 = vadd.f32 %v784, %v1600
        %v1602 = vpop.f32.mrf.mxu0
        %1603 = vdwg.mxu0
        %v1604 = vadd.f32 %v1460, %v1530
        %v1605 = vxor.u32 %v1604, 2147483648
        %v1606 = vmul.f32 %v1605, 1.442695
        %v1607 = vpow.pop %v1606
        %v1608 = vadd.f32 %v1607, 1.0
        %v1609 = vrcp.pop %v1608
        %v1610 = vmul.f32 1.0, %v1609
        %v1611 = vadd.f32 %v1461, %v1532
        %v1612 = vxor.u32 %v1611, 2147483648
        %v1613 = vmul.f32 %v1612, 1.442695
        %v1614 = vpow.pop %v1613
        %v1615 = vadd.f32 %v1614, 1.0
        %v1616 = vrcp.pop %v1615
        %v1617 = vmul.f32 1.0, %v1616
        %v1618 = vmul.f32 %v1610, %v1601
        %v1619 = vadd.f32 %v1462, %v1618
        %v1620 = vtanh.pop %v1619
        %v1621 = vsub.f32 1.0, %v1617
        %v1622 = vmul.f32 %v1621, %v1620
        %v1623 = vmul.f32 %v1617, %v1456
        %v1624 = vadd.f32 %v1622, %v1623
        %s1625 = scalar_lea.vmem [#allocation4], 32
        %1626 = vst [vmem:[%s1625] sm:$0xff] %v1624
        %s1627 = scalar_lea.vmem [#allocation3], 120
        %v1628 = vld [vmem:[%s1627] sm:$0xff]
        %v1629 = vld [vmem:[%s1627 + $0x8] sm:$0xff]
        %v1630 = vld [vmem:[%s1627 + $0x10] sm:$0xff]
        %1631 = vmatprep.subr.mxu0 %v769
        %1632 = vmatpush1.msra.mxu0 %v768
        %1633 = vmatprep.subr.mxu0 %v766
        %1634 = vmatpush1.msra.mxu0 %v765
        %1635 = vmatprep.subr.mxu0 %v763
        %1636 = vmatpush1.msra.mxu0 %v762
        %1637 = vmatprep.subr.mxu0 %v760
        %1638 = vmatpush1.msra.mxu0 %v759
        %1639 = vmatprep.subr.mxu0 %v757
        %1640 = vmatpush1.msra.mxu0 %v756
        %1641 = vmatprep.subr.mxu0 %v754
        %1642 = vmatpush1.msra.mxu0 %v753
        %1643 = vmatprep.subr.mxu0 %v751
        %1644 = vmatpush1.msra.mxu0 %v750
        %1645 = vmatprep.subr.mxu0 %v748
        %1646 = vmatpush1.msra.mxu0 %v747
        %1647 = vmatprep.subr.mxu0 %v745
        %1648 = vmatpush1.msra.mxu0 %v744
        %1649 = vmatprep.subr.mxu0 %v742
        %1650 = vmatpush1.msra.mxu0 %v741
        %1651 = vmatprep.subr.mxu0 %v739
        %1652 = vmatpush1.msra.mxu0 %v738
        %1653 = vmatprep.subr.mxu0 %v736
        %1654 = vmatpush1.msra.mxu0 %v735
        %1655 = vmatprep.subr.mxu0 %v733
        %1656 = vmatpush1.msra.mxu0 %v732
        %1657 = vmatprep.subr.mxu0 %v730
        %1658 = vmatpush1.msra.mxu0 %v729
        %1659 = vmatprep.subr.mxu0 %v727
        %1660 = vmatpush1.msra.mxu0 %v726
        %1661 = vmatprep.subr.mxu0 %v724
        %1662 = vmatpush1.msra.mxu0 %v723
        %1663 = vmatprep.subr.mxu0 0.0
        %1664 = vmatpush2.msra.mxu0 0.0
        %1665 = vmatprep.subr.mxu0 0.0
        %1666 = vmatpush2.msra.mxu0 0.0
        %1667 = vmatprep.subr.mxu0 0.0
        %1668 = vmatpush2.msra.mxu0 0.0
        %1669 = vmatprep.subr.mxu0 0.0
        %1670 = vmatpush2.msra.mxu0 0.0
        %1671 = vmatprep.subr.mxu0 0.0
        %1672 = vmatpush2.msra.mxu0 0.0
        %1673 = vmatprep.subr.mxu0 0.0
        %1674 = vmatpush2.msra.mxu0 0.0
        %1675 = vmatprep.subr.mxu0 0.0
        %1676 = vmatpush2.msra.mxu0 0.0
        %1677 = vmatprep.subr.mxu0 0.0
        %1678 = vmatpush2.msra.mxu0 0.0
        %1679 = vmatprep.subr.mxu0 0.0
        %1680 = vmatpush2.msra.mxu0 0.0
        %1681 = vmatprep.subr.mxu0 0.0
        %1682 = vmatpush2.msra.mxu0 0.0
        %1683 = vmatprep.subr.mxu0 0.0
        %1684 = vmatpush2.msra.mxu0 0.0
        %1685 = vmatprep.subr.mxu0 0.0
        %1686 = vmatpush2.msra.mxu0 0.0
        %1687 = vmatprep.subr.mxu0 0.0
        %1688 = vmatpush2.msra.mxu0 0.0
        %1689 = vmatprep.subr.mxu0 0.0
        %1690 = vmatpush2.msra.mxu0 0.0
        %1691 = vmatprep.subr.mxu0 0.0
        %1692 = vmatpush2.msra.mxu0 0.0
        %1693 = vmatprep.subr.mxu0 0.0
        %1694 = vmatpush2.msra.mxu0 0.0
        %1695 = vmatprep.mubr.f32.mxu0 0.0
        %1696 = vmatmul.mubr.f32.gmra.mxu0 %v1624
        %v1697 = vpop.f32.mrf.mxu0
        %v1698 = vadd.f32 %v776, %v1697
        %v1699 = vpop.f32.mrf.mxu0
        %v1700 = vadd.f32 %v780, %v1699
        %1701 = vdwg.mxu0
        %1702 = vmatprep.subr.mxu0 0.0
        %1703 = vmatpush1.msra.mxu0 %v770
        %1704 = vmatprep.subr.mxu0 0.0
        %1705 = vmatpush1.msra.mxu0 %v767
        %1706 = vmatprep.subr.mxu0 0.0
        %1707 = vmatpush1.msra.mxu0 %v764
        %1708 = vmatprep.subr.mxu0 0.0
        %1709 = vmatpush1.msra.mxu0 %v761
        %1710 = vmatprep.subr.mxu0 0.0
        %1711 = vmatpush1.msra.mxu0 %v758
        %1712 = vmatprep.subr.mxu0 0.0
        %1713 = vmatpush1.msra.mxu0 %v755
        %1714 = vmatprep.subr.mxu0 0.0
        %1715 = vmatpush1.msra.mxu0 %v752
        %1716 = vmatprep.subr.mxu0 0.0
        %1717 = vmatpush1.msra.mxu0 %v749
        %1718 = vmatprep.subr.mxu0 0.0
        %1719 = vmatpush1.msra.mxu0 %v746
        %1720 = vmatprep.subr.mxu0 0.0
        %1721 = vmatpush1.msra.mxu0 %v743
        %1722 = vmatprep.subr.mxu0 0.0
        %1723 = vmatpush1.msra.mxu0 %v740
        %1724 = vmatprep.subr.mxu0 0.0
        %1725 = vmatpush1.msra.mxu0 %v737
        %1726 = vmatprep.subr.mxu0 0.0
        %1727 = vmatpush1.msra.mxu0 %v734
        %1728 = vmatprep.subr.mxu0 0.0
        %1729 = vmatpush1.msra.mxu0 %v731
        %1730 = vmatprep.subr.mxu0 0.0
        %1731 = vmatpush1.msra.mxu0 %v728
        %1732 = vmatprep.subr.mxu0 0.0
        %1733 = vmatpush1.msra.mxu0 %v725
        %1734 = vmatprep.subr.mxu0 0.0
        %1735 = vmatpush2.msra.mxu0 0.0
        %1736 = vmatprep.subr.mxu0 0.0
        %1737 = vmatpush2.msra.mxu0 0.0
        %1738 = vmatprep.subr.mxu0 0.0
        %1739 = vmatpush2.msra.mxu0 0.0
        %1740 = vmatprep.subr.mxu0 0.0
        %1741 = vmatpush2.msra.mxu0 0.0
        %1742 = vmatprep.subr.mxu0 0.0
        %1743 = vmatpush2.msra.mxu0 0.0
        %1744 = vmatprep.subr.mxu0 0.0
        %1745 = vmatpush2.msra.mxu0 0.0
        %1746 = vmatprep.subr.mxu0 0.0
        %1747 = vmatpush2.msra.mxu0 0.0
        %1748 = vmatprep.subr.mxu0 0.0
        %1749 = vmatpush2.msra.mxu0 0.0
        %1750 = vmatprep.subr.mxu0 0.0
        %1751 = vmatpush2.msra.mxu0 0.0
        %1752 = vmatprep.subr.mxu0 0.0
        %1753 = vmatpush2.msra.mxu0 0.0
        %1754 = vmatprep.subr.mxu0 0.0
        %1755 = vmatpush2.msra.mxu0 0.0
        %1756 = vmatprep.subr.mxu0 0.0
        %1757 = vmatpush2.msra.mxu0 0.0
        %1758 = vmatprep.subr.mxu0 0.0
        %1759 = vmatpush2.msra.mxu0 0.0
        %1760 = vmatprep.subr.mxu0 0.0
        %1761 = vmatpush2.msra.mxu0 0.0
        %1762 = vmatprep.subr.mxu0 0.0
        %1763 = vmatpush2.msra.mxu0 0.0
        %1764 = vmatprep.subr.mxu0 0.0
        %1765 = vmatpush2.msra.mxu0 0.0
        %1766 = vmatprep.mubr.f32.mxu0 0.0
        %1767 = vmatmul.mubr.f32.gmra.mxu0 %v1624
        %v1768 = vpop.f32.mrf.mxu0
        %v1769 = vadd.f32 %v784, %v1768
        %v1770 = vpop.f32.mrf.mxu0
        %1771 = vdwg.mxu0
        %v1772 = vadd.f32 %v1628, %v1698
        %v1773 = vxor.u32 %v1772, 2147483648
        %v1774 = vmul.f32 %v1773, 1.442695
        %v1775 = vpow.pop %v1774
        %v1776 = vadd.f32 %v1775, 1.0
        %v1777 = vrcp.pop %v1776
        %v1778 = vmul.f32 1.0, %v1777
        %v1779 = vadd.f32 %v1629, %v1700
        %v1780 = vxor.u32 %v1779, 2147483648
        %v1781 = vmul.f32 %v1780, 1.442695
        %v1782 = vpow.pop %v1781
        %v1783 = vadd.f32 %v1782, 1.0
        %v1784 = vrcp.pop %v1783
        %v1785 = vmul.f32 1.0, %v1784
        %v1786 = vmul.f32 %v1778, %v1769
        %v1787 = vadd.f32 %v1630, %v1786
        %v1788 = vtanh.pop %v1787
        %v1789 = vsub.f32 1.0, %v1785
        %v1790 = vmul.f32 %v1789, %v1788
        %v1791 = vmul.f32 %v1785, %v1624
        %v1792 = vadd.f32 %v1790, %v1791
        %s1793 = scalar_lea.vmem [#allocation4], 40
        %1794 = vst [vmem:[%s1793] sm:$0xff] %v1792
        %s1795 = scalar_lea.vmem [#allocation3], 144
        %v1796 = vld [vmem:[%s1795] sm:$0xff]
        %v1797 = vld [vmem:[%s1795 + $0x8] sm:$0xff]
        %v1798 = vld [vmem:[%s1795 + $0x10] sm:$0xff]
        %1799 = vmatprep.subr.mxu0 %v769
        %1800 = vmatpush1.msra.mxu0 %v768
        %1801 = vmatprep.subr.mxu0 %v766
        %1802 = vmatpush1.msra.mxu0 %v765
        %1803 = vmatprep.subr.mxu0 %v763
        %1804 = vmatpush1.msra.mxu0 %v762
        %1805 = vmatprep.subr.mxu0 %v760
        %1806 = vmatpush1.msra.mxu0 %v759
        %1807 = vmatprep.subr.mxu0 %v757
        %1808 = vmatpush1.msra.mxu0 %v756
        %1809 = vmatprep.subr.mxu0 %v754
        %1810 = vmatpush1.msra.mxu0 %v753
        %1811 = vmatprep.subr.mxu0 %v751
        %1812 = vmatpush1.msra.mxu0 %v750
        %1813 = vmatprep.subr.mxu0 %v748
        %1814 = vmatpush1.msra.mxu0 %v747
        %1815 = vmatprep.subr.mxu0 %v745
        %1816 = vmatpush1.msra.mxu0 %v744
        %1817 = vmatprep.subr.mxu0 %v742
        %1818 = vmatpush1.msra.mxu0 %v741
        %1819 = vmatprep.subr.mxu0 %v739
        %1820 = vmatpush1.msra.mxu0 %v738
        %1821 = vmatprep.subr.mxu0 %v736
        %1822 = vmatpush1.msra.mxu0 %v735
        %1823 = vmatprep.subr.mxu0 %v733
        %1824 = vmatpush1.msra.mxu0 %v732
        %1825 = vmatprep.subr.mxu0 %v730
        %1826 = vmatpush1.msra.mxu0 %v729
        %1827 = vmatprep.subr.mxu0 %v727
        %1828 = vmatpush1.msra.mxu0 %v726
        %1829 = vmatprep.subr.mxu0 %v724
        %1830 = vmatpush1.msra.mxu0 %v723
        %1831 = vmatprep.subr.mxu0 0.0
        %1832 = vmatpush2.msra.mxu0 0.0
        %1833 = vmatprep.subr.mxu0 0.0
        %1834 = vmatpush2.msra.mxu0 0.0
        %1835 = vmatprep.subr.mxu0 0.0
        %1836 = vmatpush2.msra.mxu0 0.0
        %1837 = vmatprep.subr.mxu0 0.0
        %1838 = vmatpush2.msra.mxu0 0.0
        %1839 = vmatprep.subr.mxu0 0.0
        %1840 = vmatpush2.msra.mxu0 0.0
        %1841 = vmatprep.subr.mxu0 0.0
        %1842 = vmatpush2.msra.mxu0 0.0
        %1843 = vmatprep.subr.mxu0 0.0
        %1844 = vmatpush2.msra.mxu0 0.0
        %1845 = vmatprep.subr.mxu0 0.0
        %1846 = vmatpush2.msra.mxu0 0.0
        %1847 = vmatprep.subr.mxu0 0.0
        %1848 = vmatpush2.msra.mxu0 0.0
        %1849 = vmatprep.subr.mxu0 0.0
        %1850 = vmatpush2.msra.mxu0 0.0
        %1851 = vmatprep.subr.mxu0 0.0
        %1852 = vmatpush2.msra.mxu0 0.0
        %1853 = vmatprep.subr.mxu0 0.0
        %1854 = vmatpush2.msra.mxu0 0.0
        %1855 = vmatprep.subr.mxu0 0.0
        %1856 = vmatpush2.msra.mxu0 0.0
        %1857 = vmatprep.subr.mxu0 0.0
        %1858 = vmatpush2.msra.mxu0 0.0
        %1859 = vmatprep.subr.mxu0 0.0
        %1860 = vmatpush2.msra.mxu0 0.0
        %1861 = vmatprep.subr.mxu0 0.0
        %1862 = vmatpush2.msra.mxu0 0.0
        %1863 = vmatprep.mubr.f32.mxu0 0.0
        %1864 = vmatmul.mubr.f32.gmra.mxu0 %v1792
        %v1865 = vpop.f32.mrf.mxu0
        %v1866 = vadd.f32 %v776, %v1865
        %v1867 = vpop.f32.mrf.mxu0
        %v1868 = vadd.f32 %v780, %v1867
        %1869 = vdwg.mxu0
        %1870 = vmatprep.subr.mxu0 0.0
        %1871 = vmatpush1.msra.mxu0 %v770
        %1872 = vmatprep.subr.mxu0 0.0
        %1873 = vmatpush1.msra.mxu0 %v767
        %1874 = vmatprep.subr.mxu0 0.0
        %1875 = vmatpush1.msra.mxu0 %v764
        %1876 = vmatprep.subr.mxu0 0.0
        %1877 = vmatpush1.msra.mxu0 %v761
        %1878 = vmatprep.subr.mxu0 0.0
        %1879 = vmatpush1.msra.mxu0 %v758
        %1880 = vmatprep.subr.mxu0 0.0
        %1881 = vmatpush1.msra.mxu0 %v755
        %1882 = vmatprep.subr.mxu0 0.0
        %1883 = vmatpush1.msra.mxu0 %v752
        %1884 = vmatprep.subr.mxu0 0.0
        %1885 = vmatpush1.msra.mxu0 %v749
        %1886 = vmatprep.subr.mxu0 0.0
        %1887 = vmatpush1.msra.mxu0 %v746
        %1888 = vmatprep.subr.mxu0 0.0
        %1889 = vmatpush1.msra.mxu0 %v743
        %1890 = vmatprep.subr.mxu0 0.0
        %1891 = vmatpush1.msra.mxu0 %v740
        %1892 = vmatprep.subr.mxu0 0.0
        %1893 = vmatpush1.msra.mxu0 %v737
        %1894 = vmatprep.subr.mxu0 0.0
        %1895 = vmatpush1.msra.mxu0 %v734
        %1896 = vmatprep.subr.mxu0 0.0
        %1897 = vmatpush1.msra.mxu0 %v731
        %1898 = vmatprep.subr.mxu0 0.0
        %1899 = vmatpush1.msra.mxu0 %v728
        %1900 = vmatprep.subr.mxu0 0.0
        %1901 = vmatpush1.msra.mxu0 %v725
        %1902 = vmatprep.subr.mxu0 0.0
        %1903 = vmatpush2.msra.mxu0 0.0
        %1904 = vmatprep.subr.mxu0 0.0
        %1905 = vmatpush2.msra.mxu0 0.0
        %1906 = vmatprep.subr.mxu0 0.0
        %1907 = vmatpush2.msra.mxu0 0.0
        %1908 = vmatprep.subr.mxu0 0.0
        %1909 = vmatpush2.msra.mxu0 0.0
        %1910 = vmatprep.subr.mxu0 0.0
        %1911 = vmatpush2.msra.mxu0 0.0
        %1912 = vmatprep.subr.mxu0 0.0
        %1913 = vmatpush2.msra.mxu0 0.0
        %1914 = vmatprep.subr.mxu0 0.0
        %1915 = vmatpush2.msra.mxu0 0.0
        %1916 = vmatprep.subr.mxu0 0.0
        %1917 = vmatpush2.msra.mxu0 0.0
        %1918 = vmatprep.subr.mxu0 0.0
        %1919 = vmatpush2.msra.mxu0 0.0
        %1920 = vmatprep.subr.mxu0 0.0
        %1921 = vmatpush2.msra.mxu0 0.0
        %1922 = vmatprep.subr.mxu0 0.0
        %1923 = vmatpush2.msra.mxu0 0.0
        %1924 = vmatprep.subr.mxu0 0.0
        %1925 = vmatpush2.msra.mxu0 0.0
        %1926 = vmatprep.subr.mxu0 0.0
        %1927 = vmatpush2.msra.mxu0 0.0
        %1928 = vmatprep.subr.mxu0 0.0
        %1929 = vmatpush2.msra.mxu0 0.0
        %1930 = vmatprep.subr.mxu0 0.0
        %1931 = vmatpush2.msra.mxu0 0.0
        %1932 = vmatprep.subr.mxu0 0.0
        %1933 = vmatpush2.msra.mxu0 0.0
        %1934 = vmatprep.mubr.f32.mxu0 0.0
        %1935 = vmatmul.mubr.f32.gmra.mxu0 %v1792
        %v1936 = vpop.f32.mrf.mxu0
        %v1937 = vadd.f32 %v784, %v1936
        %v1938 = vpop.f32.mrf.mxu0
        %1939 = vdwg.mxu0
        %v1940 = vadd.f32 %v1796, %v1866
        %v1941 = vxor.u32 %v1940, 2147483648
        %v1942 = vmul.f32 %v1941, 1.442695
        %v1943 = vpow.pop %v1942
        %v1944 = vadd.f32 %v1943, 1.0
        %v1945 = vrcp.pop %v1944
        %v1946 = vmul.f32 1.0, %v1945
        %v1947 = vadd.f32 %v1797, %v1868
        %v1948 = vxor.u32 %v1947, 2147483648
        %v1949 = vmul.f32 %v1948, 1.442695
        %v1950 = vpow.pop %v1949
        %v1951 = vadd.f32 %v1950, 1.0
        %v1952 = vrcp.pop %v1951
        %v1953 = vmul.f32 1.0, %v1952
        %v1954 = vmul.f32 %v1946, %v1937
        %v1955 = vadd.f32 %v1798, %v1954
        %v1956 = vtanh.pop %v1955
        %v1957 = vsub.f32 1.0, %v1953
        %v1958 = vmul.f32 %v1957, %v1956
        %v1959 = vmul.f32 %v1953, %v1792
        %v1960 = vadd.f32 %v1958, %v1959
        %s1961 = scalar_lea.vmem [#allocation4], 48
        %1962 = vst [vmem:[%s1961] sm:$0xff] %v1960
        %s1963 = scalar_lea.vmem [#allocation3], 168
        %v1964 = vld [vmem:[%s1963] sm:$0xff]
        %v1965 = vld [vmem:[%s1963 + $0x8] sm:$0xff]
        %v1966 = vld [vmem:[%s1963 + $0x10] sm:$0xff]
        %1967 = vmatprep.subr.mxu0 %v769
        %1968 = vmatpush1.msra.mxu0 %v768
        %1969 = vmatprep.subr.mxu0 %v766
        %1970 = vmatpush1.msra.mxu0 %v765
        %1971 = vmatprep.subr.mxu0 %v763
        %1972 = vmatpush1.msra.mxu0 %v762
        %1973 = vmatprep.subr.mxu0 %v760
        %1974 = vmatpush1.msra.mxu0 %v759
        %1975 = vmatprep.subr.mxu0 %v757
        %1976 = vmatpush1.msra.mxu0 %v756
        %1977 = vmatprep.subr.mxu0 %v754
        %1978 = vmatpush1.msra.mxu0 %v753
        %1979 = vmatprep.subr.mxu0 %v751
        %1980 = vmatpush1.msra.mxu0 %v750
        %1981 = vmatprep.subr.mxu0 %v748
        %1982 = vmatpush1.msra.mxu0 %v747
        %1983 = vmatprep.subr.mxu0 %v745
        %1984 = vmatpush1.msra.mxu0 %v744
        %1985 = vmatprep.subr.mxu0 %v742
        %1986 = vmatpush1.msra.mxu0 %v741
        %1987 = vmatprep.subr.mxu0 %v739
        %1988 = vmatpush1.msra.mxu0 %v738
        %1989 = vmatprep.subr.mxu0 %v736
        %1990 = vmatpush1.msra.mxu0 %v735
        %1991 = vmatprep.subr.mxu0 %v733
        %1992 = vmatpush1.msra.mxu0 %v732
        %1993 = vmatprep.subr.mxu0 %v730
        %1994 = vmatpush1.msra.mxu0 %v729
        %1995 = vmatprep.subr.mxu0 %v727
        %1996 = vmatpush1.msra.mxu0 %v726
        %1997 = vmatprep.subr.mxu0 %v724
        %1998 = vmatpush1.msra.mxu0 %v723
        %1999 = vmatprep.subr.mxu0 0.0
        %2000 = vmatpush2.msra.mxu0 0.0
        %2001 = vmatprep.subr.mxu0 0.0
        %2002 = vmatpush2.msra.mxu0 0.0
        %2003 = vmatprep.subr.mxu0 0.0
        %2004 = vmatpush2.msra.mxu0 0.0
        %2005 = vmatprep.subr.mxu0 0.0
        %2006 = vmatpush2.msra.mxu0 0.0
        %2007 = vmatprep.subr.mxu0 0.0
        %2008 = vmatpush2.msra.mxu0 0.0
        %2009 = vmatprep.subr.mxu0 0.0
        %2010 = vmatpush2.msra.mxu0 0.0
        %2011 = vmatprep.subr.mxu0 0.0
        %2012 = vmatpush2.msra.mxu0 0.0
        %2013 = vmatprep.subr.mxu0 0.0
        %2014 = vmatpush2.msra.mxu0 0.0
        %2015 = vmatprep.subr.mxu0 0.0
        %2016 = vmatpush2.msra.mxu0 0.0
        %2017 = vmatprep.subr.mxu0 0.0
        %2018 = vmatpush2.msra.mxu0 0.0
        %2019 = vmatprep.subr.mxu0 0.0
        %2020 = vmatpush2.msra.mxu0 0.0
        %2021 = vmatprep.subr.mxu0 0.0
        %2022 = vmatpush2.msra.mxu0 0.0
        %2023 = vmatprep.subr.mxu0 0.0
        %2024 = vmatpush2.msra.mxu0 0.0
        %2025 = vmatprep.subr.mxu0 0.0
        %2026 = vmatpush2.msra.mxu0 0.0
        %2027 = vmatprep.subr.mxu0 0.0
        %2028 = vmatpush2.msra.mxu0 0.0
        %2029 = vmatprep.subr.mxu0 0.0
        %2030 = vmatpush2.msra.mxu0 0.0
        %2031 = vmatprep.mubr.f32.mxu0 0.0
        %2032 = vmatmul.mubr.f32.gmra.mxu0 %v1960
        %v2033 = vpop.f32.mrf.mxu0
        %v2034 = vadd.f32 %v776, %v2033
        %v2035 = vpop.f32.mrf.mxu0
        %v2036 = vadd.f32 %v780, %v2035
        %2037 = vdwg.mxu0
        %2038 = vmatprep.subr.mxu0 0.0
        %2039 = vmatpush1.msra.mxu0 %v770
        %2040 = vmatprep.subr.mxu0 0.0
        %2041 = vmatpush1.msra.mxu0 %v767
        %2042 = vmatprep.subr.mxu0 0.0
        %2043 = vmatpush1.msra.mxu0 %v764
        %2044 = vmatprep.subr.mxu0 0.0
        %2045 = vmatpush1.msra.mxu0 %v761
        %2046 = vmatprep.subr.mxu0 0.0
        %2047 = vmatpush1.msra.mxu0 %v758
        %2048 = vmatprep.subr.mxu0 0.0
        %2049 = vmatpush1.msra.mxu0 %v755
        %2050 = vmatprep.subr.mxu0 0.0
        %2051 = vmatpush1.msra.mxu0 %v752
        %2052 = vmatprep.subr.mxu0 0.0
        %2053 = vmatpush1.msra.mxu0 %v749
        %2054 = vmatprep.subr.mxu0 0.0
        %2055 = vmatpush1.msra.mxu0 %v746
        %2056 = vmatprep.subr.mxu0 0.0
        %2057 = vmatpush1.msra.mxu0 %v743
        %2058 = vmatprep.subr.mxu0 0.0
        %2059 = vmatpush1.msra.mxu0 %v740
        %2060 = vmatprep.subr.mxu0 0.0
        %2061 = vmatpush1.msra.mxu0 %v737
        %2062 = vmatprep.subr.mxu0 0.0
        %2063 = vmatpush1.msra.mxu0 %v734
        %2064 = vmatprep.subr.mxu0 0.0
        %2065 = vmatpush1.msra.mxu0 %v731
        %2066 = vmatprep.subr.mxu0 0.0
        %2067 = vmatpush1.msra.mxu0 %v728
        %2068 = vmatprep.subr.mxu0 0.0
        %2069 = vmatpush1.msra.mxu0 %v725
        %2070 = vmatprep.subr.mxu0 0.0
        %2071 = vmatpush2.msra.mxu0 0.0
        %2072 = vmatprep.subr.mxu0 0.0
        %2073 = vmatpush2.msra.mxu0 0.0
        %2074 = vmatprep.subr.mxu0 0.0
        %2075 = vmatpush2.msra.mxu0 0.0
        %2076 = vmatprep.subr.mxu0 0.0
        %2077 = vmatpush2.msra.mxu0 0.0
        %2078 = vmatprep.subr.mxu0 0.0
        %2079 = vmatpush2.msra.mxu0 0.0
        %2080 = vmatprep.subr.mxu0 0.0
        %2081 = vmatpush2.msra.mxu0 0.0
        %2082 = vmatprep.subr.mxu0 0.0
        %2083 = vmatpush2.msra.mxu0 0.0
        %2084 = vmatprep.subr.mxu0 0.0
        %2085 = vmatpush2.msra.mxu0 0.0
        %2086 = vmatprep.subr.mxu0 0.0
        %2087 = vmatpush2.msra.mxu0 0.0
        %2088 = vmatprep.subr.mxu0 0.0
        %2089 = vmatpush2.msra.mxu0 0.0
        %2090 = vmatprep.subr.mxu0 0.0
        %2091 = vmatpush2.msra.mxu0 0.0
        %2092 = vmatprep.subr.mxu0 0.0
        %2093 = vmatpush2.msra.mxu0 0.0
        %2094 = vmatprep.subr.mxu0 0.0
        %2095 = vmatpush2.msra.mxu0 0.0
        %2096 = vmatprep.subr.mxu0 0.0
        %2097 = vmatpush2.msra.mxu0 0.0
        %2098 = vmatprep.subr.mxu0 0.0
        %2099 = vmatpush2.msra.mxu0 0.0
        %2100 = vmatprep.subr.mxu0 0.0
        %2101 = vmatpush2.msra.mxu0 0.0
        %2102 = vmatprep.mubr.f32.mxu0 0.0
        %2103 = vmatmul.mubr.f32.gmra.mxu0 %v1960
        %v2104 = vpop.f32.mrf.mxu0
        %v2105 = vadd.f32 %v784, %v2104
        %v2106 = vpop.f32.mrf.mxu0
        %2107 = vdwg.mxu0
        %v2108 = vadd.f32 %v1964, %v2034
        %v2109 = vxor.u32 %v2108, 2147483648
        %v2110 = vmul.f32 %v2109, 1.442695
        %v2111 = vpow.pop %v2110
        %v2112 = vadd.f32 %v2111, 1.0
        %v2113 = vrcp.pop %v2112
        %v2114 = vmul.f32 1.0, %v2113
        %v2115 = vadd.f32 %v1965, %v2036
        %v2116 = vxor.u32 %v2115, 2147483648
        %v2117 = vmul.f32 %v2116, 1.442695
        %v2118 = vpow.pop %v2117
        %v2119 = vadd.f32 %v2118, 1.0
        %v2120 = vrcp.pop %v2119
        %v2121 = vmul.f32 1.0, %v2120
        %v2122 = vmul.f32 %v2114, %v2105
        %v2123 = vadd.f32 %v1966, %v2122
        %v2124 = vtanh.pop %v2123
        %v2125 = vsub.f32 1.0, %v2121
        %v2126 = vmul.f32 %v2125, %v2124
        %v2127 = vmul.f32 %v2121, %v1960
        %v2128 = vadd.f32 %v2126, %v2127
        %s2129 = scalar_lea.vmem [#allocation4], 56
        %2130 = vst [vmem:[%s2129] sm:$0xff] %v2128
        %2131 = vst [vmem:[#allocation2] sm:$0xff] %v2128
        %v2132 = vld [vmem:[#allocation4] sm:$0xff]
        %v2133 = vld [vmem:[#allocation4 + $0x8] sm:$0xff]
        %v2134 = vld [vmem:[#allocation4 + $0x10] sm:$0xff]
        %v2135 = vld [vmem:[#allocation4 + $0x18] sm:$0xff]
        %v2136 = vld [vmem:[#allocation4 + $0x20] sm:$0xff]
        %v2137 = vld [vmem:[#allocation4 + $0x28] sm:$0xff]
        %v2138 = vld [vmem:[#allocation4 + $0x30] sm:$0xff]
        %v2139 = vld [vmem:[#allocation4 + $0x38] sm:$0xff]
        %v2140 = vld [vmem:[%s5] sm:$0xff]
        %v2141 = vld [vmem:[%s5 + $0x8] sm:$0xff]
        %v2142 = vld [vmem:[%s5 + $0x10] sm:$0xff]
        %v2143 = vld [vmem:[%s5 + $0x18] sm:$0xff]
        %v2144 = vld [vmem:[%s5 + $0x20] sm:$0xff]
        %v2145 = vld [vmem:[%s5 + $0x28] sm:$0xff]
        %v2146 = vld [vmem:[%s5 + $0x30] sm:$0xff]
        %v2147 = vld [vmem:[%s5 + $0x38] sm:$0xff]
        %v2148 = vld [vmem:[%s5 + $0x40] sm:$0xff]
        %v2149 = vld [vmem:[%s5 + $0x48] sm:$0xff]
        %v2150 = vld [vmem:[%s5 + $0x50] sm:$0xff]
        %v2151 = vld [vmem:[%s5 + $0x58] sm:$0xff]
        %v2152 = vld [vmem:[%s5 + $0x60] sm:$0xff]
        %v2153 = vld [vmem:[%s5 + $0x68] sm:$0xff]
        %v2154 = vld [vmem:[%s5 + $0x70] sm:$0xff]
        %v2155 = vld [vmem:[%s5 + $0x78] sm:$0xff]
        %v2156 = vld [vmem:[%s6] sm:$0x1]
        %v2158 = vlaneseq
        %v2159 = vshrl.u32 %v2158, 7
        %v2160 = vsub.s32 0, %v2159
        %v2161 = vrot.slane %v2156, %v2160
        %2163 = vmatprep.subr.mxu0 0.0
        %2164 = vmatpush1.msra.mxu0 %v2155
        %2165 = vmatprep.subr.mxu0 0.0
        %2166 = vmatpush1.msra.mxu0 %v2154
        %2167 = vmatprep.subr.mxu0 0.0
        %2168 = vmatpush1.msra.mxu0 %v2153
        %2169 = vmatprep.subr.mxu0 0.0
        %2170 = vmatpush1.msra.mxu0 %v2152
        %2171 = vmatprep.subr.mxu0 0.0
        %2172 = vmatpush1.msra.mxu0 %v2151
        %2173 = vmatprep.subr.mxu0 0.0
        %2174 = vmatpush1.msra.mxu0 %v2150
        %2175 = vmatprep.subr.mxu0 0.0
        %2176 = vmatpush1.msra.mxu0 %v2149
        %2177 = vmatprep.subr.mxu0 0.0
        %2178 = vmatpush1.msra.mxu0 %v2148
        %2179 = vmatprep.subr.mxu0 0.0
        %2180 = vmatpush1.msra.mxu0 %v2147
        %2181 = vmatprep.subr.mxu0 0.0
        %2182 = vmatpush1.msra.mxu0 %v2146
        %2183 = vmatprep.subr.mxu0 0.0
        %2184 = vmatpush1.msra.mxu0 %v2145
        %2185 = vmatprep.subr.mxu0 0.0
        %2186 = vmatpush1.msra.mxu0 %v2144
        %2187 = vmatprep.subr.mxu0 0.0
        %2188 = vmatpush1.msra.mxu0 %v2143
        %2189 = vmatprep.subr.mxu0 0.0
        %2190 = vmatpush1.msra.mxu0 %v2142
        %2191 = vmatprep.subr.mxu0 0.0
        %2192 = vmatpush1.msra.mxu0 %v2141
        %2193 = vmatprep.subr.mxu0 0.0
        %2194 = vmatpush1.msra.mxu0 %v2140
        %2195 = vmatprep.subr.mxu0 0.0
        %2196 = vmatpush2.msra.mxu0 0.0
        %2197 = vmatprep.subr.mxu0 0.0
        %2198 = vmatpush2.msra.mxu0 0.0
        %2199 = vmatprep.subr.mxu0 0.0
        %2200 = vmatpush2.msra.mxu0 0.0
        %2201 = vmatprep.subr.mxu0 0.0
        %2202 = vmatpush2.msra.mxu0 0.0
        %2203 = vmatprep.subr.mxu0 0.0
        %2204 = vmatpush2.msra.mxu0 0.0
        %2205 = vmatprep.subr.mxu0 0.0
        %2206 = vmatpush2.msra.mxu0 0.0
        %2207 = vmatprep.subr.mxu0 0.0
        %2208 = vmatpush2.msra.mxu0 0.0
        %2209 = vmatprep.subr.mxu0 0.0
        %2210 = vmatpush2.msra.mxu0 0.0
        %2211 = vmatprep.subr.mxu0 0.0
        %2212 = vmatpush2.msra.mxu0 0.0
        %2213 = vmatprep.subr.mxu0 0.0
        %2214 = vmatpush2.msra.mxu0 0.0
        %2215 = vmatprep.subr.mxu0 0.0
        %2216 = vmatpush2.msra.mxu0 0.0
        %2217 = vmatprep.subr.mxu0 0.0
        %2218 = vmatpush2.msra.mxu0 0.0
        %2219 = vmatprep.subr.mxu0 0.0
        %2220 = vmatpush2.msra.mxu0 0.0
        %2221 = vmatprep.subr.mxu0 0.0
        %2222 = vmatpush2.msra.mxu0 0.0
        %2223 = vmatprep.subr.mxu0 0.0
        %2224 = vmatpush2.msra.mxu0 0.0
        %2225 = vmatprep.subr.mxu0 0.0
        %2226 = vmatpush2.msra.mxu0 0.0
        %2227 = vmatprep.mubr.f32.mxu0 0.0
        %2228 = vmatmul.mubr.f32.gmra.mxu0 %v2132
        %v2229 = vpop.f32.mrf.mxu0
        %v2230 = vadd.f32 %v2161, %v2229
        %v2231 = vpop.f32.mrf.mxu0
        %2232 = vmatprep.mubr.f32.mxu0 0.0
        %2233 = vmatmul.mubr.f32.gmra.mxu0 %v2133
        %v2234 = vpop.f32.mrf.mxu0
        %v2235 = vadd.f32 %v2161, %v2234
        %v2236 = vpop.f32.mrf.mxu0
        %2237 = vmatprep.mubr.f32.mxu0 0.0
        %2238 = vmatmul.mubr.f32.gmra.mxu0 %v2134
        %v2239 = vpop.f32.mrf.mxu0
        %v2240 = vadd.f32 %v2161, %v2239
        %v2241 = vpop.f32.mrf.mxu0
        %2242 = vmatprep.mubr.f32.mxu0 0.0
        %2243 = vmatmul.mubr.f32.gmra.mxu0 %v2135
        %v2244 = vpop.f32.mrf.mxu0
        %v2245 = vadd.f32 %v2161, %v2244
        %v2246 = vpop.f32.mrf.mxu0
        %2247 = vmatprep.mubr.f32.mxu0 0.0
        %2248 = vmatmul.mubr.f32.gmra.mxu0 %v2136
        %v2249 = vpop.f32.mrf.mxu0
        %v2250 = vadd.f32 %v2161, %v2249
        %v2251 = vpop.f32.mrf.mxu0
        %2252 = vmatprep.mubr.f32.mxu0 0.0
        %2253 = vmatmul.mubr.f32.gmra.mxu0 %v2137
        %v2254 = vpop.f32.mrf.mxu0
        %v2255 = vadd.f32 %v2161, %v2254
        %v2256 = vpop.f32.mrf.mxu0
        %2257 = vmatprep.mubr.f32.mxu0 0.0
        %2258 = vmatmul.mubr.f32.gmra.mxu0 %v2138
        %v2259 = vpop.f32.mrf.mxu0
        %v2260 = vadd.f32 %v2161, %v2259
        %v2261 = vpop.f32.mrf.mxu0
        %2262 = vmatprep.mubr.f32.mxu0 0.0
        %2263 = vmatmul.mubr.f32.gmra.mxu0 %v2139
        %v2264 = vpop.f32.mrf.mxu0
        %v2265 = vadd.f32 %v2161, %v2264
        %v2266 = vpop.f32.mrf.mxu0
        %2267 = vdwg.mxu0
        %v2268 = vtanh.pop %v2230
        %v2269 = vtanh.pop %v2235
        %v2270 = vtanh.pop %v2240
        %v2271 = vtanh.pop %v2245
        %v2272 = vtanh.pop %v2250
        %v2273 = vtanh.pop %v2255
        %v2274 = vtanh.pop %v2260
        %v2275 = vtanh.pop %v2265
        %v2276 = vld [vmem:[%s7] sm:$0xff]
        %v2277 = vld [vmem:[%s7 + $0x8] sm:$0xff]
        %v2278 = vld [vmem:[%s7 + $0x10] sm:$0xff]
        %v2279 = vld [vmem:[%s7 + $0x18] sm:$0xff]
        %v2280 = vld [vmem:[%s7 + $0x20] sm:$0xff]
        %v2281 = vld [vmem:[%s7 + $0x28] sm:$0xff]
        %v2282 = vld [vmem:[%s7 + $0x30] sm:$0xff]
        %v2283 = vld [vmem:[%s7 + $0x38] sm:$0xff]
        %v2284 = vld [vmem:[%s7 + $0x40] sm:$0xff]
        %v2285 = vld [vmem:[%s7 + $0x48] sm:$0xff]
        %v2286 = vld [vmem:[%s7 + $0x50] sm:$0xff]
        %v2287 = vld [vmem:[%s7 + $0x58] sm:$0xff]
        %v2288 = vld [vmem:[%s7 + $0x60] sm:$0xff]
        %v2289 = vld [vmem:[%s7 + $0x68] sm:$0xff]
        %v2290 = vld [vmem:[%s7 + $0x70] sm:$0xff]
        %v2291 = vld [vmem:[%s7 + $0x78] sm:$0xff]
        %2292 = vmatprep.subr.mxu0 0.0
        %2293 = vmatpush1.msra.mxu0 %v2291
        %2294 = vmatprep.subr.mxu0 0.0
        %2295 = vmatpush1.msra.mxu0 %v2290
        %2296 = vmatprep.subr.mxu0 0.0
        %2297 = vmatpush1.msra.mxu0 %v2289
        %2298 = vmatprep.subr.mxu0 0.0
        %2299 = vmatpush1.msra.mxu0 %v2288
        %2300 = vmatprep.subr.mxu0 0.0
        %2301 = vmatpush1.msra.mxu0 %v2287
        %2302 = vmatprep.subr.mxu0 0.0
        %2303 = vmatpush1.msra.mxu0 %v2286
        %2304 = vmatprep.subr.mxu0 0.0
        %2305 = vmatpush1.msra.mxu0 %v2285
        %2306 = vmatprep.subr.mxu0 0.0
        %2307 = vmatpush1.msra.mxu0 %v2284
        %2308 = vmatprep.subr.mxu0 0.0
        %2309 = vmatpush1.msra.mxu0 %v2283
        %2310 = vmatprep.subr.mxu0 0.0
        %2311 = vmatpush1.msra.mxu0 %v2282
        %2312 = vmatprep.subr.mxu0 0.0
        %2313 = vmatpush1.msra.mxu0 %v2281
        %2314 = vmatprep.subr.mxu0 0.0
        %2315 = vmatpush1.msra.mxu0 %v2280
        %2316 = vmatprep.subr.mxu0 0.0
        %2317 = vmatpush1.msra.mxu0 %v2279
        %2318 = vmatprep.subr.mxu0 0.0
        %2319 = vmatpush1.msra.mxu0 %v2278
        %2320 = vmatprep.subr.mxu0 0.0
        %2321 = vmatpush1.msra.mxu0 %v2277
        %2322 = vmatprep.subr.mxu0 0.0
        %2323 = vmatpush1.msra.mxu0 %v2276
        %2324 = vmatprep.subr.mxu0 0.0
        %2325 = vmatpush2.msra.mxu0 0.0
        %2326 = vmatprep.subr.mxu0 0.0
        %2327 = vmatpush2.msra.mxu0 0.0
        %2328 = vmatprep.subr.mxu0 0.0
        %2329 = vmatpush2.msra.mxu0 0.0
        %2330 = vmatprep.subr.mxu0 0.0
        %2331 = vmatpush2.msra.mxu0 0.0
        %2332 = vmatprep.subr.mxu0 0.0
        %2333 = vmatpush2.msra.mxu0 0.0
        %2334 = vmatprep.subr.mxu0 0.0
        %2335 = vmatpush2.msra.mxu0 0.0
        %2336 = vmatprep.subr.mxu0 0.0
        %2337 = vmatpush2.msra.mxu0 0.0
        %2338 = vmatprep.subr.mxu0 0.0
        %2339 = vmatpush2.msra.mxu0 0.0
        %2340 = vmatprep.subr.mxu0 0.0
        %2341 = vmatpush2.msra.mxu0 0.0
        %2342 = vmatprep.subr.mxu0 0.0
        %2343 = vmatpush2.msra.mxu0 0.0
        %2344 = vmatprep.subr.mxu0 0.0
        %2345 = vmatpush2.msra.mxu0 0.0
        %2346 = vmatprep.subr.mxu0 0.0
        %2347 = vmatpush2.msra.mxu0 0.0
        %2348 = vmatprep.subr.mxu0 0.0
        %2349 = vmatpush2.msra.mxu0 0.0
        %2350 = vmatprep.subr.mxu0 0.0
        %2351 = vmatpush2.msra.mxu0 0.0
        %2352 = vmatprep.subr.mxu0 0.0
        %2353 = vmatpush2.msra.mxu0 0.0
        %2354 = vmatprep.subr.mxu0 0.0
        %2355 = vmatpush2.msra.mxu0 0.0
        %2356 = vmatprep.mubr.f32.mxu0 0.0
        %2357 = vmatmul.mubr.f32.gmra.mxu0 %v2268
        %v2358 = vpop.f32.mrf.mxu0
        %v2359 = vadd.f32 0.0, %v2358
        %v2360 = vpop.f32.mrf.mxu0
        %2361 = vmatprep.mubr.f32.mxu0 0.0
        %2362 = vmatmul.mubr.f32.gmra.mxu0 %v2269
        %v2363 = vpop.f32.mrf.mxu0
        %v2364 = vadd.f32 0.0, %v2363
        %v2365 = vpop.f32.mrf.mxu0
        %2366 = vmatprep.mubr.f32.mxu0 0.0
        %2367 = vmatmul.mubr.f32.gmra.mxu0 %v2270
        %v2368 = vpop.f32.mrf.mxu0
        %v2369 = vadd.f32 0.0, %v2368
        %v2370 = vpop.f32.mrf.mxu0
        %2371 = vmatprep.mubr.f32.mxu0 0.0
        %2372 = vmatmul.mubr.f32.gmra.mxu0 %v2271
        %v2373 = vpop.f32.mrf.mxu0
        %v2374 = vadd.f32 0.0, %v2373
        %v2375 = vpop.f32.mrf.mxu0
        %2376 = vmatprep.mubr.f32.mxu0 0.0
        %2377 = vmatmul.mubr.f32.gmra.mxu0 %v2272
        %v2378 = vpop.f32.mrf.mxu0
        %v2379 = vadd.f32 0.0, %v2378
        %v2380 = vpop.f32.mrf.mxu0
        %2381 = vmatprep.mubr.f32.mxu0 0.0
        %2382 = vmatmul.mubr.f32.gmra.mxu0 %v2273
        %v2383 = vpop.f32.mrf.mxu0
        %v2384 = vadd.f32 0.0, %v2383
        %v2385 = vpop.f32.mrf.mxu0
        %2386 = vmatprep.mubr.f32.mxu0 0.0
        %2387 = vmatmul.mubr.f32.gmra.mxu0 %v2274
        %v2388 = vpop.f32.mrf.mxu0
        %v2389 = vadd.f32 0.0, %v2388
        %v2390 = vpop.f32.mrf.mxu0
        %2391 = vmatprep.mubr.f32.mxu0 0.0
        %2392 = vmatmul.mubr.f32.gmra.mxu0 %v2275
        %v2393 = vpop.f32.mrf.mxu0
        %v2394 = vadd.f32 0.0, %v2393
        %v2395 = vpop.f32.mrf.mxu0
        %2396 = vdwg.mxu0
        %v2397 = vld [vmem:[#allocation5] sm:$0x1]
        %v2399 = vlaneseq
        %v2400 = vshrl.u32 %v2399, 7
        %v2401 = vsub.s32 0, %v2400
        %v2402 = vrot.slane %v2397, %v2401
        %v2404 = vadd.f32 %v2359, %v2402
        %v2405 = vadd.f32 %v2364, %v2402
        %v2406 = vadd.f32 %v2369, %v2402
        %v2407 = vadd.f32 %v2374, %v2402
        %v2408 = vadd.f32 %v2379, %v2402
        %v2409 = vadd.f32 %v2384, %v2402
        %v2410 = vadd.f32 %v2389, %v2402
        %v2411 = vadd.f32 %v2394, %v2402
        %vm2412 = vcmask 7168
        %2413 = vst.msk [vmem:[%s410] sm:$0xff] %vm2412, %v2404
        %2414 = vst.msk [vmem:[%s410 + $0x8] sm:$0xff] %vm2412, %v2405
        %2415 = vst.msk [vmem:[%s410 + $0x10] sm:$0xff] %vm2412, %v2406
        %2416 = vst.msk [vmem:[%s410 + $0x18] sm:$0xff] %vm2412, %v2407
        %2417 = vst.msk [vmem:[%s410 + $0x20] sm:$0xff] %vm2412, %v2408
        %2418 = vst.msk [vmem:[%s410 + $0x28] sm:$0xff] %vm2412, %v2409
        %2419 = vst.msk [vmem:[%s410 + $0x30] sm:$0xff] %vm2412, %v2410
        %2420 = vst.msk [vmem:[%s410 + $0x38] sm:$0xff] %vm2412, %v2411
        %s2421 = sand.u32 %s240, 1
        %s2422 = sand.u32 %s240, 1
        %s2423 = smul.addr %s2422, 64
        %s2424 = scalar_lea.vmem [#allocation7], %s2423
        // Predicated region
        $region99: #{tpu_custom_call.1} parent=89 // pred_check
          %p2425 = pneg %p250
        $region100: #{tpu_custom_call.1} parent=89 // pred_check_branch
          %2427 = sbr.rel (%p2425) target = $region102
        $region101: #{tpu_custom_call.1} parent=89 // pred_region
          %s2428 = smul.u32 8, %s27
          %s2429 = smul.addr %s2428, 3
          %s2430 = sadd.s32 %s26, %s2429
          %s2431 = smul.addr %s2430, 8
          %s2432 = scalar_lea.vmem %s9, %s2431
          // Predicated region
          $region103: #{tpu_custom_call.1} parent=101 // pred_check
            _
          $region104: #{tpu_custom_call.1} parent=101 // pred_check_branch
            %2434 = sbr.rel (0) target = $region106
          $region105: #{tpu_custom_call.1} parent=101 // pred_region
            // Predicated region
            $region107: #{tpu_custom_call.1} parent=105 // pred_check
              _
            $region108: #{tpu_custom_call.1} parent=105 // pred_check_branch
              %2436 = sbr.rel (0) target = $region110
            $region109: #{tpu_custom_call.1} parent=105 // pred_region
              // Predicated region
              $region122: #{tpu_custom_call.1} parent=109 // pred_check
                _
              $region123: #{tpu_custom_call.1} parent=109 // pred_check_branch
                %2466 = sbr.rel (0) target = $region125
              $region124: #{tpu_custom_call.1} parent=109 // pred_region
                loop: start=0, step=1, limit=1
                $region126: #{tpu_custom_call.1} parent=124 // loop_pre_header
                  _
                $region127: #{tpu_custom_call.1} parent=124 // loop_header
                  %s2468 = sphi 0, %s2472
                  %p2469 = scmp.ge.s32.totalorder %s2468, 1
                  %s2473 = sphi %s2424, %s2424
                  %s2474 = sphi %s2432, %s2432
                $region128: #{tpu_custom_call.1} parent=124 // loop_header_branch
                  %2471 = sbr.rel (%p2469) target = $region132
                $region129: #{tpu_custom_call.1} parent=124 // loop_body
                  %v2475 = vld [vmem:[%s2473] sm:$0xff]
                  %2476 = vst [vmem:[%s2474] sm:$0xff] %v2475
                  %v2477 = vld [vmem:[%s2473 + $0x8] sm:$0xff]
                  %2478 = vst [vmem:[%s2474 + $0x18] sm:$0xff] %v2477
                  %v2479 = vld [vmem:[%s2473 + $0x10] sm:$0xff]
                  %2480 = vst [vmem:[%s2474 + $0x30] sm:$0xff] %v2479
                  %v2481 = vld [vmem:[%s2473 + $0x18] sm:$0xff]
                  %2482 = vst [vmem:[%s2474 + $0x48] sm:$0xff] %v2481
                  %v2483 = vld [vmem:[%s2473 + $0x20] sm:$0xff]
                  %2484 = vst [vmem:[%s2474 + $0x60] sm:$0xff] %v2483
                  %v2485 = vld [vmem:[%s2473 + $0x28] sm:$0xff]
                  %2486 = vst [vmem:[%s2474 + $0x78] sm:$0xff] %v2485
                  %v2487 = vld [vmem:[%s2473 + $0x30] sm:$0xff]
                  %2488 = vst [vmem:[%s2474 + $0x90] sm:$0xff] %v2487
                  %v2489 = vld [vmem:[%s2473 + $0x38] sm:$0xff]
                  %2490 = vst [vmem:[%s2474 + $0xa8] sm:$0xff] %v2489
                $region130: #{tpu_custom_call.1} parent=124 // loop_footer
                  %s2472 = sadd.s32 1, %s2468
                $region131: #{tpu_custom_call.1} parent=124 // loop_footer_branch
                  %2467 = sbr.rel target = $region127
                $region132: #{tpu_custom_call.1} parent=124 // loop_exit
                  _
              $region125: #{tpu_custom_call.1} parent=109 // pred_fallthru
                _
              // Predicated region
              $region133: #{tpu_custom_call.1} parent=109 // pred_check
                _
              $region134: #{tpu_custom_call.1} parent=109 // pred_check_branch
                %2492 = sbr.rel target = $region136
              $region135: #{tpu_custom_call.1} parent=109 // pred_region
                _
              $region136: #{tpu_custom_call.1} parent=109 // pred_fallthru
                _
            $region110: #{tpu_custom_call.1} parent=105 // pred_fallthru
              _
            // Predicated region
            $region111: #{tpu_custom_call.1} parent=105 // pred_check
              _
            $region112: #{tpu_custom_call.1} parent=105 // pred_check_branch
              %2438 = sbr.rel target = $region114
            $region113: #{tpu_custom_call.1} parent=105 // pred_region
              %s2440 = ssub.s32 256, 1
              loop: start=0, step=1, limit=1
              $region115: #{tpu_custom_call.1} parent=113 // loop_pre_header
                _
              $region116: #{tpu_custom_call.1} parent=113 // loop_header
                %s2442 = sphi 0, %s2446
                %p2443 = scmp.ge.s32.totalorder %s2442, 1
                %s2447 = sphi %s2424, %s2424
                %s2448 = sphi %s2432, %s2432
              $region117: #{tpu_custom_call.1} parent=113 // loop_header_branch
                %2445 = sbr.rel (%p2443) target = $region121
              $region118: #{tpu_custom_call.1} parent=113 // loop_body
                %v2449 = vld [vmem:[%s2447] sm:%s2440]
                %2450 = vst [vmem:[%s2448] sm:%s2440] %v2449
                %v2451 = vld [vmem:[%s2447 + $0x8] sm:%s2440]
                %2452 = vst [vmem:[%s2448 + $0x18] sm:%s2440] %v2451
                %v2453 = vld [vmem:[%s2447 + $0x10] sm:%s2440]
                %2454 = vst [vmem:[%s2448 + $0x30] sm:%s2440] %v2453
                %v2455 = vld [vmem:[%s2447 + $0x18] sm:%s2440]
                %2456 = vst [vmem:[%s2448 + $0x48] sm:%s2440] %v2455
                %v2457 = vld [vmem:[%s2447 + $0x20] sm:%s2440]
                %2458 = vst [vmem:[%s2448 + $0x60] sm:%s2440] %v2457
                %v2459 = vld [vmem:[%s2447 + $0x28] sm:%s2440]
                %2460 = vst [vmem:[%s2448 + $0x78] sm:%s2440] %v2459
                %v2461 = vld [vmem:[%s2447 + $0x30] sm:%s2440]
                %2462 = vst [vmem:[%s2448 + $0x90] sm:%s2440] %v2461
                %v2463 = vld [vmem:[%s2447 + $0x38] sm:%s2440]
                %2464 = vst [vmem:[%s2448 + $0xa8] sm:%s2440] %v2463
              $region119: #{tpu_custom_call.1} parent=113 // loop_footer
                %s2446 = sadd.s32 1, %s2442
              $region120: #{tpu_custom_call.1} parent=113 // loop_footer_branch
                %2441 = sbr.rel target = $region116
              $region121: #{tpu_custom_call.1} parent=113 // loop_exit
                _
            $region114: #{tpu_custom_call.1} parent=105 // pred_fallthru
              _
          $region106: #{tpu_custom_call.1} parent=101 // pred_fallthru
            _
          %2493 = vnop
        $region102: #{tpu_custom_call.1} parent=89 // pred_fallthru
          _
      $region90: #{tpu_custom_call.1} parent=5 // pred_fallthru
        _
      %p2494 = scmp.le.s32.totalorder 2, %s17
      // Predicated region
      $region137: #{tpu_custom_call.1} parent=5 // pred_check
        %p2495 = pneg %p2494
      $region138: #{tpu_custom_call.1} parent=5 // pred_check_branch
        %2497 = sbr.rel (%p2495) target = $region140
      $region139: #{tpu_custom_call.1} parent=5 // pred_region
        %s2498 = ssub.s32 %s17, 2
        // Predicated region
        $region141: #{tpu_custom_call.1} parent=139 // pred_check
          %p2499 = pneg %p256
        $region142: #{tpu_custom_call.1} parent=139 // pred_check_branch
          %2501 = sbr.rel (%p2499) target = $region144
        $region143: #{tpu_custom_call.1} parent=139 // pred_region
          %s2502 = sand.u32 %s241, 1
          %s2503 = sand.u32 %s241, 1
          %s2504 = smul.addr %s2503, 64
          %s2505 = scalar_lea.vmem [#allocation7], %s2504
        $region144: #{tpu_custom_call.1} parent=139 // pred_fallthru
          _
      $region140: #{tpu_custom_call.1} parent=5 // pred_fallthru
        _
    $region6: #{tpu_custom_call.1} parent=1 // loop_footer
      %s21 = sadd.s32 1, %s17
    $region7: #{tpu_custom_call.1} parent=1 // loop_footer_branch
      %16 = sbr.rel target = $region3
    $region8: #{tpu_custom_call.1} parent=1 // loop_exit
      _

</llo_original>
